<compile_context>
chip_gen: v6e
topology: v6e:2x2x1
jax: 0.10.0
libtpu: 0.0.40
codegen_flags: <defaults>
</compile_context>

<pallas_src>
import jax
import jax.numpy as jnp
from jax import lax
from jax.experimental import pallas as pl
from jax.experimental.pallas import tpu as pltpu


def conv_bn_act(x_nchw, w, gamma, beta, stride, padding, eps=1e-5):
    """Conv2d(bias=False) -> BatchNorm2d (batch stats) -> ReLU, NCHW in/out."""
    N, Cin, H, W = x_nchw.shape
    Cout, _, KH, KW = w.shape
    s = stride
    OH = (H + 2 * padding - KH) // s + 1
    OW = (W + 2 * padding - KW) // s + 1

    K = KH * KW * Cin                      # folded-tap contraction length
    CPAD = pl.cdiv(Cout, 128) * 128        # lane-padded MXU N dim (weight only)
    # TODO(synk): add a Cout tiling grid axis when CPAD > 256 (wide layers).

    # ~256 output positions per grid step (one 256-wide MXU pass on v6e/v7x).
    # TODO(synk): add an OW tiling axis for very wide feature maps (OW > 256).
    TOH = max(1, min(OH, max(1, 256 // OW)))
    n_t = pl.cdiv(OH, TOH)
    OH_pad = n_t * TOH
    M = TOH * OW

    # ---- layout prep (plain JAX, tiny at these sizes) -----------------------
    # NCHW -> NHWC (channels minor) in bf16 for the MXU.
    # TODO(synk): keep NHWC end-to-end if the surrounding network tolerates it;
    # the final NCHW transpose is the one remaining XLA-side round trip.
    x_nhwc = jnp.transpose(x_nchw, (0, 2, 3, 1)).astype(jnp.bfloat16)

    # Pad so every (tap, output-tile) window is in bounds, then split into
    # stride^2 phase planes so all in-kernel window reads are dense pl.ds
    # slices (no strided loads on sublane/lane dims).
    h_tgt = s * (OH_pad + (KH - 1) // s)
    w_tgt = s * (OW + (KW - 1) // s)
    HP = max(H + 2 * padding, h_tgt)
    WP = max(W + 2 * padding, w_tgt)
    HP += (-HP) % s
    WP += (-WP) % s
    xp = jnp.pad(x_nhwc, ((0, 0),
                          (padding, HP - H - padding),
                          (padding, WP - W - padding),
                          (0, 0)))
    HPs, WPs = HP // s, WP // s
    phases = jnp.stack([xp[:, r::s, c::s, :]
                        for r in range(s) for c in range(s)], axis=1)
    # phases: (N, s*s, HPs, WPs, Cin) bf16
    # TODO(synk): on v7x (64 MiB/TC) with large images, replace the resident
    # full-slab BlockSpec below with a manual double-buffered row-band DMA
    # (memory_space=pl.ANY + make_async_copy).

    # Fold OIHW weight -> (KH*KW*Cin, CPAD) bf16, columns zero-padded; resident.
    wf = jnp.transpose(w, (2, 3, 1, 0)).reshape(K, Cout)
    wf = jnp.pad(wf, ((0, 0), (0, CPAD - Cout))).astype(jnp.bfloat16)

    # ---- shared in-kernel conv tile: one (M, K) x (K, CPAD) MXU matmul ------
    def conv_tile(x_ref, w_ref, t):
        taps = []
        for i in range(KH):
            for j in range(KW):
                p = (i % s) * s + (j % s)
                taps.append(x_ref[0, p,
                                  pl.ds(t * TOH + i // s, TOH),
                                  pl.ds(j // s, OW), :])
        # TODO(synk): for tiny Cin, repack so KW*Cin is the minor dim in HBM to
        # make these window reads lane-dense.
        lhs = jnp.concatenate(taps, axis=-1).reshape(M, K)   # (M, KH*KW*Cin)
        return jnp.dot(lhs, w_ref[...], preferred_element_type=jnp.float32)

    x_spec = pl.BlockSpec((1, s * s, HPs, WPs, Cin),
                          lambda n, t: (n, 0, 0, 0, 0))
    w_spec = pl.BlockSpec((K, CPAD), lambda n, t: (0, 0))
    grid = (N, n_t)
    cparams = pltpu.CompilerParams(
        dimension_semantics=("parallel", "arbitrary"),
        vmem_limit_bytes=32 * 1024 * 1024)

    conv_flops = 2 * N * n_t * M * K * CPAD
    in_bytes = N * s * s * HPs * WPs * Cin * 2 + K * CPAD * 2

    # ---- pass 1: per-tile BN partials only (no conv intermediate in HBM) ----
    # Per tile we emit [sum(x), sum((x - tile_mean)^2)] per channel; tiles are
    # combined with Chan's formula in the wrapper (no E[x^2]-mean^2 cancel).
    def stats_kernel(x_ref, w_ref, stats_ref):
        t = pl.program_id(1)
        acc = conv_tile(x_ref, w_ref, t)[:, :Cout]            # (M, Cout) f32

        def partials(count, row_mask):
            a = acc if row_mask is None else acc * row_mask
            ssum = jnp.sum(a, axis=0, keepdims=True)          # (1, Cout)
            d = a - ssum * (1.0 / count)
            if row_mask is not None:
                d = d * row_mask
            m2 = jnp.sum(d * d, axis=0, keepdims=True)
            return jnp.concatenate([ssum, m2], axis=0).reshape(1, 1, 2, Cout)

        if OH_pad == OH:
            stats_ref[...] = partials(float(M), None)
        else:
            last = n_t - 1
            valid = OH - last * TOH                           # python int

            @pl.when(t != last)
            def _():
                stats_ref[...] = partials(float(M), None)

            @pl.when(t == last)
            def _():
                row = lax.broadcasted_iota(jnp.int32, (M, 1), 0) // OW
                mask = (row < valid).astype(jnp.float32)
                stats_ref[...] = partials(float(valid * OW), mask)

    stats = pl.pallas_call(
        stats_kernel,
        grid=grid,
        in_specs=[x_spec, w_spec],
        out_specs=pl.BlockSpec((1, 1, 2, Cout), lambda n, t: (n, t, 0, 0)),
        out_shape=jax.ShapeDtypeStruct((N, n_t, 2, Cout), jnp.float32),
        compiler_params=cparams,
        cost_estimate=pl.CostEstimate(
            flops=conv_flops, transcendentals=0,
            bytes_accessed=in_bytes + N * n_t * 2 * Cout * 4),
    )(phases, wf)

    # ---- combine tile partials -> per-channel scale/shift (tiny, plain JAX) -
    counts = (jnp.minimum(TOH, OH - jnp.arange(n_t) * TOH) * OW
              ).astype(jnp.float32)[None, :, None]            # (1, n_t, 1)
    total = jnp.float32(N * OH * OW)
    tsum, tm2 = stats[:, :, 0, :], stats[:, :, 1, :]          # (N, n_t, Cout)
    mean = jnp.sum(tsum, axis=(0, 1)) / total
    tmean = tsum / counts
    m2 = (jnp.sum(tm2, axis=(0, 1))
          + jnp.sum(counts * (tmean - mean) ** 2, axis=(0, 1)))
    var = m2 / total                                          # biased (train BN)
    inv = lax.rsqrt(var + eps)
    g32 = gamma.astype(jnp.float32)
    scale = (g32 * inv).reshape(1, Cout)
    shift = (beta.astype(jnp.float32) - mean * g32 * inv).reshape(1, Cout)

    # ---- pass 2: recompute conv tile, fuse BN + ReLU, store Cout-wide -------
    def conv_bn_relu_kernel(x_ref, w_ref, scale_ref, shift_ref, o_ref):
        t = pl.program_id(1)
        acc = conv_tile(x_ref, w_ref, t)[:, :Cout]            # (M, Cout) f32
        y = jnp.maximum(acc * scale_ref[...] + shift_ref[...], 0.0)
        o_ref[...] = y.reshape(1, TOH, OW, Cout).astype(o_ref.dtype)

    y = pl.pallas_call(
        conv_bn_relu_kernel,
        grid=grid,
        in_specs=[x_spec, w_spec,
                  pl.BlockSpec((1, Cout), lambda n, t: (0, 0)),
                  pl.BlockSpec((1, Cout), lambda n, t: (0, 0))],
        out_specs=pl.BlockSpec((1, TOH, OW, Cout), lambda n, t: (n, t, 0, 0)),
        out_shape=jax.ShapeDtypeStruct((N, OH_pad, OW, Cout), jnp.float32),
        compiler_params=cparams,
        cost_estimate=pl.CostEstimate(
            flops=conv_flops, transcendentals=0,
            bytes_accessed=in_bytes + N * OH_pad * OW * Cout * 4),
    )(phases, wf, scale, shift)

    if OH_pad != OH:
        y = y[:, :OH]
    return jnp.transpose(y, (0, 3, 1, 2))       # back to PyTorch NCHW


# -----------------------------------------------------------------------------
# Pure-JAX reference (sanity check)
# -----------------------------------------------------------------------------
def conv_bn_act_ref(x, w, gamma, beta, stride, padding, eps=1e-5):
    conv = jax.lax.conv_general_dilated(
        x, w, (stride, stride), [(padding, padding), (padding, padding)],
        dimension_numbers=("NCHW", "OIHW", "NCHW"))
    mean = conv.mean(axis=(0, 2, 3), keepdims=True)
    var = ((conv - mean) ** 2).mean(axis=(0, 2, 3), keepdims=True)
    y = (conv - mean) * jax.lax.rsqrt(var + eps)
    y = y * gamma.reshape(1, -1, 1, 1) + beta.reshape(1, -1, 1, 1)
    return jnp.maximum(y, 0.0)


if __name__ == "__main__":
    # ConvBNAct(in_feat=4, out_feat=8, kernel_size=3, stride=1, padding=1)
    N, Cin, H, W = 2, 4, 16, 16
    Cout, KH, KW = 8, 3, 3
    stride, padding = 1, 1

    key = jax.random.PRNGKey(0)
    kx, kw = jax.random.split(key)
    x = jax.random.normal(kx, (N, Cin, H, W), dtype=jnp.float32)
    w = jax.random.normal(kw, (Cout, Cin, KH, KW), dtype=jnp.float32) * 0.1
    gamma = jnp.ones((Cout,), dtype=jnp.float32)   # BatchNorm2d default init
    beta = jnp.zeros((Cout,), dtype=jnp.float32)

    fwd = jax.jit(conv_bn_act, static_argnums=(4, 5))
    out = jax.block_until_ready(fwd(x, w, gamma, beta, stride, padding))

    ref = conv_bn_act_ref(x, w, gamma, beta, stride, padding)
    assert out.shape == ref.shape
    max_err = float(jnp.max(jnp.abs(out - ref)))
    # bf16 MXU operands -> a few e-3 absolute error after BN normalization.
    assert jnp.allclose(out, ref, rtol=3e-2, atol=3e-2), \
        f"mismatch vs reference (max abs err {max_err:.3e})"

    print("KERNEL_OK")
</pallas_src>

<mosaic_0001>
module attributes {stable_mosaic.version = 11 : i64} {
  func.func @stats_kernel(%arg0: i32, %arg1: i32, %arg2: memref<1x1x18x18x4xbf16, #tpu.memory_space<vmem>>, %arg3: memref<36x128xbf16, #tpu.memory_space<vmem>>, %arg4: memref<1x1x2x8xf32, #tpu.memory_space<vmem>>) attributes {dimension_semantics = [#tpu.dimension_semantics<parallel>, #tpu.dimension_semantics<arbitrary>], iteration_bounds = array<i64: 2, 1>, scalar_prefetch = 0 : i64, scratch_operands = 0 : i64, tpu.core_type = #tpu.core_type<tc>, window_params = [{transform_indices = @transform_0, window_bounds = array<i64: 1, 1, 18, 18, 4>}, {pipeline_mode = #tpu.pipeline_mode<synchronous>, transform_indices = @transform_1, window_bounds = array<i64: 36, 128>}, {transform_indices = @transform_2, window_bounds = array<i64: 1, 1, 2, 8>}]} {
    %c16_i32 = arith.constant 16 : i32
    %0 = arith.muli %arg1, %c16_i32 : i32
    %c0_i32 = arith.constant 0 : i32
    %1 = arith.addi %0, %c0_i32 : i32
    %c0 = arith.constant 0 : index
    %c0_0 = arith.constant 0 : index
    %2 = arith.index_cast %1 : i32 to index
    %c0_1 = arith.constant 0 : index
    %c0_2 = arith.constant 0 : index
    %3 = vector.load %arg2[%c0, %c0_0, %2, %c0_1, %c0_2] : memref<1x1x18x18x4xbf16, #tpu.memory_space<vmem>>, vector<1x1x16x16x4xbf16>
    %4 = vector.shape_cast %3 : vector<1x1x16x16x4xbf16> to vector<16x16x4xbf16>
    %c16_i32_3 = arith.constant 16 : i32
    %5 = arith.muli %arg1, %c16_i32_3 : i32
    %c0_i32_4 = arith.constant 0 : i32
    %6 = arith.addi %5, %c0_i32_4 : i32
    %c0_5 = arith.constant 0 : index
    %c0_6 = arith.constant 0 : index
    %7 = arith.index_cast %6 : i32 to index
    %c1 = arith.constant 1 : index
    %c0_7 = arith.constant 0 : index
    %8 = vector.load %arg2[%c0_5, %c0_6, %7, %c1, %c0_7] : memref<1x1x18x18x4xbf16, #tpu.memory_space<vmem>>, vector<1x1x16x16x4xbf16>
    %9 = vector.shape_cast %8 : vector<1x1x16x16x4xbf16> to vector<16x16x4xbf16>
    %c16_i32_8 = arith.constant 16 : i32
    %10 = arith.muli %arg1, %c16_i32_8 : i32
    %c0_i32_9 = arith.constant 0 : i32
    %11 = arith.addi %10, %c0_i32_9 : i32
    %c0_10 = arith.constant 0 : index
    %c0_11 = arith.constant 0 : index
    %12 = arith.index_cast %11 : i32 to index
    %c2 = arith.constant 2 : index
    %c0_12 = arith.constant 0 : index
    %13 = vector.load %arg2[%c0_10, %c0_11, %12, %c2, %c0_12] : memref<1x1x18x18x4xbf16, #tpu.memory_space<vmem>>, vector<1x1x16x16x4xbf16>
    %14 = vector.shape_cast %13 : vector<1x1x16x16x4xbf16> to vector<16x16x4xbf16>
    %c16_i32_13 = arith.constant 16 : i32
    %15 = arith.muli %arg1, %c16_i32_13 : i32
    %c1_i32 = arith.constant 1 : i32
    %16 = arith.addi %15, %c1_i32 : i32
    %c0_14 = arith.constant 0 : index
    %c0_15 = arith.constant 0 : index
    %17 = arith.index_cast %16 : i32 to index
    %c0_16 = arith.constant 0 : index
    %c0_17 = arith.constant 0 : index
    %18 = vector.load %arg2[%c0_14, %c0_15, %17, %c0_16, %c0_17] : memref<1x1x18x18x4xbf16, #tpu.memory_space<vmem>>, vector<1x1x16x16x4xbf16>
    %19 = vector.shape_cast %18 : vector<1x1x16x16x4xbf16> to vector<16x16x4xbf16>
    %c16_i32_18 = arith.constant 16 : i32
    %20 = arith.muli %arg1, %c16_i32_18 : i32
    %c1_i32_19 = arith.constant 1 : i32
    %21 = arith.addi %20, %c1_i32_19 : i32
    %c0_20 = arith.constant 0 : index
    %c0_21 = arith.constant 0 : index
    %22 = arith.index_cast %21 : i32 to index
    %c1_22 = arith.constant 1 : index
    %c0_23 = arith.constant 0 : index
    %23 = vector.load %arg2[%c0_20, %c0_21, %22, %c1_22, %c0_23] : memref<1x1x18x18x4xbf16, #tpu.memory_space<vmem>>, vector<1x1x16x16x4xbf16>
    %24 = vector.shape_cast %23 : vector<1x1x16x16x4xbf16> to vector<16x16x4xbf16>
    %c16_i32_24 = arith.constant 16 : i32
    %25 = arith.muli %arg1, %c16_i32_24 : i32
    %c1_i32_25 = arith.constant 1 : i32
    %26 = arith.addi %25, %c1_i32_25 : i32
    %c0_26 = arith.constant 0 : index
    %c0_27 = arith.constant 0 : index
    %27 = arith.index_cast %26 : i32 to index
    %c2_28 = arith.constant 2 : index
    %c0_29 = arith.constant 0 : index
    %28 = vector.load %arg2[%c0_26, %c0_27, %27, %c2_28, %c0_29] : memref<1x1x18x18x4xbf16, #tpu.memory_space<vmem>>, vector<1x1x16x16x4xbf16>
    %29 = vector.shape_cast %28 : vector<1x1x16x16x4xbf16> to vector<16x16x4xbf16>
    %c16_i32_30 = arith.constant 16 : i32
    %30 = arith.muli %arg1, %c16_i32_30 : i32
    %c2_i32 = arith.constant 2 : i32
    %31 = arith.addi %30, %c2_i32 : i32
    %c0_31 = arith.constant 0 : index
    %c0_32 = arith.constant 0 : index
    %32 = arith.index_cast %31 : i32 to index
    %c0_33 = arith.constant 0 : index
    %c0_34 = arith.constant 0 : index
    %33 = vector.load %arg2[%c0_31, %c0_32, %32, %c0_33, %c0_34] : memref<1x1x18x18x4xbf16, #tpu.memory_space<vmem>>, vector<1x1x16x16x4xbf16>
    %34 = vector.shape_cast %33 : vector<1x1x16x16x4xbf16> to vector<16x16x4xbf16>
    %c16_i32_35 = arith.constant 16 : i32
    %35 = arith.muli %arg1, %c16_i32_35 : i32
    %c2_i32_36 = arith.constant 2 : i32
    %36 = arith.addi %35, %c2_i32_36 : i32
    %c0_37 = arith.constant 0 : index
    %c0_38 = arith.constant 0 : index
    %37 = arith.index_cast %36 : i32 to index
    %c1_39 = arith.constant 1 : index
    %c0_40 = arith.constant 0 : index
    %38 = vector.load %arg2[%c0_37, %c0_38, %37, %c1_39, %c0_40] : memref<1x1x18x18x4xbf16, #tpu.memory_space<vmem>>, vector<1x1x16x16x4xbf16>
    %39 = vector.shape_cast %38 : vector<1x1x16x16x4xbf16> to vector<16x16x4xbf16>
    %c16_i32_41 = arith.constant 16 : i32
    %40 = arith.muli %arg1, %c16_i32_41 : i32
    %c2_i32_42 = arith.constant 2 : i32
    %41 = arith.addi %40, %c2_i32_42 : i32
    %c0_43 = arith.constant 0 : index
    %c0_44 = arith.constant 0 : index
    %42 = arith.index_cast %41 : i32 to index
    %c2_45 = arith.constant 2 : index
    %c0_46 = arith.constant 0 : index
    %43 = vector.load %arg2[%c0_43, %c0_44, %42, %c2_45, %c0_46] : memref<1x1x18x18x4xbf16, #tpu.memory_space<vmem>>, vector<1x1x16x16x4xbf16>
    %44 = vector.shape_cast %43 : vector<1x1x16x16x4xbf16> to vector<16x16x4xbf16>
    %45 = tpu.concatenate %4, %9, %14, %19, %24, %29, %34, %39, %44 in 2 : vector<16x16x4xbf16>, vector<16x16x4xbf16>, vector<16x16x4xbf16>, vector<16x16x4xbf16>, vector<16x16x4xbf16>, vector<16x16x4xbf16>, vector<16x16x4xbf16>, vector<16x16x4xbf16>, vector<16x16x4xbf16> -> vector<16x16x36xbf16>
    %46 = vector.shape_cast %45 : vector<16x16x36xbf16> to vector<256x36xbf16>
    %c0_47 = arith.constant 0 : index
    %c0_48 = arith.constant 0 : index
    %47 = vector.load %arg3[%c0_47, %c0_48] : memref<36x128xbf16, #tpu.memory_space<vmem>>, vector<36x128xbf16>
    %cst = arith.constant dense<0.000000e+00> : vector<256x128xf32>
    %48 = tpu.matmul %46, %47, %cst {dimension_numbers = #tpu.dot_dimension_numbers<[1], [0], [0], [1], [0, 0, 1, 1], [], []>} : vector<256x36xbf16>, vector<36x128xbf16>, vector<256x128xf32> -> vector<256x128xf32>
    %49 = vector.extract_strided_slice %48 {offsets = [0, 0], sizes = [256, 8], strides = [1, 1]} : vector<256x128xf32> to vector<256x8xf32>
    %cst_49 = arith.constant dense<0.000000e+00> : vector<8xf32>
    %50 = vector.multi_reduction <add>, %49, %cst_49 [0] : vector<256x8xf32> to vector<8xf32>
    %51 = vector.shape_cast %50 : vector<8xf32> to vector<1x8xf32>
    %cst_50 = arith.constant 3.906250e-03 : f32
    %52 = vector.broadcast %cst_50 : f32 to vector<1x8xf32>
    %53 = arith.mulf %51, %52 : vector<1x8xf32>
    %54 = vector.broadcast %53 : vector<1x8xf32> to vector<256x8xf32>
    %55 = arith.subf %49, %54 : vector<256x8xf32>
    %56 = arith.mulf %55, %55 : vector<256x8xf32>
    %cst_51 = arith.constant dense<0.000000e+00> : vector<8xf32>
    %57 = vector.multi_reduction <add>, %56, %cst_51 [0] : vector<256x8xf32> to vector<8xf32>
    %58 = vector.shape_cast %57 : vector<8xf32> to vector<1x8xf32>
    %59 = tpu.concatenate %51, %58 in 0 : vector<1x8xf32>, vector<1x8xf32> -> vector<2x8xf32>
    %60 = vector.shape_cast %59 : vector<2x8xf32> to vector<1x1x2x8xf32>
    %c0_52 = arith.constant 0 : index
    %c0_53 = arith.constant 0 : index
    %c0_54 = arith.constant 0 : index
    %c0_55 = arith.constant 0 : index
    %61 = vector.load %arg4[%c0_52, %c0_53, %c0_54, %c0_55] : memref<1x1x2x8xf32, #tpu.memory_space<vmem>>, vector<1x1x2x8xf32>
    tpu.vector_store %arg4[%c0_52, %c0_53, %c0_54, %c0_55], %60 {strides = array<i32>} : memref<1x1x2x8xf32, #tpu.memory_space<vmem>>, vector<1x1x2x8xf32>,
    return
  }
  func.func @transform_0(%arg0: i32, %arg1: i32) -> (i32, i32, i32, i32, i32) {
    %c0_i32 = arith.constant 0 : i32
    %c0_i32_0 = arith.constant 0 : i32
    %c0_i32_1 = arith.constant 0 : i32
    %c0_i32_2 = arith.constant 0 : i32
    %c0_i32_3 = arith.constant 0 : i32
    return %arg0, %c0_i32, %c0_i32_0, %c0_i32_1, %c0_i32_2 : i32, i32, i32, i32, i32
  }
  func.func @transform_1(%arg0: i32, %arg1: i32) -> (i32, i32) {
    %c0_i32 = arith.constant 0 : i32
    %c0_i32_0 = arith.constant 0 : i32
    %c0_i32_1 = arith.constant 0 : i32
    return %c0_i32, %c0_i32_0 : i32, i32
  }
  func.func @transform_2(%arg0: i32, %arg1: i32) -> (i32, i32, i32, i32) {
    %c0_i32 = arith.constant 0 : i32
    %c0_i32_0 = arith.constant 0 : i32
    %c0_i32_1 = arith.constant 0 : i32
    return %arg0, %arg1, %c0_i32, %c0_i32_0 : i32, i32, i32, i32
  }
}

module attributes {stable_mosaic.version = 11 : i64} {
  func.func @conv_bn_relu_kernel(%arg0: i32, %arg1: i32, %arg2: memref<1x1x18x18x4xbf16, #tpu.memory_space<vmem>>, %arg3: memref<36x128xbf16, #tpu.memory_space<vmem>>, %arg4: memref<1x8xf32, #tpu.memory_space<vmem>>, %arg5: memref<1x8xf32, #tpu.memory_space<vmem>>, %arg6: memref<1x16x16x8xf32, #tpu.memory_space<vmem>>) attributes {dimension_semantics = [#tpu.dimension_semantics<parallel>, #tpu.dimension_semantics<arbitrary>], iteration_bounds = array<i64: 2, 1>, scalar_prefetch = 0 : i64, scratch_operands = 0 : i64, tpu.core_type = #tpu.core_type<tc>, window_params = [{transform_indices = @transform_0, window_bounds = array<i64: 1, 1, 18, 18, 4>}, {pipeline_mode = #tpu.pipeline_mode<synchronous>, transform_indices = @transform_1, window_bounds = array<i64: 36, 128>}, {pipeline_mode = #tpu.pipeline_mode<synchronous>, transform_indices = @transform_2, window_bounds = array<i64: 1, 8>}, {pipeline_mode = #tpu.pipeline_mode<synchronous>, transform_indices = @transform_3, window_bounds = array<i64: 1, 8>}, {transform_indices = @transform_4, window_bounds = array<i64: 1, 16, 16, 8>}]} {
    %c16_i32 = arith.constant 16 : i32
    %0 = arith.muli %arg1, %c16_i32 : i32
    %c0_i32 = arith.constant 0 : i32
    %1 = arith.addi %0, %c0_i32 : i32
    %c0 = arith.constant 0 : index
    %c0_0 = arith.constant 0 : index
    %2 = arith.index_cast %1 : i32 to index
    %c0_1 = arith.constant 0 : index
    %c0_2 = arith.constant 0 : index
    %3 = vector.load %arg2[%c0, %c0_0, %2, %c0_1, %c0_2] : memref<1x1x18x18x4xbf16, #tpu.memory_space<vmem>>, vector<1x1x16x16x4xbf16>
    %4 = vector.shape_cast %3 : vector<1x1x16x16x4xbf16> to vector<16x16x4xbf16>
    %c16_i32_3 = arith.constant 16 : i32
    %5 = arith.muli %arg1, %c16_i32_3 : i32
    %c0_i32_4 = arith.constant 0 : i32
    %6 = arith.addi %5, %c0_i32_4 : i32
    %c0_5 = arith.constant 0 : index
    %c0_6 = arith.constant 0 : index
    %7 = arith.index_cast %6 : i32 to index
    %c1 = arith.constant 1 : index
    %c0_7 = arith.constant 0 : index
    %8 = vector.load %arg2[%c0_5, %c0_6, %7, %c1, %c0_7] : memref<1x1x18x18x4xbf16, #tpu.memory_space<vmem>>, vector<1x1x16x16x4xbf16>
    %9 = vector.shape_cast %8 : vector<1x1x16x16x4xbf16> to vector<16x16x4xbf16>
    %c16_i32_8 = arith.constant 16 : i32
    %10 = arith.muli %arg1, %c16_i32_8 : i32
    %c0_i32_9 = arith.constant 0 : i32
    %11 = arith.addi %10, %c0_i32_9 : i32
    %c0_10 = arith.constant 0 : index
    %c0_11 = arith.constant 0 : index
    %12 = arith.index_cast %11 : i32 to index
    %c2 = arith.constant 2 : index
    %c0_12 = arith.constant 0 : index
    %13 = vector.load %arg2[%c0_10, %c0_11, %12, %c2, %c0_12] : memref<1x1x18x18x4xbf16, #tpu.memory_space<vmem>>, vector<1x1x16x16x4xbf16>
    %14 = vector.shape_cast %13 : vector<1x1x16x16x4xbf16> to vector<16x16x4xbf16>
    %c16_i32_13 = arith.constant 16 : i32
    %15 = arith.muli %arg1, %c16_i32_13 : i32
    %c1_i32 = arith.constant 1 : i32
    %16 = arith.addi %15, %c1_i32 : i32
    %c0_14 = arith.constant 0 : index
    %c0_15 = arith.constant 0 : index
    %17 = arith.index_cast %16 : i32 to index
    %c0_16 = arith.constant 0 : index
    %c0_17 = arith.constant 0 : index
    %18 = vector.load %arg2[%c0_14, %c0_15, %17, %c0_16, %c0_17] : memref<1x1x18x18x4xbf16, #tpu.memory_space<vmem>>, vector<1x1x16x16x4xbf16>
    %19 = vector.shape_cast %18 : vector<1x1x16x16x4xbf16> to vector<16x16x4xbf16>
    %c16_i32_18 = arith.constant 16 : i32
    %20 = arith.muli %arg1, %c16_i32_18 : i32
    %c1_i32_19 = arith.constant 1 : i32
    %21 = arith.addi %20, %c1_i32_19 : i32
    %c0_20 = arith.constant 0 : index
    %c0_21 = arith.constant 0 : index
    %22 = arith.index_cast %21 : i32 to index
    %c1_22 = arith.constant 1 : index
    %c0_23 = arith.constant 0 : index
    %23 = vector.load %arg2[%c0_20, %c0_21, %22, %c1_22, %c0_23] : memref<1x1x18x18x4xbf16, #tpu.memory_space<vmem>>, vector<1x1x16x16x4xbf16>
    %24 = vector.shape_cast %23 : vector<1x1x16x16x4xbf16> to vector<16x16x4xbf16>
    %c16_i32_24 = arith.constant 16 : i32
    %25 = arith.muli %arg1, %c16_i32_24 : i32
    %c1_i32_25 = arith.constant 1 : i32
    %26 = arith.addi %25, %c1_i32_25 : i32
    %c0_26 = arith.constant 0 : index
    %c0_27 = arith.constant 0 : index
    %27 = arith.index_cast %26 : i32 to index
    %c2_28 = arith.constant 2 : index
    %c0_29 = arith.constant 0 : index
    %28 = vector.load %arg2[%c0_26, %c0_27, %27, %c2_28, %c0_29] : memref<1x1x18x18x4xbf16, #tpu.memory_space<vmem>>, vector<1x1x16x16x4xbf16>
    %29 = vector.shape_cast %28 : vector<1x1x16x16x4xbf16> to vector<16x16x4xbf16>
    %c16_i32_30 = arith.constant 16 : i32
    %30 = arith.muli %arg1, %c16_i32_30 : i32
    %c2_i32 = arith.constant 2 : i32
    %31 = arith.addi %30, %c2_i32 : i32
    %c0_31 = arith.constant 0 : index
    %c0_32 = arith.constant 0 : index
    %32 = arith.index_cast %31 : i32 to index
    %c0_33 = arith.constant 0 : index
    %c0_34 = arith.constant 0 : index
    %33 = vector.load %arg2[%c0_31, %c0_32, %32, %c0_33, %c0_34] : memref<1x1x18x18x4xbf16, #tpu.memory_space<vmem>>, vector<1x1x16x16x4xbf16>
    %34 = vector.shape_cast %33 : vector<1x1x16x16x4xbf16> to vector<16x16x4xbf16>
    %c16_i32_35 = arith.constant 16 : i32
    %35 = arith.muli %arg1, %c16_i32_35 : i32
    %c2_i32_36 = arith.constant 2 : i32
    %36 = arith.addi %35, %c2_i32_36 : i32
    %c0_37 = arith.constant 0 : index
    %c0_38 = arith.constant 0 : index
    %37 = arith.index_cast %36 : i32 to index
    %c1_39 = arith.constant 1 : index
    %c0_40 = arith.constant 0 : index
    %38 = vector.load %arg2[%c0_37, %c0_38, %37, %c1_39, %c0_40] : memref<1x1x18x18x4xbf16, #tpu.memory_space<vmem>>, vector<1x1x16x16x4xbf16>
    %39 = vector.shape_cast %38 : vector<1x1x16x16x4xbf16> to vector<16x16x4xbf16>
    %c16_i32_41 = arith.constant 16 : i32
    %40 = arith.muli %arg1, %c16_i32_41 : i32
    %c2_i32_42 = arith.constant 2 : i32
    %41 = arith.addi %40, %c2_i32_42 : i32
    %c0_43 = arith.constant 0 : index
    %c0_44 = arith.constant 0 : index
    %42 = arith.index_cast %41 : i32 to index
    %c2_45 = arith.constant 2 : index
    %c0_46 = arith.constant 0 : index
    %43 = vector.load %arg2[%c0_43, %c0_44, %42, %c2_45, %c0_46] : memref<1x1x18x18x4xbf16, #tpu.memory_space<vmem>>, vector<1x1x16x16x4xbf16>
    %44 = vector.shape_cast %43 : vector<1x1x16x16x4xbf16> to vector<16x16x4xbf16>
    %45 = tpu.concatenate %4, %9, %14, %19, %24, %29, %34, %39, %44 in 2 : vector<16x16x4xbf16>, vector<16x16x4xbf16>, vector<16x16x4xbf16>, vector<16x16x4xbf16>, vector<16x16x4xbf16>, vector<16x16x4xbf16>, vector<16x16x4xbf16>, vector<16x16x4xbf16>, vector<16x16x4xbf16> -> vector<16x16x36xbf16>
    %46 = vector.shape_cast %45 : vector<16x16x36xbf16> to vector<256x36xbf16>
    %c0_47 = arith.constant 0 : index
    %c0_48 = arith.constant 0 : index
    %47 = vector.load %arg3[%c0_47, %c0_48] : memref<36x128xbf16, #tpu.memory_space<vmem>>, vector<36x128xbf16>
    %cst = arith.constant dense<0.000000e+00> : vector<256x128xf32>
    %48 = tpu.matmul %46, %47, %cst {dimension_numbers = #tpu.dot_dimension_numbers<[1], [0], [0], [1], [0, 0, 1, 1], [], []>} : vector<256x36xbf16>, vector<36x128xbf16>, vector<256x128xf32> -> vector<256x128xf32>
    %49 = vector.extract_strided_slice %48 {offsets = [0, 0], sizes = [256, 8], strides = [1, 1]} : vector<256x128xf32> to vector<256x8xf32>
    %c0_49 = arith.constant 0 : index
    %c0_50 = arith.constant 0 : index
    %50 = vector.load %arg4[%c0_49, %c0_50] : memref<1x8xf32, #tpu.memory_space<vmem>>, vector<1x8xf32>
    %51 = vector.broadcast %50 : vector<1x8xf32> to vector<256x8xf32>
    %52 = arith.mulf %49, %51 : vector<256x8xf32>
    %c0_51 = arith.constant 0 : index
    %c0_52 = arith.constant 0 : index
    %53 = vector.load %arg5[%c0_51, %c0_52] : memref<1x8xf32, #tpu.memory_space<vmem>>, vector<1x8xf32>
    %54 = vector.broadcast %53 : vector<1x8xf32> to vector<256x8xf32>
    %55 = arith.addf %52, %54 : vector<256x8xf32>
    %cst_53 = arith.constant 0.000000e+00 : f32
    %56 = vector.broadcast %cst_53 : f32 to vector<256x8xf32>
    %57 = arith.maximumf %55, %56 : vector<256x8xf32>
    %58 = vector.shape_cast %57 : vector<256x8xf32> to vector<1x16x16x8xf32>
    %c0_54 = arith.constant 0 : index
    %c0_55 = arith.constant 0 : index
    %c0_56 = arith.constant 0 : index
    %c0_57 = arith.constant 0 : index
    %59 = vector.load %arg6[%c0_54, %c0_55, %c0_56, %c0_57] : memref<1x16x16x8xf32, #tpu.memory_space<vmem>>, vector<1x16x16x8xf32>
    tpu.vector_store %arg6[%c0_54, %c0_55, %c0_56, %c0_57], %58 {strides = array<i32>} : memref<1x16x16x8xf32, #tpu.memory_space<vmem>>, vector<1x16x16x8xf32>,
    return
  }
  func.func @transform_0(%arg0: i32, %arg1: i32) -> (i32, i32, i32, i32, i32) {
    %c0_i32 = arith.constant 0 : i32
    %c0_i32_0 = arith.constant 0 : i32
    %c0_i32_1 = arith.constant 0 : i32
    %c0_i32_2 = arith.constant 0 : i32
    %c0_i32_3 = arith.constant 0 : i32
    return %arg0, %c0_i32, %c0_i32_0, %c0_i32_1, %c0_i32_2 : i32, i32, i32, i32, i32
  }
  func.func @transform_1(%arg0: i32, %arg1: i32) -> (i32, i32) {
    %c0_i32 = arith.constant 0 : i32
    %c0_i32_0 = arith.constant 0 : i32
    %c0_i32_1 = arith.constant 0 : i32
    return %c0_i32, %c0_i32_0 : i32, i32
  }
  func.func @transform_2(%arg0: i32, %arg1: i32) -> (i32, i32) {
    %c0_i32 = arith.constant 0 : i32
    %c0_i32_0 = arith.constant 0 : i32
    %c0_i32_1 = arith.constant 0 : i32
    return %c0_i32, %c0_i32_0 : i32, i32
  }
  func.func @transform_3(%arg0: i32, %arg1: i32) -> (i32, i32) {
    %c0_i32 = arith.constant 0 : i32
    %c0_i32_0 = arith.constant 0 : i32
    %c0_i32_1 = arith.constant 0 : i32
    return %c0_i32, %c0_i32_0 : i32, i32
  }
  func.func @transform_4(%arg0: i32, %arg1: i32) -> (i32, i32, i32, i32) {
    %c0_i32 = arith.constant 0 : i32
    %c0_i32_0 = arith.constant 0 : i32
    %c0_i32_1 = arith.constant 0 : i32
    return %arg0, %arg1, %c0_i32, %c0_i32_0 : i32, i32, i32, i32
  }
}

</mosaic_0001>

<llo_original>
// kernel: conv_bn_act.2
$region0: #{conv_bn_act.2}
  #allocation0 [shape = 'u32[]', space=smem, size = 0x4, offset = 0x4, fixed_abs, tag = 'smem constant byte address 0x4 - core index']
  #allocation1 [shape = 'u32[144,128]{1,0:T(1,128)}', space=vmem, size = 0x12000, scoped, tag = 'internal scratch']
  %s0 = inlined_call_operand.vmem [shape: bf16[2,1,18,18,4], index: 0, kind: input, shape index: {}]
  %s1 = inlined_call_operand.vmem [shape: bf16[36,128], index: 1, kind: input, shape index: {}]
  %s2 = inlined_call_operand.vmem [shape: f32[2,1,2,8], index: 2, kind: output, shape index: {}]
  %s3 = sld [smem:[#allocation0]]
  $region41: #{conv_bn_act.2} parent=0
    _
  %s5 = ssub.s32 1, %s3
  %s6 = scalar_select 0, %s5, %s3
  loop: start=0, step=1, limit=4
  $region2: #{conv_bn_act.2} parent=0 // loop_pre_header
    _
  $region3: #{conv_bn_act.2} parent=0 // loop_header
    %s8 = sphi 0, %s12
    %p9 = scmp.ge.s32.totalorder %s8, 4
    %s15 = sphi 0, %s27
    %s16 = sphi 0, %s23
    %s17 = sphi 0, %s15
    %s18 = sphi 0, %s16
    %s19 = sphi 0, %s17
    %s20 = sphi 0, %s18
    %s30 = sphi 0, %s32
    %s33 = sphi 0, %s30
    %s34 = sphi 0, %s33
    %s50 = sphi 0, %s34
    %s54 = sphi 0, %s54
    %s56 = sphi 0, %s54
    %s57 = sphi 0, %s56
    %s71 = sphi 0, %s57
    %s79 = sphi 0, %s81
    %s82 = sphi 0, %s79
    %s83 = sphi 0, %s82
    %s99 = sphi 0, %s83
  $region4: #{conv_bn_act.2} parent=0 // loop_header_branch
    %11 = sbr.rel (%p9) target = $region8
  $region5: #{conv_bn_act.2} parent=0 // loop_body
    %s13 = ssub.s32 %s8, 1
    %s14 = ssub.s32 %s8, 2
    %s21 = sadd.s32 1, %s16
    %p22 = scmp.ge.s32.totalorder %s21, 1
    %s23 = scalar_select %p22, 0, %s21
    %s24 = sadd.s32 1, %s15
    %s25 = scalar_select %p22, %s24, %s15
    %p26 = scmp.ge.s32.totalorder %s25, 2
    %s27 = scalar_select %p26, 0, %s25
    %s28 = ssub.s32 %s15, %s27
    %p29 = scmp.eq.s32.totalorder %s28, 0
    %s31 = sadd.s32 %s30, 1
    %s32 = scalar_select %p29, %s30, %s31
    %p35 = pneg %p29
    %p36 = scmp.eq.s32.totalorder %s8, 1
    %p37 = por %p35, %p36
    %p38 = scmp.ne.s32.totalorder %s30, %s33
    %p39 = scmp.eq.s32.totalorder %s8, 0
    %p40 = por %p38, %p39
    %p41 = scmp.ne.s32.totalorder %s30, %s33
    %p42 = scmp.eq.s32.totalorder %s13, 1
    %p43 = por %p41, %p42
    %p44 = scmp.ne.s32.totalorder %s33, %s34
    %p45 = scmp.eq.s32.totalorder %s13, 0
    %p46 = por %p44, %p45
    %p47 = scmp.ne.s32.totalorder %s33, %s34
    %p48 = scmp.eq.s32.totalorder %s14, 1
    %p49 = por %p47, %p48
    %p51 = scmp.ne.s32.totalorder %s34, %s50
    %p52 = scmp.eq.s32.totalorder %s14, 0
    %p53 = por %p51, %p52
    %s55 = sadd.s32 %s54, 1
    %p58 = scmp.eq.s32.totalorder %s8, 1
    %p59 = scmp.ne.s32.totalorder %s54, %s56
    %p60 = scmp.eq.s32.totalorder %s8, 0
    %p61 = por %p59, %p60
    %p62 = scmp.ne.s32.totalorder %s54, %s56
    %p63 = scmp.eq.s32.totalorder %s13, 1
    %p64 = por %p62, %p63
    %p65 = scmp.ne.s32.totalorder %s56, %s57
    %p66 = scmp.eq.s32.totalorder %s13, 0
    %p67 = por %p65, %p66
    %p68 = scmp.ne.s32.totalorder %s56, %s57
    %p69 = scmp.eq.s32.totalorder %s14, 1
    %p70 = por %p68, %p69
    %p72 = scmp.ne.s32.totalorder %s57, %s71
    %p73 = scmp.eq.s32.totalorder %s14, 0
    %p74 = por %p72, %p73
    %s75 = ssub.s32 %s15, %s27
    %s76 = ssub.s32 %s16, %s23
    %s77 = sor.u32 %s75, %s76
    %p78 = scmp.eq.s32.totalorder %s77, 0
    %s80 = sadd.s32 %s79, 1
    %s81 = scalar_select %p78, %s79, %s80
    %p84 = pneg %p78
    %p85 = scmp.eq.s32.totalorder %s8, 1
    %p86 = por %p84, %p85
    %p87 = scmp.ne.s32.totalorder %s79, %s82
    %p88 = scmp.eq.s32.totalorder %s8, 0
    %p89 = por %p87, %p88
    %p90 = scmp.ne.s32.totalorder %s79, %s82
    %p91 = scmp.eq.s32.totalorder %s13, 1
    %p92 = por %p90, %p91
    %p93 = scmp.ne.s32.totalorder %s82, %s83
    %p94 = scmp.eq.s32.totalorder %s13, 0
    %p95 = por %p93, %p94
    %p96 = scmp.ne.s32.totalorder %s82, %s83
    %p97 = scmp.eq.s32.totalorder %s14, 1
    %p98 = por %p96, %p97
    %p100 = scmp.ne.s32.totalorder %s83, %s99
    %p101 = scmp.eq.s32.totalorder %s14, 0
    %p102 = por %p100, %p101
    %p103 = scmp.le.s32.totalorder 1, %s8
    %p104 = scmp.lt.s32.totalorder %s8, 3
    %p105 = pnand %p103, %p104
    %p106 = pneg %p105
    // Predicated region
    $region9: #{conv_bn_act.2} parent=5 // pred_check
      _
    $region10: #{conv_bn_act.2} parent=5 // pred_check_branch
      %108 = sbr.rel (%p105) target = $region12
    $region11: #{conv_bn_act.2} parent=5 // pred_region
      %s109 = ssub.s32 %s8, 1
      // Predicated region
      $region13: #{conv_bn_act.2} parent=11 // pred_check
        %p110 = pneg %p67
      $region14: #{conv_bn_act.2} parent=11 // pred_check_branch
        %112 = sbr.rel (%p110) target = $region16
      $region15: #{conv_bn_act.2} parent=11 // pred_region
        _
      $region16: #{conv_bn_act.2} parent=11 // pred_fallthru
        _
    $region12: #{conv_bn_act.2} parent=5 // pred_fallthru
      _
    %p113 = scmp.lt.s32.totalorder %s8, 2
    // Predicated region
    $region17: #{conv_bn_act.2} parent=5 // pred_check
      %p114 = pneg %p113
    $region18: #{conv_bn_act.2} parent=5 // pred_check_branch
      %116 = sbr.rel (%p114) target = $region20
    $region19: #{conv_bn_act.2} parent=5 // pred_region
      // Predicated region
      $region21: #{conv_bn_act.2} parent=19 // pred_check
        %p117 = pneg %p40
      $region22: #{conv_bn_act.2} parent=19 // pred_check_branch
        %119 = sbr.rel (%p117) target = $region24
      $region23: #{conv_bn_act.2} parent=19 // pred_region
        %p120 = scmp.lt.s32.totalorder %s15, 1
        %s121 = scalar_select %p120, %s15, 1
        %s122 = smul.addr %s121, 54
        %s123 = smul.addr %s122, 4
        %s124 = scalar_lea.vmem %s0, %s123
      $region24: #{conv_bn_act.2} parent=19 // pred_fallthru
        _
    $region20: #{conv_bn_act.2} parent=5 // pred_fallthru
      _
    %p125 = scmp.le.s32.totalorder 1, %s8
    %p126 = scmp.lt.s32.totalorder %s8, 3
    %p127 = pnand %p125, %p126
    %p128 = pneg %p127
    // Predicated region
    $region25: #{conv_bn_act.2} parent=5 // pred_check
      _
    $region26: #{conv_bn_act.2} parent=5 // pred_check_branch
      %130 = sbr.rel (%p127) target = $region28
    $region27: #{conv_bn_act.2} parent=5 // pred_region
      %s131 = ssub.s32 %s8, 1
      %p132 = scmp.lt.s32.totalorder %s17, 1
      %s133 = scalar_select %p132, %s17, 1
      %s134 = smul.addr %s133, 54
      %s135 = smul.addr %s134, 4
      %s136 = scalar_lea.vmem %s0, %s135
      %p137 = pneg %p46
      %p138 = pneg %p43
      %p139 = pneg %p67
      %p140 = pneg %p64
      %p141 = pneg %p95
      %p142 = pneg %p92
      %p143 = scmp.lt.s32.totalorder %s17, 1
      %s144 = scalar_select %p143, %s17, 1
      %p145 = scmp.lt.s32.totalorder %s18, 0
      %s146 = scalar_select %p145, %s18, 0
      %s147 = sadd.s32 %s146, %s144
      %s148 = smul.addr %s147, 2
      %s149 = scalar_lea.vmem %s2, %s148
      %p150 = scmp.lt.s32.totalorder %s17, 1
      %s151 = scalar_select %p150, %s17, 1
      %s152 = smul.addr %s151, 54
      %s153 = smul.addr %s152, 4
      %s154 = scalar_lea.vmem %s0, %s153
      %p155 = scmp.lt.s32.totalorder %s17, 1
      %s156 = scalar_select %p155, %s17, 1
      %p157 = scmp.lt.s32.totalorder %s18, 0
      %s158 = scalar_select %p157, %s18, 0
      %s159 = sadd.s32 %s158, %s156
      %s160 = smul.addr %s159, 2
      %s161 = scalar_lea.vmem %s2, %s160
      %s163 = smul.u32 %s18, 16
      %s164 = smul.u32 %s163, 3
      %s165 = smul.addr %s164, 4
      %s166 = scalar_lea.vmem %s154, %s165
      %v167 = vld [vmem:[%s166] sm:$0xf]
      %v168 = vld [vmem:[%s166 + $0x4] sm:$0xf]
      %v169 = vld [vmem:[%s166 + $0xc] sm:$0xf]
      %v170 = vld [vmem:[%s166 + $0x10] sm:$0xf]
      %v171 = vld [vmem:[%s166 + $0x18] sm:$0xf]
      %v172 = vld [vmem:[%s166 + $0x1c] sm:$0xf]
      %v173 = vld [vmem:[%s166 + $0x24] sm:$0xf]
      %v174 = vld [vmem:[%s166 + $0x28] sm:$0xf]
      %v175 = vld [vmem:[%s166 + $0x30] sm:$0xf]
      %v176 = vld [vmem:[%s166 + $0x34] sm:$0xf]
      %v177 = vld [vmem:[%s166 + $0x3c] sm:$0xf]
      %v178 = vld [vmem:[%s166 + $0x40] sm:$0xf]
      %v179 = vld [vmem:[%s166 + $0x48] sm:$0xf]
      %v180 = vld [vmem:[%s166 + $0x4c] sm:$0xf]
      %v181 = vld [vmem:[%s166 + $0x54] sm:$0xf]
      %v182 = vld [vmem:[%s166 + $0x58] sm:$0xf]
      %v183 = vld [vmem:[%s166 + $0x60] sm:$0xf]
      %v184 = vld [vmem:[%s166 + $0x64] sm:$0xf]
      %v185 = vld [vmem:[%s166 + $0x6c] sm:$0xf]
      %v186 = vld [vmem:[%s166 + $0x70] sm:$0xf]
      %v187 = vld [vmem:[%s166 + $0x78] sm:$0xf]
      %v188 = vld [vmem:[%s166 + $0x7c] sm:$0xf]
      %v189 = vld [vmem:[%s166 + $0x84] sm:$0xf]
      %v190 = vld [vmem:[%s166 + $0x88] sm:$0xf]
      %v191 = vld [vmem:[%s166 + $0x90] sm:$0xf]
      %v192 = vld [vmem:[%s166 + $0x94] sm:$0xf]
      %v193 = vld [vmem:[%s166 + $0x9c] sm:$0xf]
      %v194 = vld [vmem:[%s166 + $0xa0] sm:$0xf]
      %v195 = vld [vmem:[%s166 + $0xa8] sm:$0xf]
      %v196 = vld [vmem:[%s166 + $0xac] sm:$0xf]
      %v197 = vld [vmem:[%s166 + $0xb4] sm:$0xf]
      %v198 = vld [vmem:[%s166 + $0xb8] sm:$0xf]
      %v199 = vld [vmem:[%s166 + $0x8] sm:$0x1]
      %v200 = vld [vmem:[%s166 + $0x14] sm:$0x1]
      %v201 = vld [vmem:[%s166 + $0x20] sm:$0x1]
      %v202 = vld [vmem:[%s166 + $0x2c] sm:$0x1]
      %v203 = vld [vmem:[%s166 + $0x38] sm:$0x1]
      %v204 = vld [vmem:[%s166 + $0x44] sm:$0x1]
      %v205 = vld [vmem:[%s166 + $0x50] sm:$0x1]
      %v206 = vld [vmem:[%s166 + $0x5c] sm:$0x1]
      %v207 = vld [vmem:[%s166 + $0x68] sm:$0x1]
      %v208 = vld [vmem:[%s166 + $0x74] sm:$0x1]
      %v209 = vld [vmem:[%s166 + $0x80] sm:$0x1]
      %v210 = vld [vmem:[%s166 + $0x8c] sm:$0x1]
      %v211 = vld [vmem:[%s166 + $0x98] sm:$0x1]
      %v212 = vld [vmem:[%s166 + $0xa4] sm:$0x1]
      %v213 = vld [vmem:[%s166 + $0xb0] sm:$0x1]
      %v214 = vld [vmem:[%s166 + $0xbc] sm:$0x1]
      %v215 = vld [vmem:[%s166] sm:$0xe]
      %v216 = vld [vmem:[%s166 + $0xc] sm:$0xe]
      %v217 = vld [vmem:[%s166 + $0x18] sm:$0xe]
      %v218 = vld [vmem:[%s166 + $0x24] sm:$0xe]
      %v219 = vld [vmem:[%s166 + $0x30] sm:$0xe]
      %v220 = vld [vmem:[%s166 + $0x3c] sm:$0xe]
      %v221 = vld [vmem:[%s166 + $0x48] sm:$0xe]
      %v222 = vld [vmem:[%s166 + $0x54] sm:$0xe]
      %v223 = vld [vmem:[%s166 + $0x60] sm:$0xe]
      %v224 = vld [vmem:[%s166 + $0x6c] sm:$0xe]
      %v225 = vld [vmem:[%s166 + $0x78] sm:$0xe]
      %v226 = vld [vmem:[%s166 + $0x84] sm:$0xe]
      %v227 = vld [vmem:[%s166 + $0x90] sm:$0xe]
      %v228 = vld [vmem:[%s166 + $0x9c] sm:$0xe]
      %v229 = vld [vmem:[%s166 + $0xa8] sm:$0xe]
      %v230 = vld [vmem:[%s166 + $0xb4] sm:$0xe]
      %s231 = sadd.s32 %s163, 1
      %s232 = smul.u32 %s231, 3
      %s233 = smul.addr %s232, 4
      %s234 = scalar_lea.vmem %s154, %s233
      %v235 = vld [vmem:[%s234] sm:$0xf]
      %v236 = vld [vmem:[%s234 + $0x4] sm:$0xf]
      %v237 = vld [vmem:[%s234 + $0xc] sm:$0xf]
      %v238 = vld [vmem:[%s234 + $0x10] sm:$0xf]
      %v239 = vld [vmem:[%s234 + $0x18] sm:$0xf]
      %v240 = vld [vmem:[%s234 + $0x1c] sm:$0xf]
      %v241 = vld [vmem:[%s234 + $0x24] sm:$0xf]
      %v242 = vld [vmem:[%s234 + $0x28] sm:$0xf]
      %v243 = vld [vmem:[%s234 + $0x30] sm:$0xf]
      %v244 = vld [vmem:[%s234 + $0x34] sm:$0xf]
      %v245 = vld [vmem:[%s234 + $0x3c] sm:$0xf]
      %v246 = vld [vmem:[%s234 + $0x40] sm:$0xf]
      %v247 = vld [vmem:[%s234 + $0x48] sm:$0xf]
      %v248 = vld [vmem:[%s234 + $0x4c] sm:$0xf]
      %v249 = vld [vmem:[%s234 + $0x54] sm:$0xf]
      %v250 = vld [vmem:[%s234 + $0x58] sm:$0xf]
      %v251 = vld [vmem:[%s234 + $0x60] sm:$0xf]
      %v252 = vld [vmem:[%s234 + $0x64] sm:$0xf]
      %v253 = vld [vmem:[%s234 + $0x6c] sm:$0xf]
      %v254 = vld [vmem:[%s234 + $0x70] sm:$0xf]
      %v255 = vld [vmem:[%s234 + $0x78] sm:$0xf]
      %v256 = vld [vmem:[%s234 + $0x7c] sm:$0xf]
      %v257 = vld [vmem:[%s234 + $0x84] sm:$0xf]
      %v258 = vld [vmem:[%s234 + $0x88] sm:$0xf]
      %v259 = vld [vmem:[%s234 + $0x90] sm:$0xf]
      %v260 = vld [vmem:[%s234 + $0x94] sm:$0xf]
      %v261 = vld [vmem:[%s234 + $0x9c] sm:$0xf]
      %v262 = vld [vmem:[%s234 + $0xa0] sm:$0xf]
      %v263 = vld [vmem:[%s234 + $0xa8] sm:$0xf]
      %v264 = vld [vmem:[%s234 + $0xac] sm:$0xf]
      %v265 = vld [vmem:[%s234 + $0xb4] sm:$0xf]
      %v266 = vld [vmem:[%s234 + $0xb8] sm:$0xf]
      %v267 = vld [vmem:[%s234 + $0x8] sm:$0x1]
      %v268 = vld [vmem:[%s234 + $0x14] sm:$0x1]
      %v269 = vld [vmem:[%s234 + $0x20] sm:$0x1]
      %v270 = vld [vmem:[%s234 + $0x2c] sm:$0x1]
      %v271 = vld [vmem:[%s234 + $0x38] sm:$0x1]
      %v272 = vld [vmem:[%s234 + $0x44] sm:$0x1]
      %v273 = vld [vmem:[%s234 + $0x50] sm:$0x1]
      %v274 = vld [vmem:[%s234 + $0x5c] sm:$0x1]
      %v275 = vld [vmem:[%s234 + $0x68] sm:$0x1]
      %v276 = vld [vmem:[%s234 + $0x74] sm:$0x1]
      %v277 = vld [vmem:[%s234 + $0x80] sm:$0x1]
      %v278 = vld [vmem:[%s234 + $0x8c] sm:$0x1]
      %v279 = vld [vmem:[%s234 + $0x98] sm:$0x1]
      %v280 = vld [vmem:[%s234 + $0xa4] sm:$0x1]
      %v281 = vld [vmem:[%s234 + $0xb0] sm:$0x1]
      %v282 = vld [vmem:[%s234 + $0xbc] sm:$0x1]
      %v283 = vld [vmem:[%s234] sm:$0xe]
      %v284 = vld [vmem:[%s234 + $0xc] sm:$0xe]
      %v285 = vld [vmem:[%s234 + $0x18] sm:$0xe]
      %v286 = vld [vmem:[%s234 + $0x24] sm:$0xe]
      %v287 = vld [vmem:[%s234 + $0x30] sm:$0xe]
      %v288 = vld [vmem:[%s234 + $0x3c] sm:$0xe]
      %v289 = vld [vmem:[%s234 + $0x48] sm:$0xe]
      %v290 = vld [vmem:[%s234 + $0x54] sm:$0xe]
      %v291 = vld [vmem:[%s234 + $0x60] sm:$0xe]
      %v292 = vld [vmem:[%s234 + $0x6c] sm:$0xe]
      %v293 = vld [vmem:[%s234 + $0x78] sm:$0xe]
      %v294 = vld [vmem:[%s234 + $0x84] sm:$0xe]
      %v295 = vld [vmem:[%s234 + $0x90] sm:$0xe]
      %v296 = vld [vmem:[%s234 + $0x9c] sm:$0xe]
      %v297 = vld [vmem:[%s234 + $0xa8] sm:$0xe]
      %v298 = vld [vmem:[%s234 + $0xb4] sm:$0xe]
      %s299 = sadd.s32 %s163, 2
      %s300 = smul.u32 %s299, 3
      %s301 = smul.addr %s300, 4
      %s302 = scalar_lea.vmem %s154, %s301
      %v303 = vld [vmem:[%s302] sm:$0xf]
      %v304 = vld [vmem:[%s302 + $0x4] sm:$0xf]
      %v305 = vld [vmem:[%s302 + $0xc] sm:$0xf]
      %v306 = vld [vmem:[%s302 + $0x10] sm:$0xf]
      %v307 = vld [vmem:[%s302 + $0x18] sm:$0xf]
      %v308 = vld [vmem:[%s302 + $0x1c] sm:$0xf]
      %v309 = vld [vmem:[%s302 + $0x24] sm:$0xf]
      %v310 = vld [vmem:[%s302 + $0x28] sm:$0xf]
      %v311 = vld [vmem:[%s302 + $0x30] sm:$0xf]
      %v312 = vld [vmem:[%s302 + $0x34] sm:$0xf]
      %v313 = vld [vmem:[%s302 + $0x3c] sm:$0xf]
      %v314 = vld [vmem:[%s302 + $0x40] sm:$0xf]
      %v315 = vld [vmem:[%s302 + $0x48] sm:$0xf]
      %v316 = vld [vmem:[%s302 + $0x4c] sm:$0xf]
      %v317 = vld [vmem:[%s302 + $0x54] sm:$0xf]
      %v318 = vld [vmem:[%s302 + $0x58] sm:$0xf]
      %v319 = vld [vmem:[%s302 + $0x60] sm:$0xf]
      %v320 = vld [vmem:[%s302 + $0x64] sm:$0xf]
      %v321 = vld [vmem:[%s302 + $0x6c] sm:$0xf]
      %v322 = vld [vmem:[%s302 + $0x70] sm:$0xf]
      %v323 = vld [vmem:[%s302 + $0x78] sm:$0xf]
      %v324 = vld [vmem:[%s302 + $0x7c] sm:$0xf]
      %v325 = vld [vmem:[%s302 + $0x84] sm:$0xf]
      %v326 = vld [vmem:[%s302 + $0x88] sm:$0xf]
      %v327 = vld [vmem:[%s302 + $0x90] sm:$0xf]
      %v328 = vld [vmem:[%s302 + $0x94] sm:$0xf]
      %v329 = vld [vmem:[%s302 + $0x9c] sm:$0xf]
      %v330 = vld [vmem:[%s302 + $0xa0] sm:$0xf]
      %v331 = vld [vmem:[%s302 + $0xa8] sm:$0xf]
      %v332 = vld [vmem:[%s302 + $0xac] sm:$0xf]
      %v333 = vld [vmem:[%s302 + $0xb4] sm:$0xf]
      %v334 = vld [vmem:[%s302 + $0xb8] sm:$0xf]
      %v335 = vld [vmem:[%s302 + $0x8] sm:$0x1]
      %v336 = vld [vmem:[%s302 + $0x14] sm:$0x1]
      %v337 = vld [vmem:[%s302 + $0x20] sm:$0x1]
      %v338 = vld [vmem:[%s302 + $0x2c] sm:$0x1]
      %v339 = vld [vmem:[%s302 + $0x38] sm:$0x1]
      %v340 = vld [vmem:[%s302 + $0x44] sm:$0x1]
      %v341 = vld [vmem:[%s302 + $0x50] sm:$0x1]
      %v342 = vld [vmem:[%s302 + $0x5c] sm:$0x1]
      %v343 = vld [vmem:[%s302 + $0x68] sm:$0x1]
      %v344 = vld [vmem:[%s302 + $0x74] sm:$0x1]
      %v345 = vld [vmem:[%s302 + $0x80] sm:$0x1]
      %v346 = vld [vmem:[%s302 + $0x8c] sm:$0x1]
      %v347 = vld [vmem:[%s302 + $0x98] sm:$0x1]
      %v348 = vld [vmem:[%s302 + $0xa4] sm:$0x1]
      %v349 = vld [vmem:[%s302 + $0xb0] sm:$0x1]
      %v350 = vld [vmem:[%s302 + $0xbc] sm:$0x1]
      %v351 = vld [vmem:[%s302] sm:$0xe]
      %v352 = vld [vmem:[%s302 + $0xc] sm:$0xe]
      %v353 = vld [vmem:[%s302 + $0x18] sm:$0xe]
      %v354 = vld [vmem:[%s302 + $0x24] sm:$0xe]
      %v355 = vld [vmem:[%s302 + $0x30] sm:$0xe]
      %v356 = vld [vmem:[%s302 + $0x3c] sm:$0xe]
      %v357 = vld [vmem:[%s302 + $0x48] sm:$0xe]
      %v358 = vld [vmem:[%s302 + $0x54] sm:$0xe]
      %v359 = vld [vmem:[%s302 + $0x60] sm:$0xe]
      %v360 = vld [vmem:[%s302 + $0x6c] sm:$0xe]
      %v361 = vld [vmem:[%s302 + $0x78] sm:$0xe]
      %v362 = vld [vmem:[%s302 + $0x84] sm:$0xe]
      %v363 = vld [vmem:[%s302 + $0x90] sm:$0xe]
      %v364 = vld [vmem:[%s302 + $0x9c] sm:$0xe]
      %v365 = vld [vmem:[%s302 + $0xa8] sm:$0xe]
      %v366 = vld [vmem:[%s302 + $0xb4] sm:$0xe]
      %v399 = vunpack.c.l.b16 %v167
      %v400 = vunpack.c.l.b16 %v168
      %v401 = vunpack.c.l.b16 %v169
      %v402 = vunpack.c.l.b16 %v170
      %v403 = vunpack.c.l.b16 %v171
      %v404 = vunpack.c.l.b16 %v172
      %v405 = vunpack.c.l.b16 %v173
      %v406 = vunpack.c.l.b16 %v174
      %v407 = vunpack.c.l.b16 %v175
      %v408 = vunpack.c.l.b16 %v176
      %v409 = vunpack.c.l.b16 %v177
      %v410 = vunpack.c.l.b16 %v178
      %v411 = vunpack.c.l.b16 %v179
      %v412 = vunpack.c.l.b16 %v180
      %v413 = vunpack.c.l.b16 %v181
      %v414 = vunpack.c.l.b16 %v182
      %v415 = vunpack.c.l.b16 %v183
      %v416 = vunpack.c.l.b16 %v184
      %v417 = vunpack.c.l.b16 %v185
      %v418 = vunpack.c.l.b16 %v186
      %v419 = vunpack.c.l.b16 %v187
      %v420 = vunpack.c.l.b16 %v188
      %v421 = vunpack.c.l.b16 %v189
      %v422 = vunpack.c.l.b16 %v190
      %v423 = vunpack.c.l.b16 %v191
      %v424 = vunpack.c.l.b16 %v192
      %v425 = vunpack.c.l.b16 %v193
      %v426 = vunpack.c.l.b16 %v194
      %v427 = vunpack.c.l.b16 %v195
      %v428 = vunpack.c.l.b16 %v196
      %v429 = vunpack.c.l.b16 %v197
      %v430 = vunpack.c.l.b16 %v198
      %v431 = vpack.c.b16 %v400, %v399
      %v432 = vpack.c.b16 %v402, %v401
      %v433 = vpack.c.b16 %v404, %v403
      %v434 = vpack.c.b16 %v406, %v405
      %v435 = vpack.c.b16 %v408, %v407
      %v436 = vpack.c.b16 %v410, %v409
      %v437 = vpack.c.b16 %v412, %v411
      %v438 = vpack.c.b16 %v414, %v413
      %v439 = vpack.c.b16 %v416, %v415
      %v440 = vpack.c.b16 %v418, %v417
      %v441 = vpack.c.b16 %v420, %v419
      %v442 = vpack.c.b16 %v422, %v421
      %v443 = vpack.c.b16 %v424, %v423
      %v444 = vpack.c.b16 %v426, %v425
      %v445 = vpack.c.b16 %v428, %v427
      %v446 = vpack.c.b16 %v430, %v429
      %v463 = vunpack.c.l.b16 %v199
      %v464 = vunpack.c.l.b16 %v200
      %v465 = vunpack.c.l.b16 %v201
      %v466 = vunpack.c.l.b16 %v202
      %v467 = vunpack.c.l.b16 %v203
      %v468 = vunpack.c.l.b16 %v204
      %v469 = vunpack.c.l.b16 %v205
      %v470 = vunpack.c.l.b16 %v206
      %v471 = vunpack.c.l.b16 %v207
      %v472 = vunpack.c.l.b16 %v208
      %v473 = vunpack.c.l.b16 %v209
      %v474 = vunpack.c.l.b16 %v210
      %v475 = vunpack.c.l.b16 %v211
      %v476 = vunpack.c.l.b16 %v212
      %v477 = vunpack.c.l.b16 %v213
      %v478 = vunpack.c.l.b16 %v214
      %v479 = vpack.c.b16 %v463, %v463
      %v480 = vpack.c.b16 %v464, %v464
      %v481 = vpack.c.b16 %v465, %v465
      %v482 = vpack.c.b16 %v466, %v466
      %v483 = vpack.c.b16 %v467, %v467
      %v484 = vpack.c.b16 %v468, %v468
      %v485 = vpack.c.b16 %v469, %v469
      %v486 = vpack.c.b16 %v470, %v470
      %v487 = vpack.c.b16 %v471, %v471
      %v488 = vpack.c.b16 %v472, %v472
      %v489 = vpack.c.b16 %v473, %v473
      %v490 = vpack.c.b16 %v474, %v474
      %v491 = vpack.c.b16 %v475, %v475
      %v492 = vpack.c.b16 %v476, %v476
      %v493 = vpack.c.b16 %v477, %v477
      %v494 = vpack.c.b16 %v478, %v478
      %vm495 = vsmask.f32 7424
      %v497 = vshrl.u32 %v431, 16
      %v499 = vshll.u32 %v431, 16
      %v501 = vrot.slane %v499, 1
      %v502 = vor.u32 %v497, %v501
      %v504 = vshll.u32 %v479, 16
      %v506 = vrot.slane %v504, 1
      %v507 = vsel %vm495, %v502, %v506
      %v509 = vshrl.u32 %v432, 16
      %v511 = vshll.u32 %v432, 16
      %v513 = vrot.slane %v511, 1
      %v514 = vor.u32 %v509, %v513
      %v516 = vshll.u32 %v480, 16
      %v518 = vrot.slane %v516, 1
      %v519 = vsel %vm495, %v514, %v518
      %v521 = vshrl.u32 %v433, 16
      %v523 = vshll.u32 %v433, 16
      %v525 = vrot.slane %v523, 1
      %v526 = vor.u32 %v521, %v525
      %v528 = vshll.u32 %v481, 16
      %v530 = vrot.slane %v528, 1
      %v531 = vsel %vm495, %v526, %v530
      %v533 = vshrl.u32 %v434, 16
      %v535 = vshll.u32 %v434, 16
      %v537 = vrot.slane %v535, 1
      %v538 = vor.u32 %v533, %v537
      %v540 = vshll.u32 %v482, 16
      %v542 = vrot.slane %v540, 1
      %v543 = vsel %vm495, %v538, %v542
      %v545 = vshrl.u32 %v435, 16
      %v547 = vshll.u32 %v435, 16
      %v549 = vrot.slane %v547, 1
      %v550 = vor.u32 %v545, %v549
      %v552 = vshll.u32 %v483, 16
      %v554 = vrot.slane %v552, 1
      %v555 = vsel %vm495, %v550, %v554
      %v557 = vshrl.u32 %v436, 16
      %v559 = vshll.u32 %v436, 16
      %v561 = vrot.slane %v559, 1
      %v562 = vor.u32 %v557, %v561
      %v564 = vshll.u32 %v484, 16
      %v566 = vrot.slane %v564, 1
      %v567 = vsel %vm495, %v562, %v566
      %v569 = vshrl.u32 %v437, 16
      %v571 = vshll.u32 %v437, 16
      %v573 = vrot.slane %v571, 1
      %v574 = vor.u32 %v569, %v573
      %v576 = vshll.u32 %v485, 16
      %v578 = vrot.slane %v576, 1
      %v579 = vsel %vm495, %v574, %v578
      %v581 = vshrl.u32 %v438, 16
      %v583 = vshll.u32 %v438, 16
      %v585 = vrot.slane %v583, 1
      %v586 = vor.u32 %v581, %v585
      %v588 = vshll.u32 %v486, 16
      %v590 = vrot.slane %v588, 1
      %v591 = vsel %vm495, %v586, %v590
      %v593 = vshrl.u32 %v439, 16
      %v595 = vshll.u32 %v439, 16
      %v597 = vrot.slane %v595, 1
      %v598 = vor.u32 %v593, %v597
      %v600 = vshll.u32 %v487, 16
      %v602 = vrot.slane %v600, 1
      %v603 = vsel %vm495, %v598, %v602
      %v605 = vshrl.u32 %v440, 16
      %v607 = vshll.u32 %v440, 16
      %v609 = vrot.slane %v607, 1
      %v610 = vor.u32 %v605, %v609
      %v612 = vshll.u32 %v488, 16
      %v614 = vrot.slane %v612, 1
      %v615 = vsel %vm495, %v610, %v614
      %v617 = vshrl.u32 %v441, 16
      %v619 = vshll.u32 %v441, 16
      %v621 = vrot.slane %v619, 1
      %v622 = vor.u32 %v617, %v621
      %v624 = vshll.u32 %v489, 16
      %v626 = vrot.slane %v624, 1
      %v627 = vsel %vm495, %v622, %v626
      %v629 = vshrl.u32 %v442, 16
      %v631 = vshll.u32 %v442, 16
      %v633 = vrot.slane %v631, 1
      %v634 = vor.u32 %v629, %v633
      %v636 = vshll.u32 %v490, 16
      %v638 = vrot.slane %v636, 1
      %v639 = vsel %vm495, %v634, %v638
      %v641 = vshrl.u32 %v443, 16
      %v643 = vshll.u32 %v443, 16
      %v645 = vrot.slane %v643, 1
      %v646 = vor.u32 %v641, %v645
      %v648 = vshll.u32 %v491, 16
      %v650 = vrot.slane %v648, 1
      %v651 = vsel %vm495, %v646, %v650
      %v653 = vshrl.u32 %v444, 16
      %v655 = vshll.u32 %v444, 16
      %v657 = vrot.slane %v655, 1
      %v658 = vor.u32 %v653, %v657
      %v660 = vshll.u32 %v492, 16
      %v662 = vrot.slane %v660, 1
      %v663 = vsel %vm495, %v658, %v662
      %v665 = vshrl.u32 %v445, 16
      %v667 = vshll.u32 %v445, 16
      %v669 = vrot.slane %v667, 1
      %v670 = vor.u32 %v665, %v669
      %v672 = vshll.u32 %v493, 16
      %v674 = vrot.slane %v672, 1
      %v675 = vsel %vm495, %v670, %v674
      %v677 = vshrl.u32 %v446, 16
      %v679 = vshll.u32 %v446, 16
      %v681 = vrot.slane %v679, 1
      %v682 = vor.u32 %v677, %v681
      %v684 = vshll.u32 %v494, 16
      %v686 = vrot.slane %v684, 1
      %v687 = vsel %vm495, %v682, %v686
      %688 = vrot.lane.b32.xlu0 %v507, 4
      %v689 = vpop.permute.xlu0 %688
      %690 = vrot.lane.b32.xlu0 %v519, 4
      %v691 = vpop.permute.xlu0 %690
      %692 = vrot.lane.b32.xlu0 %v531, 4
      %v693 = vpop.permute.xlu0 %692
      %694 = vrot.lane.b32.xlu0 %v543, 4
      %v695 = vpop.permute.xlu0 %694
      %696 = vrot.lane.b32.xlu0 %v555, 4
      %v697 = vpop.permute.xlu0 %696
      %698 = vrot.lane.b32.xlu0 %v567, 4
      %v699 = vpop.permute.xlu0 %698
      %700 = vrot.lane.b32.xlu0 %v579, 4
      %v701 = vpop.permute.xlu0 %700
      %702 = vrot.lane.b32.xlu0 %v591, 4
      %v703 = vpop.permute.xlu0 %702
      %704 = vrot.lane.b32.xlu0 %v603, 4
      %v705 = vpop.permute.xlu0 %704
      %706 = vrot.lane.b32.xlu0 %v615, 4
      %v707 = vpop.permute.xlu0 %706
      %708 = vrot.lane.b32.xlu0 %v627, 4
      %v709 = vpop.permute.xlu0 %708
      %710 = vrot.lane.b32.xlu0 %v639, 4
      %v711 = vpop.permute.xlu0 %710
      %712 = vrot.lane.b32.xlu0 %v651, 4
      %v713 = vpop.permute.xlu0 %712
      %714 = vrot.lane.b32.xlu0 %v663, 4
      %v715 = vpop.permute.xlu0 %714
      %716 = vrot.lane.b32.xlu0 %v675, 4
      %v717 = vpop.permute.xlu0 %716
      %718 = vrot.lane.b32.xlu0 %v687, 4
      %v719 = vpop.permute.xlu0 %718
      %v736 = vunpack.c.l.b16 %v215
      %v737 = vunpack.c.l.b16 %v216
      %v738 = vunpack.c.l.b16 %v217
      %v739 = vunpack.c.l.b16 %v218
      %v740 = vunpack.c.l.b16 %v219
      %v741 = vunpack.c.l.b16 %v220
      %v742 = vunpack.c.l.b16 %v221
      %v743 = vunpack.c.l.b16 %v222
      %v744 = vunpack.c.l.b16 %v223
      %v745 = vunpack.c.l.b16 %v224
      %v746 = vunpack.c.l.b16 %v225
      %v747 = vunpack.c.l.b16 %v226
      %v748 = vunpack.c.l.b16 %v227
      %v749 = vunpack.c.l.b16 %v228
      %v750 = vunpack.c.l.b16 %v229
      %v751 = vunpack.c.l.b16 %v230
      %v752 = vpack.c.b16 %v400, %v736
      %v753 = vpack.c.b16 %v402, %v737
      %v754 = vpack.c.b16 %v404, %v738
      %v755 = vpack.c.b16 %v406, %v739
      %v756 = vpack.c.b16 %v408, %v740
      %v757 = vpack.c.b16 %v410, %v741
      %v758 = vpack.c.b16 %v412, %v742
      %v759 = vpack.c.b16 %v414, %v743
      %v760 = vpack.c.b16 %v416, %v744
      %v761 = vpack.c.b16 %v418, %v745
      %v762 = vpack.c.b16 %v420, %v746
      %v763 = vpack.c.b16 %v422, %v747
      %v764 = vpack.c.b16 %v424, %v748
      %v765 = vpack.c.b16 %v426, %v749
      %v766 = vpack.c.b16 %v428, %v750
      %v767 = vpack.c.b16 %v430, %v751
      %vm768 = vcmask 1046528
      %v769 = vrot.slane %v752, 1
      %v770 = vrot.slane %v479, 1
      %v771 = vsel %vm768, %v769, %v770
      %v772 = vrot.slane %v753, 1
      %v773 = vrot.slane %v480, 1
      %v774 = vsel %vm768, %v772, %v773
      %v775 = vrot.slane %v754, 1
      %v776 = vrot.slane %v481, 1
      %v777 = vsel %vm768, %v775, %v776
      %v778 = vrot.slane %v755, 1
      %v779 = vrot.slane %v482, 1
      %v780 = vsel %vm768, %v778, %v779
      %v781 = vrot.slane %v756, 1
      %v782 = vrot.slane %v483, 1
      %v783 = vsel %vm768, %v781, %v782
      %v784 = vrot.slane %v757, 1
      %v785 = vrot.slane %v484, 1
      %v786 = vsel %vm768, %v784, %v785
      %v787 = vrot.slane %v758, 1
      %v788 = vrot.slane %v485, 1
      %v789 = vsel %vm768, %v787, %v788
      %v790 = vrot.slane %v759, 1
      %v791 = vrot.slane %v486, 1
      %v792 = vsel %vm768, %v790, %v791
      %v793 = vrot.slane %v760, 1
      %v794 = vrot.slane %v487, 1
      %v795 = vsel %vm768, %v793, %v794
      %v796 = vrot.slane %v761, 1
      %v797 = vrot.slane %v488, 1
      %v798 = vsel %vm768, %v796, %v797
      %v799 = vrot.slane %v762, 1
      %v800 = vrot.slane %v489, 1
      %v801 = vsel %vm768, %v799, %v800
      %v802 = vrot.slane %v763, 1
      %v803 = vrot.slane %v490, 1
      %v804 = vsel %vm768, %v802, %v803
      %v805 = vrot.slane %v764, 1
      %v806 = vrot.slane %v491, 1
      %v807 = vsel %vm768, %v805, %v806
      %v808 = vrot.slane %v765, 1
      %v809 = vrot.slane %v492, 1
      %v810 = vsel %vm768, %v808, %v809
      %v811 = vrot.slane %v766, 1
      %v812 = vrot.slane %v493, 1
      %v813 = vsel %vm768, %v811, %v812
      %v814 = vrot.slane %v767, 1
      %v815 = vrot.slane %v494, 1
      %v816 = vsel %vm768, %v814, %v815
      %817 = vrot.lane.b32.xlu0 %v771, 8
      %v818 = vpop.permute.xlu0 %817
      %819 = vrot.lane.b32.xlu0 %v774, 8
      %v820 = vpop.permute.xlu0 %819
      %821 = vrot.lane.b32.xlu0 %v777, 8
      %v822 = vpop.permute.xlu0 %821
      %823 = vrot.lane.b32.xlu0 %v780, 8
      %v824 = vpop.permute.xlu0 %823
      %825 = vrot.lane.b32.xlu0 %v783, 8
      %v826 = vpop.permute.xlu0 %825
      %827 = vrot.lane.b32.xlu0 %v786, 8
      %v828 = vpop.permute.xlu0 %827
      %829 = vrot.lane.b32.xlu0 %v789, 8
      %v830 = vpop.permute.xlu0 %829
      %831 = vrot.lane.b32.xlu0 %v792, 8
      %v832 = vpop.permute.xlu0 %831
      %833 = vrot.lane.b32.xlu0 %v795, 8
      %v834 = vpop.permute.xlu0 %833
      %835 = vrot.lane.b32.xlu0 %v798, 8
      %v836 = vpop.permute.xlu0 %835
      %837 = vrot.lane.b32.xlu0 %v801, 8
      %v838 = vpop.permute.xlu0 %837
      %839 = vrot.lane.b32.xlu0 %v804, 8
      %v840 = vpop.permute.xlu0 %839
      %841 = vrot.lane.b32.xlu0 %v807, 8
      %v842 = vpop.permute.xlu0 %841
      %843 = vrot.lane.b32.xlu0 %v810, 8
      %v844 = vpop.permute.xlu0 %843
      %845 = vrot.lane.b32.xlu0 %v813, 8
      %v846 = vpop.permute.xlu0 %845
      %847 = vrot.lane.b32.xlu0 %v816, 8
      %v848 = vpop.permute.xlu0 %847
      %v881 = vunpack.c.l.b16 %v235
      %v882 = vunpack.c.l.b16 %v236
      %v883 = vunpack.c.l.b16 %v237
      %v884 = vunpack.c.l.b16 %v238
      %v885 = vunpack.c.l.b16 %v239
      %v886 = vunpack.c.l.b16 %v240
      %v887 = vunpack.c.l.b16 %v241
      %v888 = vunpack.c.l.b16 %v242
      %v889 = vunpack.c.l.b16 %v243
      %v890 = vunpack.c.l.b16 %v244
      %v891 = vunpack.c.l.b16 %v245
      %v892 = vunpack.c.l.b16 %v246
      %v893 = vunpack.c.l.b16 %v247
      %v894 = vunpack.c.l.b16 %v248
      %v895 = vunpack.c.l.b16 %v249
      %v896 = vunpack.c.l.b16 %v250
      %v897 = vunpack.c.l.b16 %v251
      %v898 = vunpack.c.l.b16 %v252
      %v899 = vunpack.c.l.b16 %v253
      %v900 = vunpack.c.l.b16 %v254
      %v901 = vunpack.c.l.b16 %v255
      %v902 = vunpack.c.l.b16 %v256
      %v903 = vunpack.c.l.b16 %v257
      %v904 = vunpack.c.l.b16 %v258
      %v905 = vunpack.c.l.b16 %v259
      %v906 = vunpack.c.l.b16 %v260
      %v907 = vunpack.c.l.b16 %v261
      %v908 = vunpack.c.l.b16 %v262
      %v909 = vunpack.c.l.b16 %v263
      %v910 = vunpack.c.l.b16 %v264
      %v911 = vunpack.c.l.b16 %v265
      %v912 = vunpack.c.l.b16 %v266
      %v913 = vpack.c.b16 %v882, %v881
      %v914 = vpack.c.b16 %v884, %v883
      %v915 = vpack.c.b16 %v886, %v885
      %v916 = vpack.c.b16 %v888, %v887
      %v917 = vpack.c.b16 %v890, %v889
      %v918 = vpack.c.b16 %v892, %v891
      %v919 = vpack.c.b16 %v894, %v893
      %v920 = vpack.c.b16 %v896, %v895
      %v921 = vpack.c.b16 %v898, %v897
      %v922 = vpack.c.b16 %v900, %v899
      %v923 = vpack.c.b16 %v902, %v901
      %v924 = vpack.c.b16 %v904, %v903
      %v925 = vpack.c.b16 %v906, %v905
      %v926 = vpack.c.b16 %v908, %v907
      %v927 = vpack.c.b16 %v910, %v909
      %v928 = vpack.c.b16 %v912, %v911
      %929 = vrot.lane.b32.xlu0 %v913, 12
      %v930 = vpop.permute.xlu0 %929
      %931 = vrot.lane.b32.xlu0 %v914, 12
      %v932 = vpop.permute.xlu0 %931
      %933 = vrot.lane.b32.xlu0 %v915, 12
      %v934 = vpop.permute.xlu0 %933
      %935 = vrot.lane.b32.xlu0 %v916, 12
      %v936 = vpop.permute.xlu0 %935
      %937 = vrot.lane.b32.xlu0 %v917, 12
      %v938 = vpop.permute.xlu0 %937
      %939 = vrot.lane.b32.xlu0 %v918, 12
      %v940 = vpop.permute.xlu0 %939
      %941 = vrot.lane.b32.xlu0 %v919, 12
      %v942 = vpop.permute.xlu0 %941
      %943 = vrot.lane.b32.xlu0 %v920, 12
      %v944 = vpop.permute.xlu0 %943
      %945 = vrot.lane.b32.xlu0 %v921, 12
      %v946 = vpop.permute.xlu0 %945
      %947 = vrot.lane.b32.xlu0 %v922, 12
      %v948 = vpop.permute.xlu0 %947
      %949 = vrot.lane.b32.xlu0 %v923, 12
      %v950 = vpop.permute.xlu0 %949
      %951 = vrot.lane.b32.xlu0 %v924, 12
      %v952 = vpop.permute.xlu0 %951
      %953 = vrot.lane.b32.xlu0 %v925, 12
      %v954 = vpop.permute.xlu0 %953
      %955 = vrot.lane.b32.xlu0 %v926, 12
      %v956 = vpop.permute.xlu0 %955
      %957 = vrot.lane.b32.xlu0 %v927, 12
      %v958 = vpop.permute.xlu0 %957
      %959 = vrot.lane.b32.xlu0 %v928, 12
      %v960 = vpop.permute.xlu0 %959
      %v977 = vunpack.c.l.b16 %v267
      %v978 = vunpack.c.l.b16 %v268
      %v979 = vunpack.c.l.b16 %v269
      %v980 = vunpack.c.l.b16 %v270
      %v981 = vunpack.c.l.b16 %v271
      %v982 = vunpack.c.l.b16 %v272
      %v983 = vunpack.c.l.b16 %v273
      %v984 = vunpack.c.l.b16 %v274
      %v985 = vunpack.c.l.b16 %v275
      %v986 = vunpack.c.l.b16 %v276
      %v987 = vunpack.c.l.b16 %v277
      %v988 = vunpack.c.l.b16 %v278
      %v989 = vunpack.c.l.b16 %v279
      %v990 = vunpack.c.l.b16 %v280
      %v991 = vunpack.c.l.b16 %v281
      %v992 = vunpack.c.l.b16 %v282
      %v993 = vpack.c.b16 %v977, %v977
      %v994 = vpack.c.b16 %v978, %v978
      %v995 = vpack.c.b16 %v979, %v979
      %v996 = vpack.c.b16 %v980, %v980
      %v997 = vpack.c.b16 %v981, %v981
      %v998 = vpack.c.b16 %v982, %v982
      %v999 = vpack.c.b16 %v983, %v983
      %v1000 = vpack.c.b16 %v984, %v984
      %v1001 = vpack.c.b16 %v985, %v985
      %v1002 = vpack.c.b16 %v986, %v986
      %v1003 = vpack.c.b16 %v987, %v987
      %v1004 = vpack.c.b16 %v988, %v988
      %v1005 = vpack.c.b16 %v989, %v989
      %v1006 = vpack.c.b16 %v990, %v990
      %v1007 = vpack.c.b16 %v991, %v991
      %v1008 = vpack.c.b16 %v992, %v992
      %v1010 = vshrl.u32 %v913, 16
      %v1012 = vshll.u32 %v913, 16
      %v1014 = vrot.slane %v1012, 1
      %v1015 = vor.u32 %v1010, %v1014
      %v1017 = vshll.u32 %v993, 16
      %v1019 = vrot.slane %v1017, 1
      %v1020 = vsel %vm495, %v1015, %v1019
      %v1022 = vshrl.u32 %v914, 16
      %v1024 = vshll.u32 %v914, 16
      %v1026 = vrot.slane %v1024, 1
      %v1027 = vor.u32 %v1022, %v1026
      %v1029 = vshll.u32 %v994, 16
      %v1031 = vrot.slane %v1029, 1
      %v1032 = vsel %vm495, %v1027, %v1031
      %v1034 = vshrl.u32 %v915, 16
      %v1036 = vshll.u32 %v915, 16
      %v1038 = vrot.slane %v1036, 1
      %v1039 = vor.u32 %v1034, %v1038
      %v1041 = vshll.u32 %v995, 16
      %v1043 = vrot.slane %v1041, 1
      %v1044 = vsel %vm495, %v1039, %v1043
      %v1046 = vshrl.u32 %v916, 16
      %v1048 = vshll.u32 %v916, 16
      %v1050 = vrot.slane %v1048, 1
      %v1051 = vor.u32 %v1046, %v1050
      %v1053 = vshll.u32 %v996, 16
      %v1055 = vrot.slane %v1053, 1
      %v1056 = vsel %vm495, %v1051, %v1055
      %v1058 = vshrl.u32 %v917, 16
      %v1060 = vshll.u32 %v917, 16
      %v1062 = vrot.slane %v1060, 1
      %v1063 = vor.u32 %v1058, %v1062
      %v1065 = vshll.u32 %v997, 16
      %v1067 = vrot.slane %v1065, 1
      %v1068 = vsel %vm495, %v1063, %v1067
      %v1070 = vshrl.u32 %v918, 16
      %v1072 = vshll.u32 %v918, 16
      %v1074 = vrot.slane %v1072, 1
      %v1075 = vor.u32 %v1070, %v1074
      %v1077 = vshll.u32 %v998, 16
      %v1079 = vrot.slane %v1077, 1
      %v1080 = vsel %vm495, %v1075, %v1079
      %v1082 = vshrl.u32 %v919, 16
      %v1084 = vshll.u32 %v919, 16
      %v1086 = vrot.slane %v1084, 1
      %v1087 = vor.u32 %v1082, %v1086
      %v1089 = vshll.u32 %v999, 16
      %v1091 = vrot.slane %v1089, 1
      %v1092 = vsel %vm495, %v1087, %v1091
      %v1094 = vshrl.u32 %v920, 16
      %v1096 = vshll.u32 %v920, 16
      %v1098 = vrot.slane %v1096, 1
      %v1099 = vor.u32 %v1094, %v1098
      %v1101 = vshll.u32 %v1000, 16
      %v1103 = vrot.slane %v1101, 1
      %v1104 = vsel %vm495, %v1099, %v1103
      %v1106 = vshrl.u32 %v921, 16
      %v1108 = vshll.u32 %v921, 16
      %v1110 = vrot.slane %v1108, 1
      %v1111 = vor.u32 %v1106, %v1110
      %v1113 = vshll.u32 %v1001, 16
      %v1115 = vrot.slane %v1113, 1
      %v1116 = vsel %vm495, %v1111, %v1115
      %v1118 = vshrl.u32 %v922, 16
      %v1120 = vshll.u32 %v922, 16
      %v1122 = vrot.slane %v1120, 1
      %v1123 = vor.u32 %v1118, %v1122
      %v1125 = vshll.u32 %v1002, 16
      %v1127 = vrot.slane %v1125, 1
      %v1128 = vsel %vm495, %v1123, %v1127
      %v1130 = vshrl.u32 %v923, 16
      %v1132 = vshll.u32 %v923, 16
      %v1134 = vrot.slane %v1132, 1
      %v1135 = vor.u32 %v1130, %v1134
      %v1137 = vshll.u32 %v1003, 16
      %v1139 = vrot.slane %v1137, 1
      %v1140 = vsel %vm495, %v1135, %v1139
      %v1142 = vshrl.u32 %v924, 16
      %v1144 = vshll.u32 %v924, 16
      %v1146 = vrot.slane %v1144, 1
      %v1147 = vor.u32 %v1142, %v1146
      %v1149 = vshll.u32 %v1004, 16
      %v1151 = vrot.slane %v1149, 1
      %v1152 = vsel %vm495, %v1147, %v1151
      %v1154 = vshrl.u32 %v925, 16
      %v1156 = vshll.u32 %v925, 16
      %v1158 = vrot.slane %v1156, 1
      %v1159 = vor.u32 %v1154, %v1158
      %v1161 = vshll.u32 %v1005, 16
      %v1163 = vrot.slane %v1161, 1
      %v1164 = vsel %vm495, %v1159, %v1163
      %v1166 = vshrl.u32 %v926, 16
      %v1168 = vshll.u32 %v926, 16
      %v1170 = vrot.slane %v1168, 1
      %v1171 = vor.u32 %v1166, %v1170
      %v1173 = vshll.u32 %v1006, 16
      %v1175 = vrot.slane %v1173, 1
      %v1176 = vsel %vm495, %v1171, %v1175
      %v1178 = vshrl.u32 %v927, 16
      %v1180 = vshll.u32 %v927, 16
      %v1182 = vrot.slane %v1180, 1
      %v1183 = vor.u32 %v1178, %v1182
      %v1185 = vshll.u32 %v1007, 16
      %v1187 = vrot.slane %v1185, 1
      %v1188 = vsel %vm495, %v1183, %v1187
      %v1190 = vshrl.u32 %v928, 16
      %v1192 = vshll.u32 %v928, 16
      %v1194 = vrot.slane %v1192, 1
      %v1195 = vor.u32 %v1190, %v1194
      %v1197 = vshll.u32 %v1008, 16
      %v1199 = vrot.slane %v1197, 1
      %v1200 = vsel %vm495, %v1195, %v1199
      %1201 = vrot.lane.b32.xlu0 %v1020, 16
      %v1202 = vpop.permute.xlu0 %1201
      %1203 = vrot.lane.b32.xlu0 %v1032, 16
      %v1204 = vpop.permute.xlu0 %1203
      %1205 = vrot.lane.b32.xlu0 %v1044, 16
      %v1206 = vpop.permute.xlu0 %1205
      %1207 = vrot.lane.b32.xlu0 %v1056, 16
      %v1208 = vpop.permute.xlu0 %1207
      %1209 = vrot.lane.b32.xlu0 %v1068, 16
      %v1210 = vpop.permute.xlu0 %1209
      %1211 = vrot.lane.b32.xlu0 %v1080, 16
      %v1212 = vpop.permute.xlu0 %1211
      %1213 = vrot.lane.b32.xlu0 %v1092, 16
      %v1214 = vpop.permute.xlu0 %1213
      %1215 = vrot.lane.b32.xlu0 %v1104, 16
      %v1216 = vpop.permute.xlu0 %1215
      %1217 = vrot.lane.b32.xlu0 %v1116, 16
      %v1218 = vpop.permute.xlu0 %1217
      %1219 = vrot.lane.b32.xlu0 %v1128, 16
      %v1220 = vpop.permute.xlu0 %1219
      %1221 = vrot.lane.b32.xlu0 %v1140, 16
      %v1222 = vpop.permute.xlu0 %1221
      %1223 = vrot.lane.b32.xlu0 %v1152, 16
      %v1224 = vpop.permute.xlu0 %1223
      %1225 = vrot.lane.b32.xlu0 %v1164, 16
      %v1226 = vpop.permute.xlu0 %1225
      %1227 = vrot.lane.b32.xlu0 %v1176, 16
      %v1228 = vpop.permute.xlu0 %1227
      %1229 = vrot.lane.b32.xlu0 %v1188, 16
      %v1230 = vpop.permute.xlu0 %1229
      %1231 = vrot.lane.b32.xlu0 %v1200, 16
      %v1232 = vpop.permute.xlu0 %1231
      %v1249 = vunpack.c.l.b16 %v283
      %v1250 = vunpack.c.l.b16 %v284
      %v1251 = vunpack.c.l.b16 %v285
      %v1252 = vunpack.c.l.b16 %v286
      %v1253 = vunpack.c.l.b16 %v287
      %v1254 = vunpack.c.l.b16 %v288
      %v1255 = vunpack.c.l.b16 %v289
      %v1256 = vunpack.c.l.b16 %v290
      %v1257 = vunpack.c.l.b16 %v291
      %v1258 = vunpack.c.l.b16 %v292
      %v1259 = vunpack.c.l.b16 %v293
      %v1260 = vunpack.c.l.b16 %v294
      %v1261 = vunpack.c.l.b16 %v295
      %v1262 = vunpack.c.l.b16 %v296
      %v1263 = vunpack.c.l.b16 %v297
      %v1264 = vunpack.c.l.b16 %v298
      %v1265 = vpack.c.b16 %v882, %v1249
      %v1266 = vpack.c.b16 %v884, %v1250
      %v1267 = vpack.c.b16 %v886, %v1251
      %v1268 = vpack.c.b16 %v888, %v1252
      %v1269 = vpack.c.b16 %v890, %v1253
      %v1270 = vpack.c.b16 %v892, %v1254
      %v1271 = vpack.c.b16 %v894, %v1255
      %v1272 = vpack.c.b16 %v896, %v1256
      %v1273 = vpack.c.b16 %v898, %v1257
      %v1274 = vpack.c.b16 %v900, %v1258
      %v1275 = vpack.c.b16 %v902, %v1259
      %v1276 = vpack.c.b16 %v904, %v1260
      %v1277 = vpack.c.b16 %v906, %v1261
      %v1278 = vpack.c.b16 %v908, %v1262
      %v1279 = vpack.c.b16 %v910, %v1263
      %v1280 = vpack.c.b16 %v912, %v1264
      %v1281 = vrot.slane %v1265, 1
      %v1282 = vrot.slane %v993, 1
      %v1283 = vsel %vm768, %v1281, %v1282
      %v1284 = vrot.slane %v1266, 1
      %v1285 = vrot.slane %v994, 1
      %v1286 = vsel %vm768, %v1284, %v1285
      %v1287 = vrot.slane %v1267, 1
      %v1288 = vrot.slane %v995, 1
      %v1289 = vsel %vm768, %v1287, %v1288
      %v1290 = vrot.slane %v1268, 1
      %v1291 = vrot.slane %v996, 1
      %v1292 = vsel %vm768, %v1290, %v1291
      %v1293 = vrot.slane %v1269, 1
      %v1294 = vrot.slane %v997, 1
      %v1295 = vsel %vm768, %v1293, %v1294
      %v1296 = vrot.slane %v1270, 1
      %v1297 = vrot.slane %v998, 1
      %v1298 = vsel %vm768, %v1296, %v1297
      %v1299 = vrot.slane %v1271, 1
      %v1300 = vrot.slane %v999, 1
      %v1301 = vsel %vm768, %v1299, %v1300
      %v1302 = vrot.slane %v1272, 1
      %v1303 = vrot.slane %v1000, 1
      %v1304 = vsel %vm768, %v1302, %v1303
      %v1305 = vrot.slane %v1273, 1
      %v1306 = vrot.slane %v1001, 1
      %v1307 = vsel %vm768, %v1305, %v1306
      %v1308 = vrot.slane %v1274, 1
      %v1309 = vrot.slane %v1002, 1
      %v1310 = vsel %vm768, %v1308, %v1309
      %v1311 = vrot.slane %v1275, 1
      %v1312 = vrot.slane %v1003, 1
      %v1313 = vsel %vm768, %v1311, %v1312
      %v1314 = vrot.slane %v1276, 1
      %v1315 = vrot.slane %v1004, 1
      %v1316 = vsel %vm768, %v1314, %v1315
      %v1317 = vrot.slane %v1277, 1
      %v1318 = vrot.slane %v1005, 1
      %v1319 = vsel %vm768, %v1317, %v1318
      %v1320 = vrot.slane %v1278, 1
      %v1321 = vrot.slane %v1006, 1
      %v1322 = vsel %vm768, %v1320, %v1321
      %v1323 = vrot.slane %v1279, 1
      %v1324 = vrot.slane %v1007, 1
      %v1325 = vsel %vm768, %v1323, %v1324
      %v1326 = vrot.slane %v1280, 1
      %v1327 = vrot.slane %v1008, 1
      %v1328 = vsel %vm768, %v1326, %v1327
      %1329 = vrot.lane.b32.xlu0 %v1283, 20
      %v1330 = vpop.permute.xlu0 %1329
      %1331 = vrot.lane.b32.xlu0 %v1286, 20
      %v1332 = vpop.permute.xlu0 %1331
      %1333 = vrot.lane.b32.xlu0 %v1289, 20
      %v1334 = vpop.permute.xlu0 %1333
      %1335 = vrot.lane.b32.xlu0 %v1292, 20
      %v1336 = vpop.permute.xlu0 %1335
      %1337 = vrot.lane.b32.xlu0 %v1295, 20
      %v1338 = vpop.permute.xlu0 %1337
      %1339 = vrot.lane.b32.xlu0 %v1298, 20
      %v1340 = vpop.permute.xlu0 %1339
      %1341 = vrot.lane.b32.xlu0 %v1301, 20
      %v1342 = vpop.permute.xlu0 %1341
      %1343 = vrot.lane.b32.xlu0 %v1304, 20
      %v1344 = vpop.permute.xlu0 %1343
      %1345 = vrot.lane.b32.xlu0 %v1307, 20
      %v1346 = vpop.permute.xlu0 %1345
      %1347 = vrot.lane.b32.xlu0 %v1310, 20
      %v1348 = vpop.permute.xlu0 %1347
      %1349 = vrot.lane.b32.xlu0 %v1313, 20
      %v1350 = vpop.permute.xlu0 %1349
      %1351 = vrot.lane.b32.xlu0 %v1316, 20
      %v1352 = vpop.permute.xlu0 %1351
      %1353 = vrot.lane.b32.xlu0 %v1319, 20
      %v1354 = vpop.permute.xlu0 %1353
      %1355 = vrot.lane.b32.xlu0 %v1322, 20
      %v1356 = vpop.permute.xlu0 %1355
      %1357 = vrot.lane.b32.xlu0 %v1325, 20
      %v1358 = vpop.permute.xlu0 %1357
      %1359 = vrot.lane.b32.xlu0 %v1328, 20
      %v1360 = vpop.permute.xlu0 %1359
      %v1393 = vunpack.c.l.b16 %v303
      %v1394 = vunpack.c.l.b16 %v304
      %v1395 = vunpack.c.l.b16 %v305
      %v1396 = vunpack.c.l.b16 %v306
      %v1397 = vunpack.c.l.b16 %v307
      %v1398 = vunpack.c.l.b16 %v308
      %v1399 = vunpack.c.l.b16 %v309
      %v1400 = vunpack.c.l.b16 %v310
      %v1401 = vunpack.c.l.b16 %v311
      %v1402 = vunpack.c.l.b16 %v312
      %v1403 = vunpack.c.l.b16 %v313
      %v1404 = vunpack.c.l.b16 %v314
      %v1405 = vunpack.c.l.b16 %v315
      %v1406 = vunpack.c.l.b16 %v316
      %v1407 = vunpack.c.l.b16 %v317
      %v1408 = vunpack.c.l.b16 %v318
      %v1409 = vunpack.c.l.b16 %v319
      %v1410 = vunpack.c.l.b16 %v320
      %v1411 = vunpack.c.l.b16 %v321
      %v1412 = vunpack.c.l.b16 %v322
      %v1413 = vunpack.c.l.b16 %v323
      %v1414 = vunpack.c.l.b16 %v324
      %v1415 = vunpack.c.l.b16 %v325
      %v1416 = vunpack.c.l.b16 %v326
      %v1417 = vunpack.c.l.b16 %v327
      %v1418 = vunpack.c.l.b16 %v328
      %v1419 = vunpack.c.l.b16 %v329
      %v1420 = vunpack.c.l.b16 %v330
      %v1421 = vunpack.c.l.b16 %v331
      %v1422 = vunpack.c.l.b16 %v332
      %v1423 = vunpack.c.l.b16 %v333
      %v1424 = vunpack.c.l.b16 %v334
      %v1425 = vpack.c.b16 %v1394, %v1393
      %v1426 = vpack.c.b16 %v1396, %v1395
      %v1427 = vpack.c.b16 %v1398, %v1397
      %v1428 = vpack.c.b16 %v1400, %v1399
      %v1429 = vpack.c.b16 %v1402, %v1401
      %v1430 = vpack.c.b16 %v1404, %v1403
      %v1431 = vpack.c.b16 %v1406, %v1405
      %v1432 = vpack.c.b16 %v1408, %v1407
      %v1433 = vpack.c.b16 %v1410, %v1409
      %v1434 = vpack.c.b16 %v1412, %v1411
      %v1435 = vpack.c.b16 %v1414, %v1413
      %v1436 = vpack.c.b16 %v1416, %v1415
      %v1437 = vpack.c.b16 %v1418, %v1417
      %v1438 = vpack.c.b16 %v1420, %v1419
      %v1439 = vpack.c.b16 %v1422, %v1421
      %v1440 = vpack.c.b16 %v1424, %v1423
      %1441 = vrot.lane.b32.xlu0 %v1425, 24
      %v1442 = vpop.permute.xlu0 %1441
      %1443 = vrot.lane.b32.xlu0 %v1426, 24
      %v1444 = vpop.permute.xlu0 %1443
      %1445 = vrot.lane.b32.xlu0 %v1427, 24
      %v1446 = vpop.permute.xlu0 %1445
      %1447 = vrot.lane.b32.xlu0 %v1428, 24
      %v1448 = vpop.permute.xlu0 %1447
      %1449 = vrot.lane.b32.xlu0 %v1429, 24
      %v1450 = vpop.permute.xlu0 %1449
      %1451 = vrot.lane.b32.xlu0 %v1430, 24
      %v1452 = vpop.permute.xlu0 %1451
      %1453 = vrot.lane.b32.xlu0 %v1431, 24
      %v1454 = vpop.permute.xlu0 %1453
      %1455 = vrot.lane.b32.xlu0 %v1432, 24
      %v1456 = vpop.permute.xlu0 %1455
      %1457 = vrot.lane.b32.xlu0 %v1433, 24
      %v1458 = vpop.permute.xlu0 %1457
      %1459 = vrot.lane.b32.xlu0 %v1434, 24
      %v1460 = vpop.permute.xlu0 %1459
      %1461 = vrot.lane.b32.xlu0 %v1435, 24
      %v1462 = vpop.permute.xlu0 %1461
      %1463 = vrot.lane.b32.xlu0 %v1436, 24
      %v1464 = vpop.permute.xlu0 %1463
      %1465 = vrot.lane.b32.xlu0 %v1437, 24
      %v1466 = vpop.permute.xlu0 %1465
      %1467 = vrot.lane.b32.xlu0 %v1438, 24
      %v1468 = vpop.permute.xlu0 %1467
      %1469 = vrot.lane.b32.xlu0 %v1439, 24
      %v1470 = vpop.permute.xlu0 %1469
      %1471 = vrot.lane.b32.xlu0 %v1440, 24
      %v1472 = vpop.permute.xlu0 %1471
      %v1489 = vunpack.c.l.b16 %v335
      %v1490 = vunpack.c.l.b16 %v336
      %v1491 = vunpack.c.l.b16 %v337
      %v1492 = vunpack.c.l.b16 %v338
      %v1493 = vunpack.c.l.b16 %v339
      %v1494 = vunpack.c.l.b16 %v340
      %v1495 = vunpack.c.l.b16 %v341
      %v1496 = vunpack.c.l.b16 %v342
      %v1497 = vunpack.c.l.b16 %v343
      %v1498 = vunpack.c.l.b16 %v344
      %v1499 = vunpack.c.l.b16 %v345
      %v1500 = vunpack.c.l.b16 %v346
      %v1501 = vunpack.c.l.b16 %v347
      %v1502 = vunpack.c.l.b16 %v348
      %v1503 = vunpack.c.l.b16 %v349
      %v1504 = vunpack.c.l.b16 %v350
      %v1505 = vpack.c.b16 %v1489, %v1489
      %v1506 = vpack.c.b16 %v1490, %v1490
      %v1507 = vpack.c.b16 %v1491, %v1491
      %v1508 = vpack.c.b16 %v1492, %v1492
      %v1509 = vpack.c.b16 %v1493, %v1493
      %v1510 = vpack.c.b16 %v1494, %v1494
      %v1511 = vpack.c.b16 %v1495, %v1495
      %v1512 = vpack.c.b16 %v1496, %v1496
      %v1513 = vpack.c.b16 %v1497, %v1497
      %v1514 = vpack.c.b16 %v1498, %v1498
      %v1515 = vpack.c.b16 %v1499, %v1499
      %v1516 = vpack.c.b16 %v1500, %v1500
      %v1517 = vpack.c.b16 %v1501, %v1501
      %v1518 = vpack.c.b16 %v1502, %v1502
      %v1519 = vpack.c.b16 %v1503, %v1503
      %v1520 = vpack.c.b16 %v1504, %v1504
      %v1522 = vshrl.u32 %v1425, 16
      %v1524 = vshll.u32 %v1425, 16
      %v1526 = vrot.slane %v1524, 1
      %v1527 = vor.u32 %v1522, %v1526
      %v1529 = vshll.u32 %v1505, 16
      %v1531 = vrot.slane %v1529, 1
      %v1532 = vsel %vm495, %v1527, %v1531
      %v1534 = vshrl.u32 %v1426, 16
      %v1536 = vshll.u32 %v1426, 16
      %v1538 = vrot.slane %v1536, 1
      %v1539 = vor.u32 %v1534, %v1538
      %v1541 = vshll.u32 %v1506, 16
      %v1543 = vrot.slane %v1541, 1
      %v1544 = vsel %vm495, %v1539, %v1543
      %v1546 = vshrl.u32 %v1427, 16
      %v1548 = vshll.u32 %v1427, 16
      %v1550 = vrot.slane %v1548, 1
      %v1551 = vor.u32 %v1546, %v1550
      %v1553 = vshll.u32 %v1507, 16
      %v1555 = vrot.slane %v1553, 1
      %v1556 = vsel %vm495, %v1551, %v1555
      %v1558 = vshrl.u32 %v1428, 16
      %v1560 = vshll.u32 %v1428, 16
      %v1562 = vrot.slane %v1560, 1
      %v1563 = vor.u32 %v1558, %v1562
      %v1565 = vshll.u32 %v1508, 16
      %v1567 = vrot.slane %v1565, 1
      %v1568 = vsel %vm495, %v1563, %v1567
      %v1570 = vshrl.u32 %v1429, 16
      %v1572 = vshll.u32 %v1429, 16
      %v1574 = vrot.slane %v1572, 1
      %v1575 = vor.u32 %v1570, %v1574
      %v1577 = vshll.u32 %v1509, 16
      %v1579 = vrot.slane %v1577, 1
      %v1580 = vsel %vm495, %v1575, %v1579
      %v1582 = vshrl.u32 %v1430, 16
      %v1584 = vshll.u32 %v1430, 16
      %v1586 = vrot.slane %v1584, 1
      %v1587 = vor.u32 %v1582, %v1586
      %v1589 = vshll.u32 %v1510, 16
      %v1591 = vrot.slane %v1589, 1
      %v1592 = vsel %vm495, %v1587, %v1591
      %v1594 = vshrl.u32 %v1431, 16
      %v1596 = vshll.u32 %v1431, 16
      %v1598 = vrot.slane %v1596, 1
      %v1599 = vor.u32 %v1594, %v1598
      %v1601 = vshll.u32 %v1511, 16
      %v1603 = vrot.slane %v1601, 1
      %v1604 = vsel %vm495, %v1599, %v1603
      %v1606 = vshrl.u32 %v1432, 16
      %v1608 = vshll.u32 %v1432, 16
      %v1610 = vrot.slane %v1608, 1
      %v1611 = vor.u32 %v1606, %v1610
      %v1613 = vshll.u32 %v1512, 16
      %v1615 = vrot.slane %v1613, 1
      %v1616 = vsel %vm495, %v1611, %v1615
      %v1618 = vshrl.u32 %v1433, 16
      %v1620 = vshll.u32 %v1433, 16
      %v1622 = vrot.slane %v1620, 1
      %v1623 = vor.u32 %v1618, %v1622
      %v1625 = vshll.u32 %v1513, 16
      %v1627 = vrot.slane %v1625, 1
      %v1628 = vsel %vm495, %v1623, %v1627
      %v1630 = vshrl.u32 %v1434, 16
      %v1632 = vshll.u32 %v1434, 16
      %v1634 = vrot.slane %v1632, 1
      %v1635 = vor.u32 %v1630, %v1634
      %v1637 = vshll.u32 %v1514, 16
      %v1639 = vrot.slane %v1637, 1
      %v1640 = vsel %vm495, %v1635, %v1639
      %v1642 = vshrl.u32 %v1435, 16
      %v1644 = vshll.u32 %v1435, 16
      %v1646 = vrot.slane %v1644, 1
      %v1647 = vor.u32 %v1642, %v1646
      %v1649 = vshll.u32 %v1515, 16
      %v1651 = vrot.slane %v1649, 1
      %v1652 = vsel %vm495, %v1647, %v1651
      %v1654 = vshrl.u32 %v1436, 16
      %v1656 = vshll.u32 %v1436, 16
      %v1658 = vrot.slane %v1656, 1
      %v1659 = vor.u32 %v1654, %v1658
      %v1661 = vshll.u32 %v1516, 16
      %v1663 = vrot.slane %v1661, 1
      %v1664 = vsel %vm495, %v1659, %v1663
      %v1666 = vshrl.u32 %v1437, 16
      %v1668 = vshll.u32 %v1437, 16
      %v1670 = vrot.slane %v1668, 1
      %v1671 = vor.u32 %v1666, %v1670
      %v1673 = vshll.u32 %v1517, 16
      %v1675 = vrot.slane %v1673, 1
      %v1676 = vsel %vm495, %v1671, %v1675
      %v1678 = vshrl.u32 %v1438, 16
      %v1680 = vshll.u32 %v1438, 16
      %v1682 = vrot.slane %v1680, 1
      %v1683 = vor.u32 %v1678, %v1682
      %v1685 = vshll.u32 %v1518, 16
      %v1687 = vrot.slane %v1685, 1
      %v1688 = vsel %vm495, %v1683, %v1687
      %v1690 = vshrl.u32 %v1439, 16
      %v1692 = vshll.u32 %v1439, 16
      %v1694 = vrot.slane %v1692, 1
      %v1695 = vor.u32 %v1690, %v1694
      %v1697 = vshll.u32 %v1519, 16
      %v1699 = vrot.slane %v1697, 1
      %v1700 = vsel %vm495, %v1695, %v1699
      %v1702 = vshrl.u32 %v1440, 16
      %v1704 = vshll.u32 %v1440, 16
      %v1706 = vrot.slane %v1704, 1
      %v1707 = vor.u32 %v1702, %v1706
      %v1709 = vshll.u32 %v1520, 16
      %v1711 = vrot.slane %v1709, 1
      %v1712 = vsel %vm495, %v1707, %v1711
      %1713 = vrot.lane.b32.xlu0 %v1532, 28
      %v1714 = vpop.permute.xlu0 %1713
      %1715 = vrot.lane.b32.xlu0 %v1544, 28
      %v1716 = vpop.permute.xlu0 %1715
      %1717 = vrot.lane.b32.xlu0 %v1556, 28
      %v1718 = vpop.permute.xlu0 %1717
      %1719 = vrot.lane.b32.xlu0 %v1568, 28
      %v1720 = vpop.permute.xlu0 %1719
      %1721 = vrot.lane.b32.xlu0 %v1580, 28
      %v1722 = vpop.permute.xlu0 %1721
      %1723 = vrot.lane.b32.xlu0 %v1592, 28
      %v1724 = vpop.permute.xlu0 %1723
      %1725 = vrot.lane.b32.xlu0 %v1604, 28
      %v1726 = vpop.permute.xlu0 %1725
      %1727 = vrot.lane.b32.xlu0 %v1616, 28
      %v1728 = vpop.permute.xlu0 %1727
      %1729 = vrot.lane.b32.xlu0 %v1628, 28
      %v1730 = vpop.permute.xlu0 %1729
      %1731 = vrot.lane.b32.xlu0 %v1640, 28
      %v1732 = vpop.permute.xlu0 %1731
      %1733 = vrot.lane.b32.xlu0 %v1652, 28
      %v1734 = vpop.permute.xlu0 %1733
      %1735 = vrot.lane.b32.xlu0 %v1664, 28
      %v1736 = vpop.permute.xlu0 %1735
      %1737 = vrot.lane.b32.xlu0 %v1676, 28
      %v1738 = vpop.permute.xlu0 %1737
      %1739 = vrot.lane.b32.xlu0 %v1688, 28
      %v1740 = vpop.permute.xlu0 %1739
      %1741 = vrot.lane.b32.xlu0 %v1700, 28
      %v1742 = vpop.permute.xlu0 %1741
      %1743 = vrot.lane.b32.xlu0 %v1712, 28
      %v1744 = vpop.permute.xlu0 %1743
      %v1761 = vunpack.c.l.b16 %v351
      %v1762 = vunpack.c.l.b16 %v352
      %v1763 = vunpack.c.l.b16 %v353
      %v1764 = vunpack.c.l.b16 %v354
      %v1765 = vunpack.c.l.b16 %v355
      %v1766 = vunpack.c.l.b16 %v356
      %v1767 = vunpack.c.l.b16 %v357
      %v1768 = vunpack.c.l.b16 %v358
      %v1769 = vunpack.c.l.b16 %v359
      %v1770 = vunpack.c.l.b16 %v360
      %v1771 = vunpack.c.l.b16 %v361
      %v1772 = vunpack.c.l.b16 %v362
      %v1773 = vunpack.c.l.b16 %v363
      %v1774 = vunpack.c.l.b16 %v364
      %v1775 = vunpack.c.l.b16 %v365
      %v1776 = vunpack.c.l.b16 %v366
      %v1777 = vpack.c.b16 %v1394, %v1761
      %v1778 = vpack.c.b16 %v1396, %v1762
      %v1779 = vpack.c.b16 %v1398, %v1763
      %v1780 = vpack.c.b16 %v1400, %v1764
      %v1781 = vpack.c.b16 %v1402, %v1765
      %v1782 = vpack.c.b16 %v1404, %v1766
      %v1783 = vpack.c.b16 %v1406, %v1767
      %v1784 = vpack.c.b16 %v1408, %v1768
      %v1785 = vpack.c.b16 %v1410, %v1769
      %v1786 = vpack.c.b16 %v1412, %v1770
      %v1787 = vpack.c.b16 %v1414, %v1771
      %v1788 = vpack.c.b16 %v1416, %v1772
      %v1789 = vpack.c.b16 %v1418, %v1773
      %v1790 = vpack.c.b16 %v1420, %v1774
      %v1791 = vpack.c.b16 %v1422, %v1775
      %v1792 = vpack.c.b16 %v1424, %v1776
      %v1793 = vrot.slane %v1777, 1
      %v1794 = vrot.slane %v1505, 1
      %v1795 = vsel %vm768, %v1793, %v1794
      %v1796 = vrot.slane %v1778, 1
      %v1797 = vrot.slane %v1506, 1
      %v1798 = vsel %vm768, %v1796, %v1797
      %v1799 = vrot.slane %v1779, 1
      %v1800 = vrot.slane %v1507, 1
      %v1801 = vsel %vm768, %v1799, %v1800
      %v1802 = vrot.slane %v1780, 1
      %v1803 = vrot.slane %v1508, 1
      %v1804 = vsel %vm768, %v1802, %v1803
      %v1805 = vrot.slane %v1781, 1
      %v1806 = vrot.slane %v1509, 1
      %v1807 = vsel %vm768, %v1805, %v1806
      %v1808 = vrot.slane %v1782, 1
      %v1809 = vrot.slane %v1510, 1
      %v1810 = vsel %vm768, %v1808, %v1809
      %v1811 = vrot.slane %v1783, 1
      %v1812 = vrot.slane %v1511, 1
      %v1813 = vsel %vm768, %v1811, %v1812
      %v1814 = vrot.slane %v1784, 1
      %v1815 = vrot.slane %v1512, 1
      %v1816 = vsel %vm768, %v1814, %v1815
      %v1817 = vrot.slane %v1785, 1
      %v1818 = vrot.slane %v1513, 1
      %v1819 = vsel %vm768, %v1817, %v1818
      %v1820 = vrot.slane %v1786, 1
      %v1821 = vrot.slane %v1514, 1
      %v1822 = vsel %vm768, %v1820, %v1821
      %v1823 = vrot.slane %v1787, 1
      %v1824 = vrot.slane %v1515, 1
      %v1825 = vsel %vm768, %v1823, %v1824
      %v1826 = vrot.slane %v1788, 1
      %v1827 = vrot.slane %v1516, 1
      %v1828 = vsel %vm768, %v1826, %v1827
      %v1829 = vrot.slane %v1789, 1
      %v1830 = vrot.slane %v1517, 1
      %v1831 = vsel %vm768, %v1829, %v1830
      %v1832 = vrot.slane %v1790, 1
      %v1833 = vrot.slane %v1518, 1
      %v1834 = vsel %vm768, %v1832, %v1833
      %v1835 = vrot.slane %v1791, 1
      %v1836 = vrot.slane %v1519, 1
      %v1837 = vsel %vm768, %v1835, %v1836
      %v1838 = vrot.slane %v1792, 1
      %v1839 = vrot.slane %v1520, 1
      %v1840 = vsel %vm768, %v1838, %v1839
      %1841 = vrot.lane.b32.xlu0 %v1795, 32
      %v1842 = vpop.permute.xlu0 %1841
      %1843 = vrot.lane.b32.xlu0 %v1798, 32
      %v1844 = vpop.permute.xlu0 %1843
      %1845 = vrot.lane.b32.xlu0 %v1801, 32
      %v1846 = vpop.permute.xlu0 %1845
      %1847 = vrot.lane.b32.xlu0 %v1804, 32
      %v1848 = vpop.permute.xlu0 %1847
      %1849 = vrot.lane.b32.xlu0 %v1807, 32
      %v1850 = vpop.permute.xlu0 %1849
      %1851 = vrot.lane.b32.xlu0 %v1810, 32
      %v1852 = vpop.permute.xlu0 %1851
      %1853 = vrot.lane.b32.xlu0 %v1813, 32
      %v1854 = vpop.permute.xlu0 %1853
      %1855 = vrot.lane.b32.xlu0 %v1816, 32
      %v1856 = vpop.permute.xlu0 %1855
      %1857 = vrot.lane.b32.xlu0 %v1819, 32
      %v1858 = vpop.permute.xlu0 %1857
      %1859 = vrot.lane.b32.xlu0 %v1822, 32
      %v1860 = vpop.permute.xlu0 %1859
      %1861 = vrot.lane.b32.xlu0 %v1825, 32
      %v1862 = vpop.permute.xlu0 %1861
      %1863 = vrot.lane.b32.xlu0 %v1828, 32
      %v1864 = vpop.permute.xlu0 %1863
      %1865 = vrot.lane.b32.xlu0 %v1831, 32
      %v1866 = vpop.permute.xlu0 %1865
      %1867 = vrot.lane.b32.xlu0 %v1834, 32
      %v1868 = vpop.permute.xlu0 %1867
      %1869 = vrot.lane.b32.xlu0 %v1837, 32
      %v1870 = vpop.permute.xlu0 %1869
      %1871 = vrot.lane.b32.xlu0 %v1840, 32
      %v1872 = vpop.permute.xlu0 %1871
      %vm1873 = vcmask 31744
      %v1875 = vsel %vm1873, %v431, %v689
      %v1877 = vsel %vm1873, %v432, %v691
      %v1879 = vsel %vm1873, %v433, %v693
      %v1881 = vsel %vm1873, %v434, %v695
      %v1883 = vsel %vm1873, %v435, %v697
      %v1885 = vsel %vm1873, %v436, %v699
      %v1887 = vsel %vm1873, %v437, %v701
      %v1889 = vsel %vm1873, %v438, %v703
      %v1891 = vsel %vm1873, %v439, %v705
      %v1893 = vsel %vm1873, %v440, %v707
      %v1895 = vsel %vm1873, %v441, %v709
      %v1897 = vsel %vm1873, %v442, %v711
      %v1899 = vsel %vm1873, %v443, %v713
      %v1901 = vsel %vm1873, %v444, %v715
      %v1903 = vsel %vm1873, %v445, %v717
      %v1905 = vsel %vm1873, %v446, %v719
      %vm1906 = vcmask 64512
      %v1908 = vsel %vm1906, %v1875, %v818
      %v1910 = vsel %vm1906, %v1877, %v820
      %v1912 = vsel %vm1906, %v1879, %v822
      %v1914 = vsel %vm1906, %v1881, %v824
      %v1916 = vsel %vm1906, %v1883, %v826
      %v1918 = vsel %vm1906, %v1885, %v828
      %v1920 = vsel %vm1906, %v1887, %v830
      %v1922 = vsel %vm1906, %v1889, %v832
      %v1924 = vsel %vm1906, %v1891, %v834
      %v1926 = vsel %vm1906, %v1893, %v836
      %v1928 = vsel %vm1906, %v1895, %v838
      %v1930 = vsel %vm1906, %v1897, %v840
      %v1932 = vsel %vm1906, %v1899, %v842
      %v1934 = vsel %vm1906, %v1901, %v844
      %v1936 = vsel %vm1906, %v1903, %v846
      %v1938 = vsel %vm1906, %v1905, %v848
      %vm1939 = vcmask 97280
      %v1941 = vsel %vm1939, %v1908, %v930
      %v1943 = vsel %vm1939, %v1910, %v932
      %v1945 = vsel %vm1939, %v1912, %v934
      %v1947 = vsel %vm1939, %v1914, %v936
      %v1949 = vsel %vm1939, %v1916, %v938
      %v1951 = vsel %vm1939, %v1918, %v940
      %v1953 = vsel %vm1939, %v1920, %v942
      %v1955 = vsel %vm1939, %v1922, %v944
      %v1957 = vsel %vm1939, %v1924, %v946
      %v1959 = vsel %vm1939, %v1926, %v948
      %v1961 = vsel %vm1939, %v1928, %v950
      %v1963 = vsel %vm1939, %v1930, %v952
      %v1965 = vsel %vm1939, %v1932, %v954
      %v1967 = vsel %vm1939, %v1934, %v956
      %v1969 = vsel %vm1939, %v1936, %v958
      %v1971 = vsel %vm1939, %v1938, %v960
      %vm1972 = vcmask 130048
      %v1974 = vsel %vm1972, %v1941, %v1202
      %v1976 = vsel %vm1972, %v1943, %v1204
      %v1978 = vsel %vm1972, %v1945, %v1206
      %v1980 = vsel %vm1972, %v1947, %v1208
      %v1982 = vsel %vm1972, %v1949, %v1210
      %v1984 = vsel %vm1972, %v1951, %v1212
      %v1986 = vsel %vm1972, %v1953, %v1214
      %v1988 = vsel %vm1972, %v1955, %v1216
      %v1990 = vsel %vm1972, %v1957, %v1218
      %v1992 = vsel %vm1972, %v1959, %v1220
      %v1994 = vsel %vm1972, %v1961, %v1222
      %v1996 = vsel %vm1972, %v1963, %v1224
      %v1998 = vsel %vm1972, %v1965, %v1226
      %v2000 = vsel %vm1972, %v1967, %v1228
      %v2002 = vsel %vm1972, %v1969, %v1230
      %v2004 = vsel %vm1972, %v1971, %v1232
      %vm2005 = vcmask 162816
      %v2007 = vsel %vm2005, %v1974, %v1330
      %v2009 = vsel %vm2005, %v1976, %v1332
      %v2011 = vsel %vm2005, %v1978, %v1334
      %v2013 = vsel %vm2005, %v1980, %v1336
      %v2015 = vsel %vm2005, %v1982, %v1338
      %v2017 = vsel %vm2005, %v1984, %v1340
      %v2019 = vsel %vm2005, %v1986, %v1342
      %v2021 = vsel %vm2005, %v1988, %v1344
      %v2023 = vsel %vm2005, %v1990, %v1346
      %v2025 = vsel %vm2005, %v1992, %v1348
      %v2027 = vsel %vm2005, %v1994, %v1350
      %v2029 = vsel %vm2005, %v1996, %v1352
      %v2031 = vsel %vm2005, %v1998, %v1354
      %v2033 = vsel %vm2005, %v2000, %v1356
      %v2035 = vsel %vm2005, %v2002, %v1358
      %v2037 = vsel %vm2005, %v2004, %v1360
      %vm2038 = vcmask 195584
      %v2040 = vsel %vm2038, %v2007, %v1442
      %v2042 = vsel %vm2038, %v2009, %v1444
      %v2044 = vsel %vm2038, %v2011, %v1446
      %v2046 = vsel %vm2038, %v2013, %v1448
      %v2048 = vsel %vm2038, %v2015, %v1450
      %v2050 = vsel %vm2038, %v2017, %v1452
      %v2052 = vsel %vm2038, %v2019, %v1454
      %v2054 = vsel %vm2038, %v2021, %v1456
      %v2056 = vsel %vm2038, %v2023, %v1458
      %v2058 = vsel %vm2038, %v2025, %v1460
      %v2060 = vsel %vm2038, %v2027, %v1462
      %v2062 = vsel %vm2038, %v2029, %v1464
      %v2064 = vsel %vm2038, %v2031, %v1466
      %v2066 = vsel %vm2038, %v2033, %v1468
      %v2068 = vsel %vm2038, %v2035, %v1470
      %v2070 = vsel %vm2038, %v2037, %v1472
      %vm2071 = vcmask 228352
      %v2073 = vsel %vm2071, %v2040, %v1714
      %v2075 = vsel %vm2071, %v2042, %v1716
      %v2077 = vsel %vm2071, %v2044, %v1718
      %v2079 = vsel %vm2071, %v2046, %v1720
      %v2081 = vsel %vm2071, %v2048, %v1722
      %v2083 = vsel %vm2071, %v2050, %v1724
      %v2085 = vsel %vm2071, %v2052, %v1726
      %v2087 = vsel %vm2071, %v2054, %v1728
      %v2089 = vsel %vm2071, %v2056, %v1730
      %v2091 = vsel %vm2071, %v2058, %v1732
      %v2093 = vsel %vm2071, %v2060, %v1734
      %v2095 = vsel %vm2071, %v2062, %v1736
      %v2097 = vsel %vm2071, %v2064, %v1738
      %v2099 = vsel %vm2071, %v2066, %v1740
      %v2101 = vsel %vm2071, %v2068, %v1742
      %v2103 = vsel %vm2071, %v2070, %v1744
      %vm2104 = vcmask 261120
      %v2106 = vsel %vm2104, %v2073, %v1842
      %v2108 = vsel %vm2104, %v2075, %v1844
      %v2110 = vsel %vm2104, %v2077, %v1846
      %v2112 = vsel %vm2104, %v2079, %v1848
      %v2114 = vsel %vm2104, %v2081, %v1850
      %v2116 = vsel %vm2104, %v2083, %v1852
      %v2118 = vsel %vm2104, %v2085, %v1854
      %v2120 = vsel %vm2104, %v2087, %v1856
      %v2122 = vsel %vm2104, %v2089, %v1858
      %v2124 = vsel %vm2104, %v2091, %v1860
      %v2126 = vsel %vm2104, %v2093, %v1862
      %v2128 = vsel %vm2104, %v2095, %v1864
      %v2130 = vsel %vm2104, %v2097, %v1866
      %v2132 = vsel %vm2104, %v2099, %v1868
      %v2134 = vsel %vm2104, %v2101, %v1870
      %v2136 = vsel %vm2104, %v2103, %v1872
      %v2137 = vld [vmem:[%s1] sm:$0xf]
      %v2138 = vld [vmem:[%s1 + $0x4] sm:$0xf]
      %v2139 = vld [vmem:[%s1 + $0x8] sm:$0xf]
      %v2140 = vld [vmem:[%s1 + $0xc] sm:$0xf]
      %v2141 = vld [vmem:[%s1 + $0x10] sm:$0x3]
      %v2147 = vunpack.c.l.b16 %v2137
      %v2148 = vunpack.c.l.b16 %v2138
      %v2149 = vunpack.c.l.b16 %v2139
      %v2150 = vunpack.c.l.b16 %v2140
      %v2151 = vunpack.c.l.b16 %v2141
      %v2152 = vpack.c.b16 %v2148, %v2147
      %v2153 = vpack.c.b16 %v2150, %v2149
      %v2154 = vpack.c.b16 %v2151, %v2151
      %vm2157 = vcmask 293888
      %v2158 = vsel %vm2157, %v2106, 0
      %v2160 = vsel %vm2157, %v2108, 0
      %v2162 = vsel %vm2157, %v2110, 0
      %v2164 = vsel %vm2157, %v2112, 0
      %v2166 = vsel %vm2157, %v2114, 0
      %v2168 = vsel %vm2157, %v2116, 0
      %v2170 = vsel %vm2157, %v2118, 0
      %v2172 = vsel %vm2157, %v2120, 0
      %v2174 = vsel %vm2157, %v2122, 0
      %v2176 = vsel %vm2157, %v2124, 0
      %v2178 = vsel %vm2157, %v2126, 0
      %v2180 = vsel %vm2157, %v2128, 0
      %v2182 = vsel %vm2157, %v2130, 0
      %v2184 = vsel %vm2157, %v2132, 0
      %v2186 = vsel %vm2157, %v2134, 0
      %v2188 = vsel %vm2157, %v2136, 0
      %vm2190 = vcmask 1041408
      %v2192 = vsel %vm2190, %v2154, 0
      %2194 = vmatprep.subr.bf16.mxu0 0
      %2195 = vmatpush1.bf16.msra.mxu0 0
      %2196 = vmatprep.subr.bf16.mxu0 0
      %2197 = vmatpush1.bf16.msra.mxu0 0
      %2198 = vmatprep.subr.bf16.mxu0 0
      %2199 = vmatpush1.bf16.msra.mxu0 0
      %2200 = vmatprep.subr.bf16.mxu0 0
      %2201 = vmatpush1.bf16.msra.mxu0 0
      %2202 = vmatprep.subr.bf16.mxu0 0
      %2203 = vmatpush1.bf16.msra.mxu0 0
      %2204 = vmatprep.subr.bf16.mxu0 0
      %2205 = vmatpush1.bf16.msra.mxu0 %v2192
      %2206 = vmatprep.subr.bf16.mxu0 0
      %2207 = vmatpush1.bf16.msra.mxu0 %v2153
      %2208 = vmatprep.subr.bf16.mxu0 0
      %2209 = vmatpush1.bf16.msra.mxu0 %v2152
      %2210 = vmatprep.subr.bf16.mxu0 0
      %2211 = vmatpush2.bf16.msra.mxu0 0
      %2212 = vmatprep.subr.bf16.mxu0 0
      %2213 = vmatpush2.bf16.msra.mxu0 0
      %2214 = vmatprep.subr.bf16.mxu0 0
      %2215 = vmatpush2.bf16.msra.mxu0 0
      %2216 = vmatprep.subr.bf16.mxu0 0
      %2217 = vmatpush2.bf16.msra.mxu0 0
      %2218 = vmatprep.subr.bf16.mxu0 0
      %2219 = vmatpush2.bf16.msra.mxu0 0
      %2220 = vmatprep.subr.bf16.mxu0 0
      %2221 = vmatpush2.bf16.msra.mxu0 0
      %2222 = vmatprep.subr.bf16.mxu0 0
      %2223 = vmatpush2.bf16.msra.mxu0 0
      %2224 = vmatprep.subr.bf16.mxu0 0
      %2225 = vmatpush2.bf16.msra.mxu0 0
      %2226 = vmatprep.mubr.bf16.mxu0 0
      %2227 = vmatmul.mubr.bf16.gmra.mxu0 %v2158
      %v2228 = vpop.f32.mrf.mxu0
      %v2229 = vadd.f32 0.0, %v2228
      %v2230 = vpop.f32.mrf.mxu0
      %v2231 = vpop.f32.mrf.mxu0
      %v2232 = vadd.f32 0.0, %v2231
      %v2233 = vpop.f32.mrf.mxu0
      %2234 = vmatprep.mubr.bf16.mxu0 0
      %2235 = vmatmul.mubr.bf16.gmra.mxu0 %v2160
      %v2236 = vpop.f32.mrf.mxu0
      %v2237 = vadd.f32 0.0, %v2236
      %v2238 = vpop.f32.mrf.mxu0
      %v2239 = vpop.f32.mrf.mxu0
      %v2240 = vadd.f32 0.0, %v2239
      %v2241 = vpop.f32.mrf.mxu0
      %2242 = vmatprep.mubr.bf16.mxu0 0
      %2243 = vmatmul.mubr.bf16.gmra.mxu0 %v2162
      %v2244 = vpop.f32.mrf.mxu0
      %v2245 = vadd.f32 0.0, %v2244
      %v2246 = vpop.f32.mrf.mxu0
      %v2247 = vpop.f32.mrf.mxu0
      %v2248 = vadd.f32 0.0, %v2247
      %v2249 = vpop.f32.mrf.mxu0
      %2250 = vmatprep.mubr.bf16.mxu0 0
      %2251 = vmatmul.mubr.bf16.gmra.mxu0 %v2164
      %v2252 = vpop.f32.mrf.mxu0
      %v2253 = vadd.f32 0.0, %v2252
      %v2254 = vpop.f32.mrf.mxu0
      %v2255 = vpop.f32.mrf.mxu0
      %v2256 = vadd.f32 0.0, %v2255
      %v2257 = vpop.f32.mrf.mxu0
      %2258 = vmatprep.mubr.bf16.mxu0 0
      %2259 = vmatmul.mubr.bf16.gmra.mxu0 %v2166
      %v2260 = vpop.f32.mrf.mxu0
      %v2261 = vadd.f32 0.0, %v2260
      %v2262 = vpop.f32.mrf.mxu0
      %v2263 = vpop.f32.mrf.mxu0
      %v2264 = vadd.f32 0.0, %v2263
      %v2265 = vpop.f32.mrf.mxu0
      %2266 = vmatprep.mubr.bf16.mxu0 0
      %2267 = vmatmul.mubr.bf16.gmra.mxu0 %v2168
      %v2268 = vpop.f32.mrf.mxu0
      %v2269 = vadd.f32 0.0, %v2268
      %v2270 = vpop.f32.mrf.mxu0
      %v2271 = vpop.f32.mrf.mxu0
      %v2272 = vadd.f32 0.0, %v2271
      %v2273 = vpop.f32.mrf.mxu0
      %2274 = vmatprep.mubr.bf16.mxu0 0
      %2275 = vmatmul.mubr.bf16.gmra.mxu0 %v2170
      %v2276 = vpop.f32.mrf.mxu0
      %v2277 = vadd.f32 0.0, %v2276
      %v2278 = vpop.f32.mrf.mxu0
      %v2279 = vpop.f32.mrf.mxu0
      %v2280 = vadd.f32 0.0, %v2279
      %v2281 = vpop.f32.mrf.mxu0
      %2282 = vmatprep.mubr.bf16.mxu0 0
      %2283 = vmatmul.mubr.bf16.gmra.mxu0 %v2172
      %v2284 = vpop.f32.mrf.mxu0
      %v2285 = vadd.f32 0.0, %v2284
      %v2286 = vpop.f32.mrf.mxu0
      %v2287 = vpop.f32.mrf.mxu0
      %v2288 = vadd.f32 0.0, %v2287
      %v2289 = vpop.f32.mrf.mxu0
      %2290 = vmatprep.mubr.bf16.mxu0 0
      %2291 = vmatmul.mubr.bf16.gmra.mxu0 %v2174
      %v2292 = vpop.f32.mrf.mxu0
      %v2293 = vadd.f32 0.0, %v2292
      %v2294 = vpop.f32.mrf.mxu0
      %v2295 = vpop.f32.mrf.mxu0
      %v2296 = vadd.f32 0.0, %v2295
      %v2297 = vpop.f32.mrf.mxu0
      %2298 = vmatprep.mubr.bf16.mxu0 0
      %2299 = vmatmul.mubr.bf16.gmra.mxu0 %v2176
      %v2300 = vpop.f32.mrf.mxu0
      %v2301 = vadd.f32 0.0, %v2300
      %v2302 = vpop.f32.mrf.mxu0
      %v2303 = vpop.f32.mrf.mxu0
      %v2304 = vadd.f32 0.0, %v2303
      %v2305 = vpop.f32.mrf.mxu0
      %2306 = vmatprep.mubr.bf16.mxu0 0
      %2307 = vmatmul.mubr.bf16.gmra.mxu0 %v2178
      %v2308 = vpop.f32.mrf.mxu0
      %v2309 = vadd.f32 0.0, %v2308
      %v2310 = vpop.f32.mrf.mxu0
      %v2311 = vpop.f32.mrf.mxu0
      %v2312 = vadd.f32 0.0, %v2311
      %v2313 = vpop.f32.mrf.mxu0
      %2314 = vmatprep.mubr.bf16.mxu0 0
      %2315 = vmatmul.mubr.bf16.gmra.mxu0 %v2180
      %v2316 = vpop.f32.mrf.mxu0
      %v2317 = vadd.f32 0.0, %v2316
      %v2318 = vpop.f32.mrf.mxu0
      %v2319 = vpop.f32.mrf.mxu0
      %v2320 = vadd.f32 0.0, %v2319
      %v2321 = vpop.f32.mrf.mxu0
      %2322 = vmatprep.mubr.bf16.mxu0 0
      %2323 = vmatmul.mubr.bf16.gmra.mxu0 %v2182
      %v2324 = vpop.f32.mrf.mxu0
      %v2325 = vadd.f32 0.0, %v2324
      %v2326 = vpop.f32.mrf.mxu0
      %v2327 = vpop.f32.mrf.mxu0
      %v2328 = vadd.f32 0.0, %v2327
      %v2329 = vpop.f32.mrf.mxu0
      %2330 = vmatprep.mubr.bf16.mxu0 0
      %2331 = vmatmul.mubr.bf16.gmra.mxu0 %v2184
      %v2332 = vpop.f32.mrf.mxu0
      %v2333 = vadd.f32 0.0, %v2332
      %v2334 = vpop.f32.mrf.mxu0
      %v2335 = vpop.f32.mrf.mxu0
      %v2336 = vadd.f32 0.0, %v2335
      %v2337 = vpop.f32.mrf.mxu0
      %2338 = vmatprep.mubr.bf16.mxu0 0
      %2339 = vmatmul.mubr.bf16.gmra.mxu0 %v2186
      %v2340 = vpop.f32.mrf.mxu0
      %v2341 = vadd.f32 0.0, %v2340
      %v2342 = vpop.f32.mrf.mxu0
      %v2343 = vpop.f32.mrf.mxu0
      %v2344 = vadd.f32 0.0, %v2343
      %v2345 = vpop.f32.mrf.mxu0
      %2346 = vmatprep.mubr.bf16.mxu0 0
      %2347 = vmatmul.mubr.bf16.gmra.mxu0 %v2188
      %v2348 = vpop.f32.mrf.mxu0
      %v2349 = vadd.f32 0.0, %v2348
      %v2350 = vpop.f32.mrf.mxu0
      %v2351 = vpop.f32.mrf.mxu0
      %v2352 = vadd.f32 0.0, %v2351
      %v2353 = vpop.f32.mrf.mxu0
      %2354 = vdwg.mxu0
      %v2355 = vsel %vm1906, %v2229, 0.0
      %v2356 = vsel %vm1906, %v2232, 0.0
      %v2357 = vadd.f32 %v2355, %v2356
      %v2358 = vsel %vm1906, %v2237, 0.0
      %v2359 = vadd.f32 %v2357, %v2358
      %v2360 = vsel %vm1906, %v2240, 0.0
      %v2361 = vadd.f32 %v2359, %v2360
      %v2362 = vsel %vm1906, %v2245, 0.0
      %v2363 = vadd.f32 %v2361, %v2362
      %v2364 = vsel %vm1906, %v2248, 0.0
      %v2365 = vadd.f32 %v2363, %v2364
      %v2366 = vsel %vm1906, %v2253, 0.0
      %v2367 = vadd.f32 %v2365, %v2366
      %v2368 = vsel %vm1906, %v2256, 0.0
      %v2369 = vadd.f32 %v2367, %v2368
      %v2370 = vsel %vm1906, %v2261, 0.0
      %v2371 = vadd.f32 %v2369, %v2370
      %v2372 = vsel %vm1906, %v2264, 0.0
      %v2373 = vadd.f32 %v2371, %v2372
      %v2374 = vsel %vm1906, %v2269, 0.0
      %v2375 = vadd.f32 %v2373, %v2374
      %v2376 = vsel %vm1906, %v2272, 0.0
      %v2377 = vadd.f32 %v2375, %v2376
      %v2378 = vsel %vm1906, %v2277, 0.0
      %v2379 = vadd.f32 %v2377, %v2378
      %v2380 = vsel %vm1906, %v2280, 0.0
      %v2381 = vadd.f32 %v2379, %v2380
      %v2382 = vsel %vm1906, %v2285, 0.0
      %v2383 = vadd.f32 %v2381, %v2382
      %v2384 = vsel %vm1906, %v2288, 0.0
      %v2385 = vadd.f32 %v2383, %v2384
      %v2386 = vsel %vm1906, %v2293, 0.0
      %v2387 = vadd.f32 %v2385, %v2386
      %v2388 = vsel %vm1906, %v2296, 0.0
      %v2389 = vadd.f32 %v2387, %v2388
      %v2390 = vsel %vm1906, %v2301, 0.0
      %v2391 = vadd.f32 %v2389, %v2390
      %v2392 = vsel %vm1906, %v2304, 0.0
      %v2393 = vadd.f32 %v2391, %v2392
      %v2394 = vsel %vm1906, %v2309, 0.0
      %v2395 = vadd.f32 %v2393, %v2394
      %v2396 = vsel %vm1906, %v2312, 0.0
      %v2397 = vadd.f32 %v2395, %v2396
      %v2398 = vsel %vm1906, %v2317, 0.0
      %v2399 = vadd.f32 %v2397, %v2398
      %v2400 = vsel %vm1906, %v2320, 0.0
      %v2401 = vadd.f32 %v2399, %v2400
      %v2402 = vsel %vm1906, %v2325, 0.0
      %v2403 = vadd.f32 %v2401, %v2402
      %v2404 = vsel %vm1906, %v2328, 0.0
      %v2405 = vadd.f32 %v2403, %v2404
      %v2406 = vsel %vm1906, %v2333, 0.0
      %v2407 = vadd.f32 %v2405, %v2406
      %v2408 = vsel %vm1906, %v2336, 0.0
      %v2409 = vadd.f32 %v2407, %v2408
      %v2410 = vsel %vm1906, %v2341, 0.0
      %v2411 = vadd.f32 %v2409, %v2410
      %v2412 = vsel %vm1906, %v2344, 0.0
      %v2413 = vadd.f32 %v2411, %v2412
      %v2414 = vsel %vm1906, %v2349, 0.0
      %v2415 = vadd.f32 %v2413, %v2414
      %v2416 = vsel %vm1906, %v2352, 0.0
      %v2417 = vadd.f32 %v2415, %v2416
      %v2418 = vrot.slane %v2417, 4
      %v2419 = vadd.f32 %v2417, %v2418
      %v2420 = vrot.slane %v2419, 2
      %v2421 = vadd.f32 %v2419, %v2420
      %v2422 = vrot.slane %v2421, 1
      %v2423 = vadd.f32 %v2421, %v2422
      %v2424 = vmul.f32 %v2423, 0.00390625
      %v2425 = vsub.f32 %v2229, %v2424
      %v2426 = vsub.f32 %v2232, %v2424
      %v2427 = vsub.f32 %v2237, %v2424
      %v2428 = vsub.f32 %v2240, %v2424
      %v2429 = vsub.f32 %v2245, %v2424
      %v2430 = vsub.f32 %v2248, %v2424
      %v2431 = vsub.f32 %v2253, %v2424
      %v2432 = vsub.f32 %v2256, %v2424
      %v2433 = vsub.f32 %v2261, %v2424
      %v2434 = vsub.f32 %v2264, %v2424
      %v2435 = vsub.f32 %v2269, %v2424
      %v2436 = vsub.f32 %v2272, %v2424
      %v2437 = vsub.f32 %v2277, %v2424
      %v2438 = vsub.f32 %v2280, %v2424
      %v2439 = vsub.f32 %v2285, %v2424
      %v2440 = vsub.f32 %v2288, %v2424
      %v2441 = vsub.f32 %v2293, %v2424
      %v2442 = vsub.f32 %v2296, %v2424
      %v2443 = vsub.f32 %v2301, %v2424
      %v2444 = vsub.f32 %v2304, %v2424
      %v2445 = vsub.f32 %v2309, %v2424
      %v2446 = vsub.f32 %v2312, %v2424
      %v2447 = vsub.f32 %v2317, %v2424
      %v2448 = vsub.f32 %v2320, %v2424
      %v2449 = vsub.f32 %v2325, %v2424
      %v2450 = vsub.f32 %v2328, %v2424
      %v2451 = vsub.f32 %v2333, %v2424
      %v2452 = vsub.f32 %v2336, %v2424
      %v2453 = vsub.f32 %v2341, %v2424
      %v2454 = vsub.f32 %v2344, %v2424
      %v2455 = vsub.f32 %v2349, %v2424
      %v2456 = vsub.f32 %v2352, %v2424
      %v2457 = vmul.f32 %v2425, %v2425
      %v2458 = vmul.f32 %v2426, %v2426
      %v2459 = vmul.f32 %v2427, %v2427
      %v2460 = vmul.f32 %v2428, %v2428
      %v2461 = vmul.f32 %v2429, %v2429
      %v2462 = vmul.f32 %v2430, %v2430
      %v2463 = vmul.f32 %v2431, %v2431
      %v2464 = vmul.f32 %v2432, %v2432
      %v2465 = vmul.f32 %v2433, %v2433
      %v2466 = vmul.f32 %v2434, %v2434
      %v2467 = vmul.f32 %v2435, %v2435
      %v2468 = vmul.f32 %v2436, %v2436
      %v2469 = vmul.f32 %v2437, %v2437
      %v2470 = vmul.f32 %v2438, %v2438
      %v2471 = vmul.f32 %v2439, %v2439
      %v2472 = vmul.f32 %v2440, %v2440
      %v2473 = vmul.f32 %v2441, %v2441
      %v2474 = vmul.f32 %v2442, %v2442
      %v2475 = vmul.f32 %v2443, %v2443
      %v2476 = vmul.f32 %v2444, %v2444
      %v2477 = vmul.f32 %v2445, %v2445
      %v2478 = vmul.f32 %v2446, %v2446
      %v2479 = vmul.f32 %v2447, %v2447
      %v2480 = vmul.f32 %v2448, %v2448
      %v2481 = vmul.f32 %v2449, %v2449
      %v2482 = vmul.f32 %v2450, %v2450
      %v2483 = vmul.f32 %v2451, %v2451
      %v2484 = vmul.f32 %v2452, %v2452
      %v2485 = vmul.f32 %v2453, %v2453
      %v2486 = vmul.f32 %v2454, %v2454
      %v2487 = vmul.f32 %v2455, %v2455
      %v2488 = vmul.f32 %v2456, %v2456
      %v2489 = vsel %vm1906, %v2457, 0.0
      %v2490 = vsel %vm1906, %v2458, 0.0
      %v2491 = vadd.f32 %v2489, %v2490
      %v2492 = vsel %vm1906, %v2459, 0.0
      %v2493 = vadd.f32 %v2491, %v2492
      %v2494 = vsel %vm1906, %v2460, 0.0
      %v2495 = vadd.f32 %v2493, %v2494
      %v2496 = vsel %vm1906, %v2461, 0.0
      %v2497 = vadd.f32 %v2495, %v2496
      %v2498 = vsel %vm1906, %v2462, 0.0
      %v2499 = vadd.f32 %v2497, %v2498
      %v2500 = vsel %vm1906, %v2463, 0.0
      %v2501 = vadd.f32 %v2499, %v2500
      %v2502 = vsel %vm1906, %v2464, 0.0
      %v2503 = vadd.f32 %v2501, %v2502
      %v2504 = vsel %vm1906, %v2465, 0.0
      %v2505 = vadd.f32 %v2503, %v2504
      %v2506 = vsel %vm1906, %v2466, 0.0
      %v2507 = vadd.f32 %v2505, %v2506
      %v2508 = vsel %vm1906, %v2467, 0.0
      %v2509 = vadd.f32 %v2507, %v2508
      %v2510 = vsel %vm1906, %v2468, 0.0
      %v2511 = vadd.f32 %v2509, %v2510
      %v2512 = vsel %vm1906, %v2469, 0.0
      %v2513 = vadd.f32 %v2511, %v2512
      %v2514 = vsel %vm1906, %v2470, 0.0
      %v2515 = vadd.f32 %v2513, %v2514
      %v2516 = vsel %vm1906, %v2471, 0.0
      %v2517 = vadd.f32 %v2515, %v2516
      %v2518 = vsel %vm1906, %v2472, 0.0
      %v2519 = vadd.f32 %v2517, %v2518
      %v2520 = vsel %vm1906, %v2473, 0.0
      %v2521 = vadd.f32 %v2519, %v2520
      %v2522 = vsel %vm1906, %v2474, 0.0
      %v2523 = vadd.f32 %v2521, %v2522
      %v2524 = vsel %vm1906, %v2475, 0.0
      %v2525 = vadd.f32 %v2523, %v2524
      %v2526 = vsel %vm1906, %v2476, 0.0
      %v2527 = vadd.f32 %v2525, %v2526
      %v2528 = vsel %vm1906, %v2477, 0.0
      %v2529 = vadd.f32 %v2527, %v2528
      %v2530 = vsel %vm1906, %v2478, 0.0
      %v2531 = vadd.f32 %v2529, %v2530
      %v2532 = vsel %vm1906, %v2479, 0.0
      %v2533 = vadd.f32 %v2531, %v2532
      %v2534 = vsel %vm1906, %v2480, 0.0
      %v2535 = vadd.f32 %v2533, %v2534
      %v2536 = vsel %vm1906, %v2481, 0.0
      %v2537 = vadd.f32 %v2535, %v2536
      %v2538 = vsel %vm1906, %v2482, 0.0
      %v2539 = vadd.f32 %v2537, %v2538
      %v2540 = vsel %vm1906, %v2483, 0.0
      %v2541 = vadd.f32 %v2539, %v2540
      %v2542 = vsel %vm1906, %v2484, 0.0
      %v2543 = vadd.f32 %v2541, %v2542
      %v2544 = vsel %vm1906, %v2485, 0.0
      %v2545 = vadd.f32 %v2543, %v2544
      %v2546 = vsel %vm1906, %v2486, 0.0
      %v2547 = vadd.f32 %v2545, %v2546
      %v2548 = vsel %vm1906, %v2487, 0.0
      %v2549 = vadd.f32 %v2547, %v2548
      %v2550 = vsel %vm1906, %v2488, 0.0
      %v2551 = vadd.f32 %v2549, %v2550
      %v2552 = vrot.slane %v2551, 4
      %v2553 = vadd.f32 %v2551, %v2552
      %v2554 = vrot.slane %v2553, 2
      %v2555 = vadd.f32 %v2553, %v2554
      %v2556 = vrot.slane %v2555, 1
      %v2557 = vadd.f32 %v2555, %v2556
      %vm2558 = vcmask 1040384
      %v2559 = vsel %vm2558, %v2423, %v2557
      %vm2560 = vcmask 58368
      %2561 = vst.msk [vmem:[%s161] sm:$0x3] %vm2560, %v2559
      %p2562 = scmp.lt.s32.totalorder %s17, 1
      %s2563 = scalar_select %p2562, %s17, 1
      %p2564 = scmp.lt.s32.totalorder %s18, 0
      %s2565 = scalar_select %p2564, %s18, 0
      %s2566 = sadd.s32 %s2565, %s2563
      %s2567 = smul.addr %s2566, 2
      %s2568 = scalar_lea.vmem %s2, %s2567
      // Predicated region
      $region29: #{conv_bn_act.2} parent=27 // pred_check
        %p2569 = pneg %p92
      $region30: #{conv_bn_act.2} parent=27 // pred_check_branch
        %2571 = sbr.rel (%p2569) target = $region32
      $region31: #{conv_bn_act.2} parent=27 // pred_region
        _
      $region32: #{conv_bn_act.2} parent=27 // pred_fallthru
        _
    $region28: #{conv_bn_act.2} parent=5 // pred_fallthru
      _
    %p2572 = scmp.le.s32.totalorder 2, %s8
    // Predicated region
    $region33: #{conv_bn_act.2} parent=5 // pred_check
      %p2573 = pneg %p2572
    $region34: #{conv_bn_act.2} parent=5 // pred_check_branch
      %2575 = sbr.rel (%p2573) target = $region36
    $region35: #{conv_bn_act.2} parent=5 // pred_region
      %s2576 = ssub.s32 %s8, 2
      // Predicated region
      $region37: #{conv_bn_act.2} parent=35 // pred_check
        %p2577 = pneg %p98
      $region38: #{conv_bn_act.2} parent=35 // pred_check_branch
        %2579 = sbr.rel (%p2577) target = $region40
      $region39: #{conv_bn_act.2} parent=35 // pred_region
        %p2580 = scmp.lt.s32.totalorder %s19, 1
        %s2581 = scalar_select %p2580, %s19, 1
        %p2582 = scmp.lt.s32.totalorder %s20, 0
        %s2583 = scalar_select %p2582, %s20, 0
        %s2584 = sadd.s32 %s2583, %s2581
        %s2585 = smul.addr %s2584, 2
        %s2586 = scalar_lea.vmem %s2, %s2585
      $region40: #{conv_bn_act.2} parent=35 // pred_fallthru
        _
    $region36: #{conv_bn_act.2} parent=5 // pred_fallthru
      _
  $region6: #{conv_bn_act.2} parent=0 // loop_footer
    %s12 = sadd.s32 1, %s8
  $region7: #{conv_bn_act.2} parent=0 // loop_footer_branch
    %7 = sbr.rel target = $region3
  $region8: #{conv_bn_act.2} parent=0 // loop_exit
    _

// kernel: conv_bn_act.3
$region0: #{conv_bn_act.3}
  #allocation0 [shape = 'u32[]', space=smem, size = 0x4, offset = 0x4, fixed_abs, tag = 'smem constant byte address 0x4 - core index']
  #allocation1 [shape = 'u32[144,128]{1,0:T(1,128)}', space=vmem, size = 0x12000, scoped, tag = 'internal scratch']
  %s0 = inlined_call_operand.vmem [shape: bf16[2,1,18,18,4], index: 0, kind: input, shape index: {}]
  %s1 = inlined_call_operand.vmem [shape: bf16[36,128], index: 1, kind: input, shape index: {}]
  %s2 = inlined_call_operand.vmem [shape: f32[1,8], index: 2, kind: input, shape index: {}]
  %s3 = inlined_call_operand.vmem [shape: f32[1,8], index: 3, kind: input, shape index: {}]
  %s4 = inlined_call_operand.vmem [shape: f32[2,16,16,8], index: 4, kind: output, shape index: {}]
  %s5 = sld [smem:[#allocation0]]
  $region49: #{conv_bn_act.3} parent=0
    _
  %s7 = ssub.s32 1, %s5
  %s8 = scalar_select 0, %s7, %s5
  loop: start=0, step=1, limit=4
  $region2: #{conv_bn_act.3} parent=0 // loop_pre_header
    _
  $region3: #{conv_bn_act.3} parent=0 // loop_header
    %s10 = sphi 0, %s14
    %p11 = scmp.ge.s32.totalorder %s10, 4
    %s17 = sphi 0, %s29
    %s18 = sphi 0, %s25
    %s19 = sphi 0, %s17
    %s20 = sphi 0, %s18
    %s21 = sphi 0, %s19
    %s22 = sphi 0, %s20
    %s32 = sphi 0, %s34
    %s35 = sphi 0, %s32
    %s36 = sphi 0, %s35
    %s52 = sphi 0, %s36
    %s56 = sphi 0, %s56
    %s58 = sphi 0, %s56
    %s59 = sphi 0, %s58
    %s73 = sphi 0, %s59
    %s77 = sphi 0, %s77
    %s79 = sphi 0, %s77
    %s80 = sphi 0, %s79
    %s94 = sphi 0, %s80
    %s98 = sphi 0, %s98
    %s100 = sphi 0, %s98
    %s101 = sphi 0, %s100
    %s115 = sphi 0, %s101
    %s123 = sphi 0, %s125
    %s126 = sphi 0, %s123
    %s127 = sphi 0, %s126
    %s143 = sphi 0, %s127
  $region4: #{conv_bn_act.3} parent=0 // loop_header_branch
    %13 = sbr.rel (%p11) target = $region8
  $region5: #{conv_bn_act.3} parent=0 // loop_body
    %s15 = ssub.s32 %s10, 1
    %s16 = ssub.s32 %s10, 2
    %s23 = sadd.s32 1, %s18
    %p24 = scmp.ge.s32.totalorder %s23, 1
    %s25 = scalar_select %p24, 0, %s23
    %s26 = sadd.s32 1, %s17
    %s27 = scalar_select %p24, %s26, %s17
    %p28 = scmp.ge.s32.totalorder %s27, 2
    %s29 = scalar_select %p28, 0, %s27
    %s30 = ssub.s32 %s17, %s29
    %p31 = scmp.eq.s32.totalorder %s30, 0
    %s33 = sadd.s32 %s32, 1
    %s34 = scalar_select %p31, %s32, %s33
    %p37 = pneg %p31
    %p38 = scmp.eq.s32.totalorder %s10, 1
    %p39 = por %p37, %p38
    %p40 = scmp.ne.s32.totalorder %s32, %s35
    %p41 = scmp.eq.s32.totalorder %s10, 0
    %p42 = por %p40, %p41
    %p43 = scmp.ne.s32.totalorder %s32, %s35
    %p44 = scmp.eq.s32.totalorder %s15, 1
    %p45 = por %p43, %p44
    %p46 = scmp.ne.s32.totalorder %s35, %s36
    %p47 = scmp.eq.s32.totalorder %s15, 0
    %p48 = por %p46, %p47
    %p49 = scmp.ne.s32.totalorder %s35, %s36
    %p50 = scmp.eq.s32.totalorder %s16, 1
    %p51 = por %p49, %p50
    %p53 = scmp.ne.s32.totalorder %s36, %s52
    %p54 = scmp.eq.s32.totalorder %s16, 0
    %p55 = por %p53, %p54
    %s57 = sadd.s32 %s56, 1
    %p60 = scmp.eq.s32.totalorder %s10, 1
    %p61 = scmp.ne.s32.totalorder %s56, %s58
    %p62 = scmp.eq.s32.totalorder %s10, 0
    %p63 = por %p61, %p62
    %p64 = scmp.ne.s32.totalorder %s56, %s58
    %p65 = scmp.eq.s32.totalorder %s15, 1
    %p66 = por %p64, %p65
    %p67 = scmp.ne.s32.totalorder %s58, %s59
    %p68 = scmp.eq.s32.totalorder %s15, 0
    %p69 = por %p67, %p68
    %p70 = scmp.ne.s32.totalorder %s58, %s59
    %p71 = scmp.eq.s32.totalorder %s16, 1
    %p72 = por %p70, %p71
    %p74 = scmp.ne.s32.totalorder %s59, %s73
    %p75 = scmp.eq.s32.totalorder %s16, 0
    %p76 = por %p74, %p75
    %s78 = sadd.s32 %s77, 1
    %p81 = scmp.eq.s32.totalorder %s10, 1
    %p82 = scmp.ne.s32.totalorder %s77, %s79
    %p83 = scmp.eq.s32.totalorder %s10, 0
    %p84 = por %p82, %p83
    %p85 = scmp.ne.s32.totalorder %s77, %s79
    %p86 = scmp.eq.s32.totalorder %s15, 1
    %p87 = por %p85, %p86
    %p88 = scmp.ne.s32.totalorder %s79, %s80
    %p89 = scmp.eq.s32.totalorder %s15, 0
    %p90 = por %p88, %p89
    %p91 = scmp.ne.s32.totalorder %s79, %s80
    %p92 = scmp.eq.s32.totalorder %s16, 1
    %p93 = por %p91, %p92
    %p95 = scmp.ne.s32.totalorder %s80, %s94
    %p96 = scmp.eq.s32.totalorder %s16, 0
    %p97 = por %p95, %p96
    %s99 = sadd.s32 %s98, 1
    %p102 = scmp.eq.s32.totalorder %s10, 1
    %p103 = scmp.ne.s32.totalorder %s98, %s100
    %p104 = scmp.eq.s32.totalorder %s10, 0
    %p105 = por %p103, %p104
    %p106 = scmp.ne.s32.totalorder %s98, %s100
    %p107 = scmp.eq.s32.totalorder %s15, 1
    %p108 = por %p106, %p107
    %p109 = scmp.ne.s32.totalorder %s100, %s101
    %p110 = scmp.eq.s32.totalorder %s15, 0
    %p111 = por %p109, %p110
    %p112 = scmp.ne.s32.totalorder %s100, %s101
    %p113 = scmp.eq.s32.totalorder %s16, 1
    %p114 = por %p112, %p113
    %p116 = scmp.ne.s32.totalorder %s101, %s115
    %p117 = scmp.eq.s32.totalorder %s16, 0
    %p118 = por %p116, %p117
    %s119 = ssub.s32 %s17, %s29
    %s120 = ssub.s32 %s18, %s25
    %s121 = sor.u32 %s119, %s120
    %p122 = scmp.eq.s32.totalorder %s121, 0
    %s124 = sadd.s32 %s123, 1
    %s125 = scalar_select %p122, %s123, %s124
    %p128 = pneg %p122
    %p129 = scmp.eq.s32.totalorder %s10, 1
    %p130 = por %p128, %p129
    %p131 = scmp.ne.s32.totalorder %s123, %s126
    %p132 = scmp.eq.s32.totalorder %s10, 0
    %p133 = por %p131, %p132
    %p134 = scmp.ne.s32.totalorder %s123, %s126
    %p135 = scmp.eq.s32.totalorder %s15, 1
    %p136 = por %p134, %p135
    %p137 = scmp.ne.s32.totalorder %s126, %s127
    %p138 = scmp.eq.s32.totalorder %s15, 0
    %p139 = por %p137, %p138
    %p140 = scmp.ne.s32.totalorder %s126, %s127
    %p141 = scmp.eq.s32.totalorder %s16, 1
    %p142 = por %p140, %p141
    %p144 = scmp.ne.s32.totalorder %s127, %s143
    %p145 = scmp.eq.s32.totalorder %s16, 0
    %p146 = por %p144, %p145
    %p147 = scmp.le.s32.totalorder 1, %s10
    %p148 = scmp.lt.s32.totalorder %s10, 3
    %p149 = pnand %p147, %p148
    %p150 = pneg %p149
    // Predicated region
    $region9: #{conv_bn_act.3} parent=5 // pred_check
      _
    $region10: #{conv_bn_act.3} parent=5 // pred_check_branch
      %152 = sbr.rel (%p149) target = $region12
    $region11: #{conv_bn_act.3} parent=5 // pred_region
      %s153 = ssub.s32 %s10, 1
      // Predicated region
      $region13: #{conv_bn_act.3} parent=11 // pred_check
        %p154 = pneg %p69
      $region14: #{conv_bn_act.3} parent=11 // pred_check_branch
        %156 = sbr.rel (%p154) target = $region16
      $region15: #{conv_bn_act.3} parent=11 // pred_region
        _
      $region16: #{conv_bn_act.3} parent=11 // pred_fallthru
        _
      // Predicated region
      $region17: #{conv_bn_act.3} parent=11 // pred_check
        %p157 = pneg %p90
      $region18: #{conv_bn_act.3} parent=11 // pred_check_branch
        %159 = sbr.rel (%p157) target = $region20
      $region19: #{conv_bn_act.3} parent=11 // pred_region
        _
      $region20: #{conv_bn_act.3} parent=11 // pred_fallthru
        _
      // Predicated region
      $region21: #{conv_bn_act.3} parent=11 // pred_check
        %p160 = pneg %p111
      $region22: #{conv_bn_act.3} parent=11 // pred_check_branch
        %162 = sbr.rel (%p160) target = $region24
      $region23: #{conv_bn_act.3} parent=11 // pred_region
        _
      $region24: #{conv_bn_act.3} parent=11 // pred_fallthru
        _
    $region12: #{conv_bn_act.3} parent=5 // pred_fallthru
      _
    %p163 = scmp.lt.s32.totalorder %s10, 2
    // Predicated region
    $region25: #{conv_bn_act.3} parent=5 // pred_check
      %p164 = pneg %p163
    $region26: #{conv_bn_act.3} parent=5 // pred_check_branch
      %166 = sbr.rel (%p164) target = $region28
    $region27: #{conv_bn_act.3} parent=5 // pred_region
      // Predicated region
      $region29: #{conv_bn_act.3} parent=27 // pred_check
        %p167 = pneg %p42
      $region30: #{conv_bn_act.3} parent=27 // pred_check_branch
        %169 = sbr.rel (%p167) target = $region32
      $region31: #{conv_bn_act.3} parent=27 // pred_region
        %p170 = scmp.lt.s32.totalorder %s17, 1
        %s171 = scalar_select %p170, %s17, 1
        %s172 = smul.addr %s171, 54
        %s173 = smul.addr %s172, 4
        %s174 = scalar_lea.vmem %s0, %s173
      $region32: #{conv_bn_act.3} parent=27 // pred_fallthru
        _
    $region28: #{conv_bn_act.3} parent=5 // pred_fallthru
      _
    %p175 = scmp.le.s32.totalorder 1, %s10
    %p176 = scmp.lt.s32.totalorder %s10, 3
    %p177 = pnand %p175, %p176
    %p178 = pneg %p177
    // Predicated region
    $region33: #{conv_bn_act.3} parent=5 // pred_check
      _
    $region34: #{conv_bn_act.3} parent=5 // pred_check_branch
      %180 = sbr.rel (%p177) target = $region36
    $region35: #{conv_bn_act.3} parent=5 // pred_region
      %s181 = ssub.s32 %s10, 1
      %p182 = scmp.lt.s32.totalorder %s19, 1
      %s183 = scalar_select %p182, %s19, 1
      %s184 = smul.addr %s183, 54
      %s185 = smul.addr %s184, 4
      %s186 = scalar_lea.vmem %s0, %s185
      %p187 = pneg %p48
      %p188 = pneg %p45
      %p189 = pneg %p69
      %p190 = pneg %p66
      %p191 = pneg %p90
      %p192 = pneg %p87
      %p193 = pneg %p111
      %p194 = pneg %p108
      %p195 = pneg %p139
      %p196 = pneg %p136
      %s197 = smul.u32 16, %s20
      %p198 = scmp.lt.s32.totalorder %s19, 1
      %s199 = scalar_select %p198, %s19, 1
      %p200 = scmp.lt.s32.totalorder %s197, 15
      %s201 = scalar_select %p200, %s197, 15
      %s202 = smul.addr %s201, 2
      %s203 = smul.addr %s199, 32
      %s204 = sadd.s32 %s202, %s203
      %s205 = smul.addr %s204, 8
      %s206 = scalar_lea.vmem %s4, %s205
      %p207 = scmp.lt.s32.totalorder %s19, 1
      %s208 = scalar_select %p207, %s19, 1
      %s209 = smul.addr %s208, 54
      %s210 = smul.addr %s209, 4
      %s211 = scalar_lea.vmem %s0, %s210
      %s212 = smul.u32 16, %s20
      %p213 = scmp.lt.s32.totalorder %s19, 1
      %s214 = scalar_select %p213, %s19, 1
      %p215 = scmp.lt.s32.totalorder %s212, 15
      %s216 = scalar_select %p215, %s212, 15
      %s217 = smul.addr %s216, 2
      %s218 = smul.addr %s214, 32
      %s219 = sadd.s32 %s217, %s218
      %s220 = smul.addr %s219, 8
      %s221 = scalar_lea.vmem %s4, %s220
      %s222 = smul.u32 16, %s20
      %s224 = smul.u32 %s20, 16
      %s225 = smul.u32 %s224, 3
      %s226 = smul.addr %s225, 4
      %s227 = scalar_lea.vmem %s211, %s226
      %v228 = vld [vmem:[%s227] sm:$0xf]
      %v229 = vld [vmem:[%s227 + $0x4] sm:$0xf]
      %v230 = vld [vmem:[%s227 + $0xc] sm:$0xf]
      %v231 = vld [vmem:[%s227 + $0x10] sm:$0xf]
      %v232 = vld [vmem:[%s227 + $0x18] sm:$0xf]
      %v233 = vld [vmem:[%s227 + $0x1c] sm:$0xf]
      %v234 = vld [vmem:[%s227 + $0x24] sm:$0xf]
      %v235 = vld [vmem:[%s227 + $0x28] sm:$0xf]
      %v236 = vld [vmem:[%s227 + $0x30] sm:$0xf]
      %v237 = vld [vmem:[%s227 + $0x34] sm:$0xf]
      %v238 = vld [vmem:[%s227 + $0x3c] sm:$0xf]
      %v239 = vld [vmem:[%s227 + $0x40] sm:$0xf]
      %v240 = vld [vmem:[%s227 + $0x48] sm:$0xf]
      %v241 = vld [vmem:[%s227 + $0x4c] sm:$0xf]
      %v242 = vld [vmem:[%s227 + $0x54] sm:$0xf]
      %v243 = vld [vmem:[%s227 + $0x58] sm:$0xf]
      %v244 = vld [vmem:[%s227 + $0x60] sm:$0xf]
      %v245 = vld [vmem:[%s227 + $0x64] sm:$0xf]
      %v246 = vld [vmem:[%s227 + $0x6c] sm:$0xf]
      %v247 = vld [vmem:[%s227 + $0x70] sm:$0xf]
      %v248 = vld [vmem:[%s227 + $0x78] sm:$0xf]
      %v249 = vld [vmem:[%s227 + $0x7c] sm:$0xf]
      %v250 = vld [vmem:[%s227 + $0x84] sm:$0xf]
      %v251 = vld [vmem:[%s227 + $0x88] sm:$0xf]
      %v252 = vld [vmem:[%s227 + $0x90] sm:$0xf]
      %v253 = vld [vmem:[%s227 + $0x94] sm:$0xf]
      %v254 = vld [vmem:[%s227 + $0x9c] sm:$0xf]
      %v255 = vld [vmem:[%s227 + $0xa0] sm:$0xf]
      %v256 = vld [vmem:[%s227 + $0xa8] sm:$0xf]
      %v257 = vld [vmem:[%s227 + $0xac] sm:$0xf]
      %v258 = vld [vmem:[%s227 + $0xb4] sm:$0xf]
      %v259 = vld [vmem:[%s227 + $0xb8] sm:$0xf]
      %v260 = vld [vmem:[%s227 + $0x8] sm:$0x1]
      %v261 = vld [vmem:[%s227 + $0x14] sm:$0x1]
      %v262 = vld [vmem:[%s227 + $0x20] sm:$0x1]
      %v263 = vld [vmem:[%s227 + $0x2c] sm:$0x1]
      %v264 = vld [vmem:[%s227 + $0x38] sm:$0x1]
      %v265 = vld [vmem:[%s227 + $0x44] sm:$0x1]
      %v266 = vld [vmem:[%s227 + $0x50] sm:$0x1]
      %v267 = vld [vmem:[%s227 + $0x5c] sm:$0x1]
      %v268 = vld [vmem:[%s227 + $0x68] sm:$0x1]
      %v269 = vld [vmem:[%s227 + $0x74] sm:$0x1]
      %v270 = vld [vmem:[%s227 + $0x80] sm:$0x1]
      %v271 = vld [vmem:[%s227 + $0x8c] sm:$0x1]
      %v272 = vld [vmem:[%s227 + $0x98] sm:$0x1]
      %v273 = vld [vmem:[%s227 + $0xa4] sm:$0x1]
      %v274 = vld [vmem:[%s227 + $0xb0] sm:$0x1]
      %v275 = vld [vmem:[%s227 + $0xbc] sm:$0x1]
      %v276 = vld [vmem:[%s227] sm:$0xe]
      %v277 = vld [vmem:[%s227 + $0xc] sm:$0xe]
      %v278 = vld [vmem:[%s227 + $0x18] sm:$0xe]
      %v279 = vld [vmem:[%s227 + $0x24] sm:$0xe]
      %v280 = vld [vmem:[%s227 + $0x30] sm:$0xe]
      %v281 = vld [vmem:[%s227 + $0x3c] sm:$0xe]
      %v282 = vld [vmem:[%s227 + $0x48] sm:$0xe]
      %v283 = vld [vmem:[%s227 + $0x54] sm:$0xe]
      %v284 = vld [vmem:[%s227 + $0x60] sm:$0xe]
      %v285 = vld [vmem:[%s227 + $0x6c] sm:$0xe]
      %v286 = vld [vmem:[%s227 + $0x78] sm:$0xe]
      %v287 = vld [vmem:[%s227 + $0x84] sm:$0xe]
      %v288 = vld [vmem:[%s227 + $0x90] sm:$0xe]
      %v289 = vld [vmem:[%s227 + $0x9c] sm:$0xe]
      %v290 = vld [vmem:[%s227 + $0xa8] sm:$0xe]
      %v291 = vld [vmem:[%s227 + $0xb4] sm:$0xe]
      %s292 = sadd.s32 %s224, 1
      %s293 = smul.u32 %s292, 3
      %s294 = smul.addr %s293, 4
      %s295 = scalar_lea.vmem %s211, %s294
      %v296 = vld [vmem:[%s295] sm:$0xf]
      %v297 = vld [vmem:[%s295 + $0x4] sm:$0xf]
      %v298 = vld [vmem:[%s295 + $0xc] sm:$0xf]
      %v299 = vld [vmem:[%s295 + $0x10] sm:$0xf]
      %v300 = vld [vmem:[%s295 + $0x18] sm:$0xf]
      %v301 = vld [vmem:[%s295 + $0x1c] sm:$0xf]
      %v302 = vld [vmem:[%s295 + $0x24] sm:$0xf]
      %v303 = vld [vmem:[%s295 + $0x28] sm:$0xf]
      %v304 = vld [vmem:[%s295 + $0x30] sm:$0xf]
      %v305 = vld [vmem:[%s295 + $0x34] sm:$0xf]
      %v306 = vld [vmem:[%s295 + $0x3c] sm:$0xf]
      %v307 = vld [vmem:[%s295 + $0x40] sm:$0xf]
      %v308 = vld [vmem:[%s295 + $0x48] sm:$0xf]
      %v309 = vld [vmem:[%s295 + $0x4c] sm:$0xf]
      %v310 = vld [vmem:[%s295 + $0x54] sm:$0xf]
      %v311 = vld [vmem:[%s295 + $0x58] sm:$0xf]
      %v312 = vld [vmem:[%s295 + $0x60] sm:$0xf]
      %v313 = vld [vmem:[%s295 + $0x64] sm:$0xf]
      %v314 = vld [vmem:[%s295 + $0x6c] sm:$0xf]
      %v315 = vld [vmem:[%s295 + $0x70] sm:$0xf]
      %v316 = vld [vmem:[%s295 + $0x78] sm:$0xf]
      %v317 = vld [vmem:[%s295 + $0x7c] sm:$0xf]
      %v318 = vld [vmem:[%s295 + $0x84] sm:$0xf]
      %v319 = vld [vmem:[%s295 + $0x88] sm:$0xf]
      %v320 = vld [vmem:[%s295 + $0x90] sm:$0xf]
      %v321 = vld [vmem:[%s295 + $0x94] sm:$0xf]
      %v322 = vld [vmem:[%s295 + $0x9c] sm:$0xf]
      %v323 = vld [vmem:[%s295 + $0xa0] sm:$0xf]
      %v324 = vld [vmem:[%s295 + $0xa8] sm:$0xf]
      %v325 = vld [vmem:[%s295 + $0xac] sm:$0xf]
      %v326 = vld [vmem:[%s295 + $0xb4] sm:$0xf]
      %v327 = vld [vmem:[%s295 + $0xb8] sm:$0xf]
      %v328 = vld [vmem:[%s295 + $0x8] sm:$0x1]
      %v329 = vld [vmem:[%s295 + $0x14] sm:$0x1]
      %v330 = vld [vmem:[%s295 + $0x20] sm:$0x1]
      %v331 = vld [vmem:[%s295 + $0x2c] sm:$0x1]
      %v332 = vld [vmem:[%s295 + $0x38] sm:$0x1]
      %v333 = vld [vmem:[%s295 + $0x44] sm:$0x1]
      %v334 = vld [vmem:[%s295 + $0x50] sm:$0x1]
      %v335 = vld [vmem:[%s295 + $0x5c] sm:$0x1]
      %v336 = vld [vmem:[%s295 + $0x68] sm:$0x1]
      %v337 = vld [vmem:[%s295 + $0x74] sm:$0x1]
      %v338 = vld [vmem:[%s295 + $0x80] sm:$0x1]
      %v339 = vld [vmem:[%s295 + $0x8c] sm:$0x1]
      %v340 = vld [vmem:[%s295 + $0x98] sm:$0x1]
      %v341 = vld [vmem:[%s295 + $0xa4] sm:$0x1]
      %v342 = vld [vmem:[%s295 + $0xb0] sm:$0x1]
      %v343 = vld [vmem:[%s295 + $0xbc] sm:$0x1]
      %v344 = vld [vmem:[%s295] sm:$0xe]
      %v345 = vld [vmem:[%s295 + $0xc] sm:$0xe]
      %v346 = vld [vmem:[%s295 + $0x18] sm:$0xe]
      %v347 = vld [vmem:[%s295 + $0x24] sm:$0xe]
      %v348 = vld [vmem:[%s295 + $0x30] sm:$0xe]
      %v349 = vld [vmem:[%s295 + $0x3c] sm:$0xe]
      %v350 = vld [vmem:[%s295 + $0x48] sm:$0xe]
      %v351 = vld [vmem:[%s295 + $0x54] sm:$0xe]
      %v352 = vld [vmem:[%s295 + $0x60] sm:$0xe]
      %v353 = vld [vmem:[%s295 + $0x6c] sm:$0xe]
      %v354 = vld [vmem:[%s295 + $0x78] sm:$0xe]
      %v355 = vld [vmem:[%s295 + $0x84] sm:$0xe]
      %v356 = vld [vmem:[%s295 + $0x90] sm:$0xe]
      %v357 = vld [vmem:[%s295 + $0x9c] sm:$0xe]
      %v358 = vld [vmem:[%s295 + $0xa8] sm:$0xe]
      %v359 = vld [vmem:[%s295 + $0xb4] sm:$0xe]
      %s360 = sadd.s32 %s224, 2
      %s361 = smul.u32 %s360, 3
      %s362 = smul.addr %s361, 4
      %s363 = scalar_lea.vmem %s211, %s362
      %v364 = vld [vmem:[%s363] sm:$0xf]
      %v365 = vld [vmem:[%s363 + $0x4] sm:$0xf]
      %v366 = vld [vmem:[%s363 + $0xc] sm:$0xf]
      %v367 = vld [vmem:[%s363 + $0x10] sm:$0xf]
      %v368 = vld [vmem:[%s363 + $0x18] sm:$0xf]
      %v369 = vld [vmem:[%s363 + $0x1c] sm:$0xf]
      %v370 = vld [vmem:[%s363 + $0x24] sm:$0xf]
      %v371 = vld [vmem:[%s363 + $0x28] sm:$0xf]
      %v372 = vld [vmem:[%s363 + $0x30] sm:$0xf]
      %v373 = vld [vmem:[%s363 + $0x34] sm:$0xf]
      %v374 = vld [vmem:[%s363 + $0x3c] sm:$0xf]
      %v375 = vld [vmem:[%s363 + $0x40] sm:$0xf]
      %v376 = vld [vmem:[%s363 + $0x48] sm:$0xf]
      %v377 = vld [vmem:[%s363 + $0x4c] sm:$0xf]
      %v378 = vld [vmem:[%s363 + $0x54] sm:$0xf]
      %v379 = vld [vmem:[%s363 + $0x58] sm:$0xf]
      %v380 = vld [vmem:[%s363 + $0x60] sm:$0xf]
      %v381 = vld [vmem:[%s363 + $0x64] sm:$0xf]
      %v382 = vld [vmem:[%s363 + $0x6c] sm:$0xf]
      %v383 = vld [vmem:[%s363 + $0x70] sm:$0xf]
      %v384 = vld [vmem:[%s363 + $0x78] sm:$0xf]
      %v385 = vld [vmem:[%s363 + $0x7c] sm:$0xf]
      %v386 = vld [vmem:[%s363 + $0x84] sm:$0xf]
      %v387 = vld [vmem:[%s363 + $0x88] sm:$0xf]
      %v388 = vld [vmem:[%s363 + $0x90] sm:$0xf]
      %v389 = vld [vmem:[%s363 + $0x94] sm:$0xf]
      %v390 = vld [vmem:[%s363 + $0x9c] sm:$0xf]
      %v391 = vld [vmem:[%s363 + $0xa0] sm:$0xf]
      %v392 = vld [vmem:[%s363 + $0xa8] sm:$0xf]
      %v393 = vld [vmem:[%s363 + $0xac] sm:$0xf]
      %v394 = vld [vmem:[%s363 + $0xb4] sm:$0xf]
      %v395 = vld [vmem:[%s363 + $0xb8] sm:$0xf]
      %v396 = vld [vmem:[%s363 + $0x8] sm:$0x1]
      %v397 = vld [vmem:[%s363 + $0x14] sm:$0x1]
      %v398 = vld [vmem:[%s363 + $0x20] sm:$0x1]
      %v399 = vld [vmem:[%s363 + $0x2c] sm:$0x1]
      %v400 = vld [vmem:[%s363 + $0x38] sm:$0x1]
      %v401 = vld [vmem:[%s363 + $0x44] sm:$0x1]
      %v402 = vld [vmem:[%s363 + $0x50] sm:$0x1]
      %v403 = vld [vmem:[%s363 + $0x5c] sm:$0x1]
      %v404 = vld [vmem:[%s363 + $0x68] sm:$0x1]
      %v405 = vld [vmem:[%s363 + $0x74] sm:$0x1]
      %v406 = vld [vmem:[%s363 + $0x80] sm:$0x1]
      %v407 = vld [vmem:[%s363 + $0x8c] sm:$0x1]
      %v408 = vld [vmem:[%s363 + $0x98] sm:$0x1]
      %v409 = vld [vmem:[%s363 + $0xa4] sm:$0x1]
      %v410 = vld [vmem:[%s363 + $0xb0] sm:$0x1]
      %v411 = vld [vmem:[%s363 + $0xbc] sm:$0x1]
      %v412 = vld [vmem:[%s363] sm:$0xe]
      %v413 = vld [vmem:[%s363 + $0xc] sm:$0xe]
      %v414 = vld [vmem:[%s363 + $0x18] sm:$0xe]
      %v415 = vld [vmem:[%s363 + $0x24] sm:$0xe]
      %v416 = vld [vmem:[%s363 + $0x30] sm:$0xe]
      %v417 = vld [vmem:[%s363 + $0x3c] sm:$0xe]
      %v418 = vld [vmem:[%s363 + $0x48] sm:$0xe]
      %v419 = vld [vmem:[%s363 + $0x54] sm:$0xe]
      %v420 = vld [vmem:[%s363 + $0x60] sm:$0xe]
      %v421 = vld [vmem:[%s363 + $0x6c] sm:$0xe]
      %v422 = vld [vmem:[%s363 + $0x78] sm:$0xe]
      %v423 = vld [vmem:[%s363 + $0x84] sm:$0xe]
      %v424 = vld [vmem:[%s363 + $0x90] sm:$0xe]
      %v425 = vld [vmem:[%s363 + $0x9c] sm:$0xe]
      %v426 = vld [vmem:[%s363 + $0xa8] sm:$0xe]
      %v427 = vld [vmem:[%s363 + $0xb4] sm:$0xe]
      %v460 = vunpack.c.l.b16 %v228
      %v461 = vunpack.c.l.b16 %v229
      %v462 = vunpack.c.l.b16 %v230
      %v463 = vunpack.c.l.b16 %v231
      %v464 = vunpack.c.l.b16 %v232
      %v465 = vunpack.c.l.b16 %v233
      %v466 = vunpack.c.l.b16 %v234
      %v467 = vunpack.c.l.b16 %v235
      %v468 = vunpack.c.l.b16 %v236
      %v469 = vunpack.c.l.b16 %v237
      %v470 = vunpack.c.l.b16 %v238
      %v471 = vunpack.c.l.b16 %v239
      %v472 = vunpack.c.l.b16 %v240
      %v473 = vunpack.c.l.b16 %v241
      %v474 = vunpack.c.l.b16 %v242
      %v475 = vunpack.c.l.b16 %v243
      %v476 = vunpack.c.l.b16 %v244
      %v477 = vunpack.c.l.b16 %v245
      %v478 = vunpack.c.l.b16 %v246
      %v479 = vunpack.c.l.b16 %v247
      %v480 = vunpack.c.l.b16 %v248
      %v481 = vunpack.c.l.b16 %v249
      %v482 = vunpack.c.l.b16 %v250
      %v483 = vunpack.c.l.b16 %v251
      %v484 = vunpack.c.l.b16 %v252
      %v485 = vunpack.c.l.b16 %v253
      %v486 = vunpack.c.l.b16 %v254
      %v487 = vunpack.c.l.b16 %v255
      %v488 = vunpack.c.l.b16 %v256
      %v489 = vunpack.c.l.b16 %v257
      %v490 = vunpack.c.l.b16 %v258
      %v491 = vunpack.c.l.b16 %v259
      %v492 = vpack.c.b16 %v461, %v460
      %v493 = vpack.c.b16 %v463, %v462
      %v494 = vpack.c.b16 %v465, %v464
      %v495 = vpack.c.b16 %v467, %v466
      %v496 = vpack.c.b16 %v469, %v468
      %v497 = vpack.c.b16 %v471, %v470
      %v498 = vpack.c.b16 %v473, %v472
      %v499 = vpack.c.b16 %v475, %v474
      %v500 = vpack.c.b16 %v477, %v476
      %v501 = vpack.c.b16 %v479, %v478
      %v502 = vpack.c.b16 %v481, %v480
      %v503 = vpack.c.b16 %v483, %v482
      %v504 = vpack.c.b16 %v485, %v484
      %v505 = vpack.c.b16 %v487, %v486
      %v506 = vpack.c.b16 %v489, %v488
      %v507 = vpack.c.b16 %v491, %v490
      %v524 = vunpack.c.l.b16 %v260
      %v525 = vunpack.c.l.b16 %v261
      %v526 = vunpack.c.l.b16 %v262
      %v527 = vunpack.c.l.b16 %v263
      %v528 = vunpack.c.l.b16 %v264
      %v529 = vunpack.c.l.b16 %v265
      %v530 = vunpack.c.l.b16 %v266
      %v531 = vunpack.c.l.b16 %v267
      %v532 = vunpack.c.l.b16 %v268
      %v533 = vunpack.c.l.b16 %v269
      %v534 = vunpack.c.l.b16 %v270
      %v535 = vunpack.c.l.b16 %v271
      %v536 = vunpack.c.l.b16 %v272
      %v537 = vunpack.c.l.b16 %v273
      %v538 = vunpack.c.l.b16 %v274
      %v539 = vunpack.c.l.b16 %v275
      %v540 = vpack.c.b16 %v524, %v524
      %v541 = vpack.c.b16 %v525, %v525
      %v542 = vpack.c.b16 %v526, %v526
      %v543 = vpack.c.b16 %v527, %v527
      %v544 = vpack.c.b16 %v528, %v528
      %v545 = vpack.c.b16 %v529, %v529
      %v546 = vpack.c.b16 %v530, %v530
      %v547 = vpack.c.b16 %v531, %v531
      %v548 = vpack.c.b16 %v532, %v532
      %v549 = vpack.c.b16 %v533, %v533
      %v550 = vpack.c.b16 %v534, %v534
      %v551 = vpack.c.b16 %v535, %v535
      %v552 = vpack.c.b16 %v536, %v536
      %v553 = vpack.c.b16 %v537, %v537
      %v554 = vpack.c.b16 %v538, %v538
      %v555 = vpack.c.b16 %v539, %v539
      %vm556 = vsmask.f32 7424
      %v558 = vshrl.u32 %v492, 16
      %v560 = vshll.u32 %v492, 16
      %v562 = vrot.slane %v560, 1
      %v563 = vor.u32 %v558, %v562
      %v565 = vshll.u32 %v540, 16
      %v567 = vrot.slane %v565, 1
      %v568 = vsel %vm556, %v563, %v567
      %v570 = vshrl.u32 %v493, 16
      %v572 = vshll.u32 %v493, 16
      %v574 = vrot.slane %v572, 1
      %v575 = vor.u32 %v570, %v574
      %v577 = vshll.u32 %v541, 16
      %v579 = vrot.slane %v577, 1
      %v580 = vsel %vm556, %v575, %v579
      %v582 = vshrl.u32 %v494, 16
      %v584 = vshll.u32 %v494, 16
      %v586 = vrot.slane %v584, 1
      %v587 = vor.u32 %v582, %v586
      %v589 = vshll.u32 %v542, 16
      %v591 = vrot.slane %v589, 1
      %v592 = vsel %vm556, %v587, %v591
      %v594 = vshrl.u32 %v495, 16
      %v596 = vshll.u32 %v495, 16
      %v598 = vrot.slane %v596, 1
      %v599 = vor.u32 %v594, %v598
      %v601 = vshll.u32 %v543, 16
      %v603 = vrot.slane %v601, 1
      %v604 = vsel %vm556, %v599, %v603
      %v606 = vshrl.u32 %v496, 16
      %v608 = vshll.u32 %v496, 16
      %v610 = vrot.slane %v608, 1
      %v611 = vor.u32 %v606, %v610
      %v613 = vshll.u32 %v544, 16
      %v615 = vrot.slane %v613, 1
      %v616 = vsel %vm556, %v611, %v615
      %v618 = vshrl.u32 %v497, 16
      %v620 = vshll.u32 %v497, 16
      %v622 = vrot.slane %v620, 1
      %v623 = vor.u32 %v618, %v622
      %v625 = vshll.u32 %v545, 16
      %v627 = vrot.slane %v625, 1
      %v628 = vsel %vm556, %v623, %v627
      %v630 = vshrl.u32 %v498, 16
      %v632 = vshll.u32 %v498, 16
      %v634 = vrot.slane %v632, 1
      %v635 = vor.u32 %v630, %v634
      %v637 = vshll.u32 %v546, 16
      %v639 = vrot.slane %v637, 1
      %v640 = vsel %vm556, %v635, %v639
      %v642 = vshrl.u32 %v499, 16
      %v644 = vshll.u32 %v499, 16
      %v646 = vrot.slane %v644, 1
      %v647 = vor.u32 %v642, %v646
      %v649 = vshll.u32 %v547, 16
      %v651 = vrot.slane %v649, 1
      %v652 = vsel %vm556, %v647, %v651
      %v654 = vshrl.u32 %v500, 16
      %v656 = vshll.u32 %v500, 16
      %v658 = vrot.slane %v656, 1
      %v659 = vor.u32 %v654, %v658
      %v661 = vshll.u32 %v548, 16
      %v663 = vrot.slane %v661, 1
      %v664 = vsel %vm556, %v659, %v663
      %v666 = vshrl.u32 %v501, 16
      %v668 = vshll.u32 %v501, 16
      %v670 = vrot.slane %v668, 1
      %v671 = vor.u32 %v666, %v670
      %v673 = vshll.u32 %v549, 16
      %v675 = vrot.slane %v673, 1
      %v676 = vsel %vm556, %v671, %v675
      %v678 = vshrl.u32 %v502, 16
      %v680 = vshll.u32 %v502, 16
      %v682 = vrot.slane %v680, 1
      %v683 = vor.u32 %v678, %v682
      %v685 = vshll.u32 %v550, 16
      %v687 = vrot.slane %v685, 1
      %v688 = vsel %vm556, %v683, %v687
      %v690 = vshrl.u32 %v503, 16
      %v692 = vshll.u32 %v503, 16
      %v694 = vrot.slane %v692, 1
      %v695 = vor.u32 %v690, %v694
      %v697 = vshll.u32 %v551, 16
      %v699 = vrot.slane %v697, 1
      %v700 = vsel %vm556, %v695, %v699
      %v702 = vshrl.u32 %v504, 16
      %v704 = vshll.u32 %v504, 16
      %v706 = vrot.slane %v704, 1
      %v707 = vor.u32 %v702, %v706
      %v709 = vshll.u32 %v552, 16
      %v711 = vrot.slane %v709, 1
      %v712 = vsel %vm556, %v707, %v711
      %v714 = vshrl.u32 %v505, 16
      %v716 = vshll.u32 %v505, 16
      %v718 = vrot.slane %v716, 1
      %v719 = vor.u32 %v714, %v718
      %v721 = vshll.u32 %v553, 16
      %v723 = vrot.slane %v721, 1
      %v724 = vsel %vm556, %v719, %v723
      %v726 = vshrl.u32 %v506, 16
      %v728 = vshll.u32 %v506, 16
      %v730 = vrot.slane %v728, 1
      %v731 = vor.u32 %v726, %v730
      %v733 = vshll.u32 %v554, 16
      %v735 = vrot.slane %v733, 1
      %v736 = vsel %vm556, %v731, %v735
      %v738 = vshrl.u32 %v507, 16
      %v740 = vshll.u32 %v507, 16
      %v742 = vrot.slane %v740, 1
      %v743 = vor.u32 %v738, %v742
      %v745 = vshll.u32 %v555, 16
      %v747 = vrot.slane %v745, 1
      %v748 = vsel %vm556, %v743, %v747
      %749 = vrot.lane.b32.xlu0 %v568, 4
      %v750 = vpop.permute.xlu0 %749
      %751 = vrot.lane.b32.xlu0 %v580, 4
      %v752 = vpop.permute.xlu0 %751
      %753 = vrot.lane.b32.xlu0 %v592, 4
      %v754 = vpop.permute.xlu0 %753
      %755 = vrot.lane.b32.xlu0 %v604, 4
      %v756 = vpop.permute.xlu0 %755
      %757 = vrot.lane.b32.xlu0 %v616, 4
      %v758 = vpop.permute.xlu0 %757
      %759 = vrot.lane.b32.xlu0 %v628, 4
      %v760 = vpop.permute.xlu0 %759
      %761 = vrot.lane.b32.xlu0 %v640, 4
      %v762 = vpop.permute.xlu0 %761
      %763 = vrot.lane.b32.xlu0 %v652, 4
      %v764 = vpop.permute.xlu0 %763
      %765 = vrot.lane.b32.xlu0 %v664, 4
      %v766 = vpop.permute.xlu0 %765
      %767 = vrot.lane.b32.xlu0 %v676, 4
      %v768 = vpop.permute.xlu0 %767
      %769 = vrot.lane.b32.xlu0 %v688, 4
      %v770 = vpop.permute.xlu0 %769
      %771 = vrot.lane.b32.xlu0 %v700, 4
      %v772 = vpop.permute.xlu0 %771
      %773 = vrot.lane.b32.xlu0 %v712, 4
      %v774 = vpop.permute.xlu0 %773
      %775 = vrot.lane.b32.xlu0 %v724, 4
      %v776 = vpop.permute.xlu0 %775
      %777 = vrot.lane.b32.xlu0 %v736, 4
      %v778 = vpop.permute.xlu0 %777
      %779 = vrot.lane.b32.xlu0 %v748, 4
      %v780 = vpop.permute.xlu0 %779
      %v797 = vunpack.c.l.b16 %v276
      %v798 = vunpack.c.l.b16 %v277
      %v799 = vunpack.c.l.b16 %v278
      %v800 = vunpack.c.l.b16 %v279
      %v801 = vunpack.c.l.b16 %v280
      %v802 = vunpack.c.l.b16 %v281
      %v803 = vunpack.c.l.b16 %v282
      %v804 = vunpack.c.l.b16 %v283
      %v805 = vunpack.c.l.b16 %v284
      %v806 = vunpack.c.l.b16 %v285
      %v807 = vunpack.c.l.b16 %v286
      %v808 = vunpack.c.l.b16 %v287
      %v809 = vunpack.c.l.b16 %v288
      %v810 = vunpack.c.l.b16 %v289
      %v811 = vunpack.c.l.b16 %v290
      %v812 = vunpack.c.l.b16 %v291
      %v813 = vpack.c.b16 %v461, %v797
      %v814 = vpack.c.b16 %v463, %v798
      %v815 = vpack.c.b16 %v465, %v799
      %v816 = vpack.c.b16 %v467, %v800
      %v817 = vpack.c.b16 %v469, %v801
      %v818 = vpack.c.b16 %v471, %v802
      %v819 = vpack.c.b16 %v473, %v803
      %v820 = vpack.c.b16 %v475, %v804
      %v821 = vpack.c.b16 %v477, %v805
      %v822 = vpack.c.b16 %v479, %v806
      %v823 = vpack.c.b16 %v481, %v807
      %v824 = vpack.c.b16 %v483, %v808
      %v825 = vpack.c.b16 %v485, %v809
      %v826 = vpack.c.b16 %v487, %v810
      %v827 = vpack.c.b16 %v489, %v811
      %v828 = vpack.c.b16 %v491, %v812
      %vm829 = vcmask 1046528
      %v830 = vrot.slane %v813, 1
      %v831 = vrot.slane %v540, 1
      %v832 = vsel %vm829, %v830, %v831
      %v833 = vrot.slane %v814, 1
      %v834 = vrot.slane %v541, 1
      %v835 = vsel %vm829, %v833, %v834
      %v836 = vrot.slane %v815, 1
      %v837 = vrot.slane %v542, 1
      %v838 = vsel %vm829, %v836, %v837
      %v839 = vrot.slane %v816, 1
      %v840 = vrot.slane %v543, 1
      %v841 = vsel %vm829, %v839, %v840
      %v842 = vrot.slane %v817, 1
      %v843 = vrot.slane %v544, 1
      %v844 = vsel %vm829, %v842, %v843
      %v845 = vrot.slane %v818, 1
      %v846 = vrot.slane %v545, 1
      %v847 = vsel %vm829, %v845, %v846
      %v848 = vrot.slane %v819, 1
      %v849 = vrot.slane %v546, 1
      %v850 = vsel %vm829, %v848, %v849
      %v851 = vrot.slane %v820, 1
      %v852 = vrot.slane %v547, 1
      %v853 = vsel %vm829, %v851, %v852
      %v854 = vrot.slane %v821, 1
      %v855 = vrot.slane %v548, 1
      %v856 = vsel %vm829, %v854, %v855
      %v857 = vrot.slane %v822, 1
      %v858 = vrot.slane %v549, 1
      %v859 = vsel %vm829, %v857, %v858
      %v860 = vrot.slane %v823, 1
      %v861 = vrot.slane %v550, 1
      %v862 = vsel %vm829, %v860, %v861
      %v863 = vrot.slane %v824, 1
      %v864 = vrot.slane %v551, 1
      %v865 = vsel %vm829, %v863, %v864
      %v866 = vrot.slane %v825, 1
      %v867 = vrot.slane %v552, 1
      %v868 = vsel %vm829, %v866, %v867
      %v869 = vrot.slane %v826, 1
      %v870 = vrot.slane %v553, 1
      %v871 = vsel %vm829, %v869, %v870
      %v872 = vrot.slane %v827, 1
      %v873 = vrot.slane %v554, 1
      %v874 = vsel %vm829, %v872, %v873
      %v875 = vrot.slane %v828, 1
      %v876 = vrot.slane %v555, 1
      %v877 = vsel %vm829, %v875, %v876
      %878 = vrot.lane.b32.xlu0 %v832, 8
      %v879 = vpop.permute.xlu0 %878
      %880 = vrot.lane.b32.xlu0 %v835, 8
      %v881 = vpop.permute.xlu0 %880
      %882 = vrot.lane.b32.xlu0 %v838, 8
      %v883 = vpop.permute.xlu0 %882
      %884 = vrot.lane.b32.xlu0 %v841, 8
      %v885 = vpop.permute.xlu0 %884
      %886 = vrot.lane.b32.xlu0 %v844, 8
      %v887 = vpop.permute.xlu0 %886
      %888 = vrot.lane.b32.xlu0 %v847, 8
      %v889 = vpop.permute.xlu0 %888
      %890 = vrot.lane.b32.xlu0 %v850, 8
      %v891 = vpop.permute.xlu0 %890
      %892 = vrot.lane.b32.xlu0 %v853, 8
      %v893 = vpop.permute.xlu0 %892
      %894 = vrot.lane.b32.xlu0 %v856, 8
      %v895 = vpop.permute.xlu0 %894
      %896 = vrot.lane.b32.xlu0 %v859, 8
      %v897 = vpop.permute.xlu0 %896
      %898 = vrot.lane.b32.xlu0 %v862, 8
      %v899 = vpop.permute.xlu0 %898
      %900 = vrot.lane.b32.xlu0 %v865, 8
      %v901 = vpop.permute.xlu0 %900
      %902 = vrot.lane.b32.xlu0 %v868, 8
      %v903 = vpop.permute.xlu0 %902
      %904 = vrot.lane.b32.xlu0 %v871, 8
      %v905 = vpop.permute.xlu0 %904
      %906 = vrot.lane.b32.xlu0 %v874, 8
      %v907 = vpop.permute.xlu0 %906
      %908 = vrot.lane.b32.xlu0 %v877, 8
      %v909 = vpop.permute.xlu0 %908
      %v942 = vunpack.c.l.b16 %v296
      %v943 = vunpack.c.l.b16 %v297
      %v944 = vunpack.c.l.b16 %v298
      %v945 = vunpack.c.l.b16 %v299
      %v946 = vunpack.c.l.b16 %v300
      %v947 = vunpack.c.l.b16 %v301
      %v948 = vunpack.c.l.b16 %v302
      %v949 = vunpack.c.l.b16 %v303
      %v950 = vunpack.c.l.b16 %v304
      %v951 = vunpack.c.l.b16 %v305
      %v952 = vunpack.c.l.b16 %v306
      %v953 = vunpack.c.l.b16 %v307
      %v954 = vunpack.c.l.b16 %v308
      %v955 = vunpack.c.l.b16 %v309
      %v956 = vunpack.c.l.b16 %v310
      %v957 = vunpack.c.l.b16 %v311
      %v958 = vunpack.c.l.b16 %v312
      %v959 = vunpack.c.l.b16 %v313
      %v960 = vunpack.c.l.b16 %v314
      %v961 = vunpack.c.l.b16 %v315
      %v962 = vunpack.c.l.b16 %v316
      %v963 = vunpack.c.l.b16 %v317
      %v964 = vunpack.c.l.b16 %v318
      %v965 = vunpack.c.l.b16 %v319
      %v966 = vunpack.c.l.b16 %v320
      %v967 = vunpack.c.l.b16 %v321
      %v968 = vunpack.c.l.b16 %v322
      %v969 = vunpack.c.l.b16 %v323
      %v970 = vunpack.c.l.b16 %v324
      %v971 = vunpack.c.l.b16 %v325
      %v972 = vunpack.c.l.b16 %v326
      %v973 = vunpack.c.l.b16 %v327
      %v974 = vpack.c.b16 %v943, %v942
      %v975 = vpack.c.b16 %v945, %v944
      %v976 = vpack.c.b16 %v947, %v946
      %v977 = vpack.c.b16 %v949, %v948
      %v978 = vpack.c.b16 %v951, %v950
      %v979 = vpack.c.b16 %v953, %v952
      %v980 = vpack.c.b16 %v955, %v954
      %v981 = vpack.c.b16 %v957, %v956
      %v982 = vpack.c.b16 %v959, %v958
      %v983 = vpack.c.b16 %v961, %v960
      %v984 = vpack.c.b16 %v963, %v962
      %v985 = vpack.c.b16 %v965, %v964
      %v986 = vpack.c.b16 %v967, %v966
      %v987 = vpack.c.b16 %v969, %v968
      %v988 = vpack.c.b16 %v971, %v970
      %v989 = vpack.c.b16 %v973, %v972
      %990 = vrot.lane.b32.xlu0 %v974, 12
      %v991 = vpop.permute.xlu0 %990
      %992 = vrot.lane.b32.xlu0 %v975, 12
      %v993 = vpop.permute.xlu0 %992
      %994 = vrot.lane.b32.xlu0 %v976, 12
      %v995 = vpop.permute.xlu0 %994
      %996 = vrot.lane.b32.xlu0 %v977, 12
      %v997 = vpop.permute.xlu0 %996
      %998 = vrot.lane.b32.xlu0 %v978, 12
      %v999 = vpop.permute.xlu0 %998
      %1000 = vrot.lane.b32.xlu0 %v979, 12
      %v1001 = vpop.permute.xlu0 %1000
      %1002 = vrot.lane.b32.xlu0 %v980, 12
      %v1003 = vpop.permute.xlu0 %1002
      %1004 = vrot.lane.b32.xlu0 %v981, 12
      %v1005 = vpop.permute.xlu0 %1004
      %1006 = vrot.lane.b32.xlu0 %v982, 12
      %v1007 = vpop.permute.xlu0 %1006
      %1008 = vrot.lane.b32.xlu0 %v983, 12
      %v1009 = vpop.permute.xlu0 %1008
      %1010 = vrot.lane.b32.xlu0 %v984, 12
      %v1011 = vpop.permute.xlu0 %1010
      %1012 = vrot.lane.b32.xlu0 %v985, 12
      %v1013 = vpop.permute.xlu0 %1012
      %1014 = vrot.lane.b32.xlu0 %v986, 12
      %v1015 = vpop.permute.xlu0 %1014
      %1016 = vrot.lane.b32.xlu0 %v987, 12
      %v1017 = vpop.permute.xlu0 %1016
      %1018 = vrot.lane.b32.xlu0 %v988, 12
      %v1019 = vpop.permute.xlu0 %1018
      %1020 = vrot.lane.b32.xlu0 %v989, 12
      %v1021 = vpop.permute.xlu0 %1020
      %v1038 = vunpack.c.l.b16 %v328
      %v1039 = vunpack.c.l.b16 %v329
      %v1040 = vunpack.c.l.b16 %v330
      %v1041 = vunpack.c.l.b16 %v331
      %v1042 = vunpack.c.l.b16 %v332
      %v1043 = vunpack.c.l.b16 %v333
      %v1044 = vunpack.c.l.b16 %v334
      %v1045 = vunpack.c.l.b16 %v335
      %v1046 = vunpack.c.l.b16 %v336
      %v1047 = vunpack.c.l.b16 %v337
      %v1048 = vunpack.c.l.b16 %v338
      %v1049 = vunpack.c.l.b16 %v339
      %v1050 = vunpack.c.l.b16 %v340
      %v1051 = vunpack.c.l.b16 %v341
      %v1052 = vunpack.c.l.b16 %v342
      %v1053 = vunpack.c.l.b16 %v343
      %v1054 = vpack.c.b16 %v1038, %v1038
      %v1055 = vpack.c.b16 %v1039, %v1039
      %v1056 = vpack.c.b16 %v1040, %v1040
      %v1057 = vpack.c.b16 %v1041, %v1041
      %v1058 = vpack.c.b16 %v1042, %v1042
      %v1059 = vpack.c.b16 %v1043, %v1043
      %v1060 = vpack.c.b16 %v1044, %v1044
      %v1061 = vpack.c.b16 %v1045, %v1045
      %v1062 = vpack.c.b16 %v1046, %v1046
      %v1063 = vpack.c.b16 %v1047, %v1047
      %v1064 = vpack.c.b16 %v1048, %v1048
      %v1065 = vpack.c.b16 %v1049, %v1049
      %v1066 = vpack.c.b16 %v1050, %v1050
      %v1067 = vpack.c.b16 %v1051, %v1051
      %v1068 = vpack.c.b16 %v1052, %v1052
      %v1069 = vpack.c.b16 %v1053, %v1053
      %v1071 = vshrl.u32 %v974, 16
      %v1073 = vshll.u32 %v974, 16
      %v1075 = vrot.slane %v1073, 1
      %v1076 = vor.u32 %v1071, %v1075
      %v1078 = vshll.u32 %v1054, 16
      %v1080 = vrot.slane %v1078, 1
      %v1081 = vsel %vm556, %v1076, %v1080
      %v1083 = vshrl.u32 %v975, 16
      %v1085 = vshll.u32 %v975, 16
      %v1087 = vrot.slane %v1085, 1
      %v1088 = vor.u32 %v1083, %v1087
      %v1090 = vshll.u32 %v1055, 16
      %v1092 = vrot.slane %v1090, 1
      %v1093 = vsel %vm556, %v1088, %v1092
      %v1095 = vshrl.u32 %v976, 16
      %v1097 = vshll.u32 %v976, 16
      %v1099 = vrot.slane %v1097, 1
      %v1100 = vor.u32 %v1095, %v1099
      %v1102 = vshll.u32 %v1056, 16
      %v1104 = vrot.slane %v1102, 1
      %v1105 = vsel %vm556, %v1100, %v1104
      %v1107 = vshrl.u32 %v977, 16
      %v1109 = vshll.u32 %v977, 16
      %v1111 = vrot.slane %v1109, 1
      %v1112 = vor.u32 %v1107, %v1111
      %v1114 = vshll.u32 %v1057, 16
      %v1116 = vrot.slane %v1114, 1
      %v1117 = vsel %vm556, %v1112, %v1116
      %v1119 = vshrl.u32 %v978, 16
      %v1121 = vshll.u32 %v978, 16
      %v1123 = vrot.slane %v1121, 1
      %v1124 = vor.u32 %v1119, %v1123
      %v1126 = vshll.u32 %v1058, 16
      %v1128 = vrot.slane %v1126, 1
      %v1129 = vsel %vm556, %v1124, %v1128
      %v1131 = vshrl.u32 %v979, 16
      %v1133 = vshll.u32 %v979, 16
      %v1135 = vrot.slane %v1133, 1
      %v1136 = vor.u32 %v1131, %v1135
      %v1138 = vshll.u32 %v1059, 16
      %v1140 = vrot.slane %v1138, 1
      %v1141 = vsel %vm556, %v1136, %v1140
      %v1143 = vshrl.u32 %v980, 16
      %v1145 = vshll.u32 %v980, 16
      %v1147 = vrot.slane %v1145, 1
      %v1148 = vor.u32 %v1143, %v1147
      %v1150 = vshll.u32 %v1060, 16
      %v1152 = vrot.slane %v1150, 1
      %v1153 = vsel %vm556, %v1148, %v1152
      %v1155 = vshrl.u32 %v981, 16
      %v1157 = vshll.u32 %v981, 16
      %v1159 = vrot.slane %v1157, 1
      %v1160 = vor.u32 %v1155, %v1159
      %v1162 = vshll.u32 %v1061, 16
      %v1164 = vrot.slane %v1162, 1
      %v1165 = vsel %vm556, %v1160, %v1164
      %v1167 = vshrl.u32 %v982, 16
      %v1169 = vshll.u32 %v982, 16
      %v1171 = vrot.slane %v1169, 1
      %v1172 = vor.u32 %v1167, %v1171
      %v1174 = vshll.u32 %v1062, 16
      %v1176 = vrot.slane %v1174, 1
      %v1177 = vsel %vm556, %v1172, %v1176
      %v1179 = vshrl.u32 %v983, 16
      %v1181 = vshll.u32 %v983, 16
      %v1183 = vrot.slane %v1181, 1
      %v1184 = vor.u32 %v1179, %v1183
      %v1186 = vshll.u32 %v1063, 16
      %v1188 = vrot.slane %v1186, 1
      %v1189 = vsel %vm556, %v1184, %v1188
      %v1191 = vshrl.u32 %v984, 16
      %v1193 = vshll.u32 %v984, 16
      %v1195 = vrot.slane %v1193, 1
      %v1196 = vor.u32 %v1191, %v1195
      %v1198 = vshll.u32 %v1064, 16
      %v1200 = vrot.slane %v1198, 1
      %v1201 = vsel %vm556, %v1196, %v1200
      %v1203 = vshrl.u32 %v985, 16
      %v1205 = vshll.u32 %v985, 16
      %v1207 = vrot.slane %v1205, 1
      %v1208 = vor.u32 %v1203, %v1207
      %v1210 = vshll.u32 %v1065, 16
      %v1212 = vrot.slane %v1210, 1
      %v1213 = vsel %vm556, %v1208, %v1212
      %v1215 = vshrl.u32 %v986, 16
      %v1217 = vshll.u32 %v986, 16
      %v1219 = vrot.slane %v1217, 1
      %v1220 = vor.u32 %v1215, %v1219
      %v1222 = vshll.u32 %v1066, 16
      %v1224 = vrot.slane %v1222, 1
      %v1225 = vsel %vm556, %v1220, %v1224
      %v1227 = vshrl.u32 %v987, 16
      %v1229 = vshll.u32 %v987, 16
      %v1231 = vrot.slane %v1229, 1
      %v1232 = vor.u32 %v1227, %v1231
      %v1234 = vshll.u32 %v1067, 16
      %v1236 = vrot.slane %v1234, 1
      %v1237 = vsel %vm556, %v1232, %v1236
      %v1239 = vshrl.u32 %v988, 16
      %v1241 = vshll.u32 %v988, 16
      %v1243 = vrot.slane %v1241, 1
      %v1244 = vor.u32 %v1239, %v1243
      %v1246 = vshll.u32 %v1068, 16
      %v1248 = vrot.slane %v1246, 1
      %v1249 = vsel %vm556, %v1244, %v1248
      %v1251 = vshrl.u32 %v989, 16
      %v1253 = vshll.u32 %v989, 16
      %v1255 = vrot.slane %v1253, 1
      %v1256 = vor.u32 %v1251, %v1255
      %v1258 = vshll.u32 %v1069, 16
      %v1260 = vrot.slane %v1258, 1
      %v1261 = vsel %vm556, %v1256, %v1260
      %1262 = vrot.lane.b32.xlu0 %v1081, 16
      %v1263 = vpop.permute.xlu0 %1262
      %1264 = vrot.lane.b32.xlu0 %v1093, 16
      %v1265 = vpop.permute.xlu0 %1264
      %1266 = vrot.lane.b32.xlu0 %v1105, 16
      %v1267 = vpop.permute.xlu0 %1266
      %1268 = vrot.lane.b32.xlu0 %v1117, 16
      %v1269 = vpop.permute.xlu0 %1268
      %1270 = vrot.lane.b32.xlu0 %v1129, 16
      %v1271 = vpop.permute.xlu0 %1270
      %1272 = vrot.lane.b32.xlu0 %v1141, 16
      %v1273 = vpop.permute.xlu0 %1272
      %1274 = vrot.lane.b32.xlu0 %v1153, 16
      %v1275 = vpop.permute.xlu0 %1274
      %1276 = vrot.lane.b32.xlu0 %v1165, 16
      %v1277 = vpop.permute.xlu0 %1276
      %1278 = vrot.lane.b32.xlu0 %v1177, 16
      %v1279 = vpop.permute.xlu0 %1278
      %1280 = vrot.lane.b32.xlu0 %v1189, 16
      %v1281 = vpop.permute.xlu0 %1280
      %1282 = vrot.lane.b32.xlu0 %v1201, 16
      %v1283 = vpop.permute.xlu0 %1282
      %1284 = vrot.lane.b32.xlu0 %v1213, 16
      %v1285 = vpop.permute.xlu0 %1284
      %1286 = vrot.lane.b32.xlu0 %v1225, 16
      %v1287 = vpop.permute.xlu0 %1286
      %1288 = vrot.lane.b32.xlu0 %v1237, 16
      %v1289 = vpop.permute.xlu0 %1288
      %1290 = vrot.lane.b32.xlu0 %v1249, 16
      %v1291 = vpop.permute.xlu0 %1290
      %1292 = vrot.lane.b32.xlu0 %v1261, 16
      %v1293 = vpop.permute.xlu0 %1292
      %v1310 = vunpack.c.l.b16 %v344
      %v1311 = vunpack.c.l.b16 %v345
      %v1312 = vunpack.c.l.b16 %v346
      %v1313 = vunpack.c.l.b16 %v347
      %v1314 = vunpack.c.l.b16 %v348
      %v1315 = vunpack.c.l.b16 %v349
      %v1316 = vunpack.c.l.b16 %v350
      %v1317 = vunpack.c.l.b16 %v351
      %v1318 = vunpack.c.l.b16 %v352
      %v1319 = vunpack.c.l.b16 %v353
      %v1320 = vunpack.c.l.b16 %v354
      %v1321 = vunpack.c.l.b16 %v355
      %v1322 = vunpack.c.l.b16 %v356
      %v1323 = vunpack.c.l.b16 %v357
      %v1324 = vunpack.c.l.b16 %v358
      %v1325 = vunpack.c.l.b16 %v359
      %v1326 = vpack.c.b16 %v943, %v1310
      %v1327 = vpack.c.b16 %v945, %v1311
      %v1328 = vpack.c.b16 %v947, %v1312
      %v1329 = vpack.c.b16 %v949, %v1313
      %v1330 = vpack.c.b16 %v951, %v1314
      %v1331 = vpack.c.b16 %v953, %v1315
      %v1332 = vpack.c.b16 %v955, %v1316
      %v1333 = vpack.c.b16 %v957, %v1317
      %v1334 = vpack.c.b16 %v959, %v1318
      %v1335 = vpack.c.b16 %v961, %v1319
      %v1336 = vpack.c.b16 %v963, %v1320
      %v1337 = vpack.c.b16 %v965, %v1321
      %v1338 = vpack.c.b16 %v967, %v1322
      %v1339 = vpack.c.b16 %v969, %v1323
      %v1340 = vpack.c.b16 %v971, %v1324
      %v1341 = vpack.c.b16 %v973, %v1325
      %v1342 = vrot.slane %v1326, 1
      %v1343 = vrot.slane %v1054, 1
      %v1344 = vsel %vm829, %v1342, %v1343
      %v1345 = vrot.slane %v1327, 1
      %v1346 = vrot.slane %v1055, 1
      %v1347 = vsel %vm829, %v1345, %v1346
      %v1348 = vrot.slane %v1328, 1
      %v1349 = vrot.slane %v1056, 1
      %v1350 = vsel %vm829, %v1348, %v1349
      %v1351 = vrot.slane %v1329, 1
      %v1352 = vrot.slane %v1057, 1
      %v1353 = vsel %vm829, %v1351, %v1352
      %v1354 = vrot.slane %v1330, 1
      %v1355 = vrot.slane %v1058, 1
      %v1356 = vsel %vm829, %v1354, %v1355
      %v1357 = vrot.slane %v1331, 1
      %v1358 = vrot.slane %v1059, 1
      %v1359 = vsel %vm829, %v1357, %v1358
      %v1360 = vrot.slane %v1332, 1
      %v1361 = vrot.slane %v1060, 1
      %v1362 = vsel %vm829, %v1360, %v1361
      %v1363 = vrot.slane %v1333, 1
      %v1364 = vrot.slane %v1061, 1
      %v1365 = vsel %vm829, %v1363, %v1364
      %v1366 = vrot.slane %v1334, 1
      %v1367 = vrot.slane %v1062, 1
      %v1368 = vsel %vm829, %v1366, %v1367
      %v1369 = vrot.slane %v1335, 1
      %v1370 = vrot.slane %v1063, 1
      %v1371 = vsel %vm829, %v1369, %v1370
      %v1372 = vrot.slane %v1336, 1
      %v1373 = vrot.slane %v1064, 1
      %v1374 = vsel %vm829, %v1372, %v1373
      %v1375 = vrot.slane %v1337, 1
      %v1376 = vrot.slane %v1065, 1
      %v1377 = vsel %vm829, %v1375, %v1376
      %v1378 = vrot.slane %v1338, 1
      %v1379 = vrot.slane %v1066, 1
      %v1380 = vsel %vm829, %v1378, %v1379
      %v1381 = vrot.slane %v1339, 1
      %v1382 = vrot.slane %v1067, 1
      %v1383 = vsel %vm829, %v1381, %v1382
      %v1384 = vrot.slane %v1340, 1
      %v1385 = vrot.slane %v1068, 1
      %v1386 = vsel %vm829, %v1384, %v1385
      %v1387 = vrot.slane %v1341, 1
      %v1388 = vrot.slane %v1069, 1
      %v1389 = vsel %vm829, %v1387, %v1388
      %1390 = vrot.lane.b32.xlu0 %v1344, 20
      %v1391 = vpop.permute.xlu0 %1390
      %1392 = vrot.lane.b32.xlu0 %v1347, 20
      %v1393 = vpop.permute.xlu0 %1392
      %1394 = vrot.lane.b32.xlu0 %v1350, 20
      %v1395 = vpop.permute.xlu0 %1394
      %1396 = vrot.lane.b32.xlu0 %v1353, 20
      %v1397 = vpop.permute.xlu0 %1396
      %1398 = vrot.lane.b32.xlu0 %v1356, 20
      %v1399 = vpop.permute.xlu0 %1398
      %1400 = vrot.lane.b32.xlu0 %v1359, 20
      %v1401 = vpop.permute.xlu0 %1400
      %1402 = vrot.lane.b32.xlu0 %v1362, 20
      %v1403 = vpop.permute.xlu0 %1402
      %1404 = vrot.lane.b32.xlu0 %v1365, 20
      %v1405 = vpop.permute.xlu0 %1404
      %1406 = vrot.lane.b32.xlu0 %v1368, 20
      %v1407 = vpop.permute.xlu0 %1406
      %1408 = vrot.lane.b32.xlu0 %v1371, 20
      %v1409 = vpop.permute.xlu0 %1408
      %1410 = vrot.lane.b32.xlu0 %v1374, 20
      %v1411 = vpop.permute.xlu0 %1410
      %1412 = vrot.lane.b32.xlu0 %v1377, 20
      %v1413 = vpop.permute.xlu0 %1412
      %1414 = vrot.lane.b32.xlu0 %v1380, 20
      %v1415 = vpop.permute.xlu0 %1414
      %1416 = vrot.lane.b32.xlu0 %v1383, 20
      %v1417 = vpop.permute.xlu0 %1416
      %1418 = vrot.lane.b32.xlu0 %v1386, 20
      %v1419 = vpop.permute.xlu0 %1418
      %1420 = vrot.lane.b32.xlu0 %v1389, 20
      %v1421 = vpop.permute.xlu0 %1420
      %v1454 = vunpack.c.l.b16 %v364
      %v1455 = vunpack.c.l.b16 %v365
      %v1456 = vunpack.c.l.b16 %v366
      %v1457 = vunpack.c.l.b16 %v367
      %v1458 = vunpack.c.l.b16 %v368
      %v1459 = vunpack.c.l.b16 %v369
      %v1460 = vunpack.c.l.b16 %v370
      %v1461 = vunpack.c.l.b16 %v371
      %v1462 = vunpack.c.l.b16 %v372
      %v1463 = vunpack.c.l.b16 %v373
      %v1464 = vunpack.c.l.b16 %v374
      %v1465 = vunpack.c.l.b16 %v375
      %v1466 = vunpack.c.l.b16 %v376
      %v1467 = vunpack.c.l.b16 %v377
      %v1468 = vunpack.c.l.b16 %v378
      %v1469 = vunpack.c.l.b16 %v379
      %v1470 = vunpack.c.l.b16 %v380
      %v1471 = vunpack.c.l.b16 %v381
      %v1472 = vunpack.c.l.b16 %v382
      %v1473 = vunpack.c.l.b16 %v383
      %v1474 = vunpack.c.l.b16 %v384
      %v1475 = vunpack.c.l.b16 %v385
      %v1476 = vunpack.c.l.b16 %v386
      %v1477 = vunpack.c.l.b16 %v387
      %v1478 = vunpack.c.l.b16 %v388
      %v1479 = vunpack.c.l.b16 %v389
      %v1480 = vunpack.c.l.b16 %v390
      %v1481 = vunpack.c.l.b16 %v391
      %v1482 = vunpack.c.l.b16 %v392
      %v1483 = vunpack.c.l.b16 %v393
      %v1484 = vunpack.c.l.b16 %v394
      %v1485 = vunpack.c.l.b16 %v395
      %v1486 = vpack.c.b16 %v1455, %v1454
      %v1487 = vpack.c.b16 %v1457, %v1456
      %v1488 = vpack.c.b16 %v1459, %v1458
      %v1489 = vpack.c.b16 %v1461, %v1460
      %v1490 = vpack.c.b16 %v1463, %v1462
      %v1491 = vpack.c.b16 %v1465, %v1464
      %v1492 = vpack.c.b16 %v1467, %v1466
      %v1493 = vpack.c.b16 %v1469, %v1468
      %v1494 = vpack.c.b16 %v1471, %v1470
      %v1495 = vpack.c.b16 %v1473, %v1472
      %v1496 = vpack.c.b16 %v1475, %v1474
      %v1497 = vpack.c.b16 %v1477, %v1476
      %v1498 = vpack.c.b16 %v1479, %v1478
      %v1499 = vpack.c.b16 %v1481, %v1480
      %v1500 = vpack.c.b16 %v1483, %v1482
      %v1501 = vpack.c.b16 %v1485, %v1484
      %1502 = vrot.lane.b32.xlu0 %v1486, 24
      %v1503 = vpop.permute.xlu0 %1502
      %1504 = vrot.lane.b32.xlu0 %v1487, 24
      %v1505 = vpop.permute.xlu0 %1504
      %1506 = vrot.lane.b32.xlu0 %v1488, 24
      %v1507 = vpop.permute.xlu0 %1506
      %1508 = vrot.lane.b32.xlu0 %v1489, 24
      %v1509 = vpop.permute.xlu0 %1508
      %1510 = vrot.lane.b32.xlu0 %v1490, 24
      %v1511 = vpop.permute.xlu0 %1510
      %1512 = vrot.lane.b32.xlu0 %v1491, 24
      %v1513 = vpop.permute.xlu0 %1512
      %1514 = vrot.lane.b32.xlu0 %v1492, 24
      %v1515 = vpop.permute.xlu0 %1514
      %1516 = vrot.lane.b32.xlu0 %v1493, 24
      %v1517 = vpop.permute.xlu0 %1516
      %1518 = vrot.lane.b32.xlu0 %v1494, 24
      %v1519 = vpop.permute.xlu0 %1518
      %1520 = vrot.lane.b32.xlu0 %v1495, 24
      %v1521 = vpop.permute.xlu0 %1520
      %1522 = vrot.lane.b32.xlu0 %v1496, 24
      %v1523 = vpop.permute.xlu0 %1522
      %1524 = vrot.lane.b32.xlu0 %v1497, 24
      %v1525 = vpop.permute.xlu0 %1524
      %1526 = vrot.lane.b32.xlu0 %v1498, 24
      %v1527 = vpop.permute.xlu0 %1526
      %1528 = vrot.lane.b32.xlu0 %v1499, 24
      %v1529 = vpop.permute.xlu0 %1528
      %1530 = vrot.lane.b32.xlu0 %v1500, 24
      %v1531 = vpop.permute.xlu0 %1530
      %1532 = vrot.lane.b32.xlu0 %v1501, 24
      %v1533 = vpop.permute.xlu0 %1532
      %v1550 = vunpack.c.l.b16 %v396
      %v1551 = vunpack.c.l.b16 %v397
      %v1552 = vunpack.c.l.b16 %v398
      %v1553 = vunpack.c.l.b16 %v399
      %v1554 = vunpack.c.l.b16 %v400
      %v1555 = vunpack.c.l.b16 %v401
      %v1556 = vunpack.c.l.b16 %v402
      %v1557 = vunpack.c.l.b16 %v403
      %v1558 = vunpack.c.l.b16 %v404
      %v1559 = vunpack.c.l.b16 %v405
      %v1560 = vunpack.c.l.b16 %v406
      %v1561 = vunpack.c.l.b16 %v407
      %v1562 = vunpack.c.l.b16 %v408
      %v1563 = vunpack.c.l.b16 %v409
      %v1564 = vunpack.c.l.b16 %v410
      %v1565 = vunpack.c.l.b16 %v411
      %v1566 = vpack.c.b16 %v1550, %v1550
      %v1567 = vpack.c.b16 %v1551, %v1551
      %v1568 = vpack.c.b16 %v1552, %v1552
      %v1569 = vpack.c.b16 %v1553, %v1553
      %v1570 = vpack.c.b16 %v1554, %v1554
      %v1571 = vpack.c.b16 %v1555, %v1555
      %v1572 = vpack.c.b16 %v1556, %v1556
      %v1573 = vpack.c.b16 %v1557, %v1557
      %v1574 = vpack.c.b16 %v1558, %v1558
      %v1575 = vpack.c.b16 %v1559, %v1559
      %v1576 = vpack.c.b16 %v1560, %v1560
      %v1577 = vpack.c.b16 %v1561, %v1561
      %v1578 = vpack.c.b16 %v1562, %v1562
      %v1579 = vpack.c.b16 %v1563, %v1563
      %v1580 = vpack.c.b16 %v1564, %v1564
      %v1581 = vpack.c.b16 %v1565, %v1565
      %v1583 = vshrl.u32 %v1486, 16
      %v1585 = vshll.u32 %v1486, 16
      %v1587 = vrot.slane %v1585, 1
      %v1588 = vor.u32 %v1583, %v1587
      %v1590 = vshll.u32 %v1566, 16
      %v1592 = vrot.slane %v1590, 1
      %v1593 = vsel %vm556, %v1588, %v1592
      %v1595 = vshrl.u32 %v1487, 16
      %v1597 = vshll.u32 %v1487, 16
      %v1599 = vrot.slane %v1597, 1
      %v1600 = vor.u32 %v1595, %v1599
      %v1602 = vshll.u32 %v1567, 16
      %v1604 = vrot.slane %v1602, 1
      %v1605 = vsel %vm556, %v1600, %v1604
      %v1607 = vshrl.u32 %v1488, 16
      %v1609 = vshll.u32 %v1488, 16
      %v1611 = vrot.slane %v1609, 1
      %v1612 = vor.u32 %v1607, %v1611
      %v1614 = vshll.u32 %v1568, 16
      %v1616 = vrot.slane %v1614, 1
      %v1617 = vsel %vm556, %v1612, %v1616
      %v1619 = vshrl.u32 %v1489, 16
      %v1621 = vshll.u32 %v1489, 16
      %v1623 = vrot.slane %v1621, 1
      %v1624 = vor.u32 %v1619, %v1623
      %v1626 = vshll.u32 %v1569, 16
      %v1628 = vrot.slane %v1626, 1
      %v1629 = vsel %vm556, %v1624, %v1628
      %v1631 = vshrl.u32 %v1490, 16
      %v1633 = vshll.u32 %v1490, 16
      %v1635 = vrot.slane %v1633, 1
      %v1636 = vor.u32 %v1631, %v1635
      %v1638 = vshll.u32 %v1570, 16
      %v1640 = vrot.slane %v1638, 1
      %v1641 = vsel %vm556, %v1636, %v1640
      %v1643 = vshrl.u32 %v1491, 16
      %v1645 = vshll.u32 %v1491, 16
      %v1647 = vrot.slane %v1645, 1
      %v1648 = vor.u32 %v1643, %v1647
      %v1650 = vshll.u32 %v1571, 16
      %v1652 = vrot.slane %v1650, 1
      %v1653 = vsel %vm556, %v1648, %v1652
      %v1655 = vshrl.u32 %v1492, 16
      %v1657 = vshll.u32 %v1492, 16
      %v1659 = vrot.slane %v1657, 1
      %v1660 = vor.u32 %v1655, %v1659
      %v1662 = vshll.u32 %v1572, 16
      %v1664 = vrot.slane %v1662, 1
      %v1665 = vsel %vm556, %v1660, %v1664
      %v1667 = vshrl.u32 %v1493, 16
      %v1669 = vshll.u32 %v1493, 16
      %v1671 = vrot.slane %v1669, 1
      %v1672 = vor.u32 %v1667, %v1671
      %v1674 = vshll.u32 %v1573, 16
      %v1676 = vrot.slane %v1674, 1
      %v1677 = vsel %vm556, %v1672, %v1676
      %v1679 = vshrl.u32 %v1494, 16
      %v1681 = vshll.u32 %v1494, 16
      %v1683 = vrot.slane %v1681, 1
      %v1684 = vor.u32 %v1679, %v1683
      %v1686 = vshll.u32 %v1574, 16
      %v1688 = vrot.slane %v1686, 1
      %v1689 = vsel %vm556, %v1684, %v1688
      %v1691 = vshrl.u32 %v1495, 16
      %v1693 = vshll.u32 %v1495, 16
      %v1695 = vrot.slane %v1693, 1
      %v1696 = vor.u32 %v1691, %v1695
      %v1698 = vshll.u32 %v1575, 16
      %v1700 = vrot.slane %v1698, 1
      %v1701 = vsel %vm556, %v1696, %v1700
      %v1703 = vshrl.u32 %v1496, 16
      %v1705 = vshll.u32 %v1496, 16
      %v1707 = vrot.slane %v1705, 1
      %v1708 = vor.u32 %v1703, %v1707
      %v1710 = vshll.u32 %v1576, 16
      %v1712 = vrot.slane %v1710, 1
      %v1713 = vsel %vm556, %v1708, %v1712
      %v1715 = vshrl.u32 %v1497, 16
      %v1717 = vshll.u32 %v1497, 16
      %v1719 = vrot.slane %v1717, 1
      %v1720 = vor.u32 %v1715, %v1719
      %v1722 = vshll.u32 %v1577, 16
      %v1724 = vrot.slane %v1722, 1
      %v1725 = vsel %vm556, %v1720, %v1724
      %v1727 = vshrl.u32 %v1498, 16
      %v1729 = vshll.u32 %v1498, 16
      %v1731 = vrot.slane %v1729, 1
      %v1732 = vor.u32 %v1727, %v1731
      %v1734 = vshll.u32 %v1578, 16
      %v1736 = vrot.slane %v1734, 1
      %v1737 = vsel %vm556, %v1732, %v1736
      %v1739 = vshrl.u32 %v1499, 16
      %v1741 = vshll.u32 %v1499, 16
      %v1743 = vrot.slane %v1741, 1
      %v1744 = vor.u32 %v1739, %v1743
      %v1746 = vshll.u32 %v1579, 16
      %v1748 = vrot.slane %v1746, 1
      %v1749 = vsel %vm556, %v1744, %v1748
      %v1751 = vshrl.u32 %v1500, 16
      %v1753 = vshll.u32 %v1500, 16
      %v1755 = vrot.slane %v1753, 1
      %v1756 = vor.u32 %v1751, %v1755
      %v1758 = vshll.u32 %v1580, 16
      %v1760 = vrot.slane %v1758, 1
      %v1761 = vsel %vm556, %v1756, %v1760
      %v1763 = vshrl.u32 %v1501, 16
      %v1765 = vshll.u32 %v1501, 16
      %v1767 = vrot.slane %v1765, 1
      %v1768 = vor.u32 %v1763, %v1767
      %v1770 = vshll.u32 %v1581, 16
      %v1772 = vrot.slane %v1770, 1
      %v1773 = vsel %vm556, %v1768, %v1772
      %1774 = vrot.lane.b32.xlu0 %v1593, 28
      %v1775 = vpop.permute.xlu0 %1774
      %1776 = vrot.lane.b32.xlu0 %v1605, 28
      %v1777 = vpop.permute.xlu0 %1776
      %1778 = vrot.lane.b32.xlu0 %v1617, 28
      %v1779 = vpop.permute.xlu0 %1778
      %1780 = vrot.lane.b32.xlu0 %v1629, 28
      %v1781 = vpop.permute.xlu0 %1780
      %1782 = vrot.lane.b32.xlu0 %v1641, 28
      %v1783 = vpop.permute.xlu0 %1782
      %1784 = vrot.lane.b32.xlu0 %v1653, 28
      %v1785 = vpop.permute.xlu0 %1784
      %1786 = vrot.lane.b32.xlu0 %v1665, 28
      %v1787 = vpop.permute.xlu0 %1786
      %1788 = vrot.lane.b32.xlu0 %v1677, 28
      %v1789 = vpop.permute.xlu0 %1788
      %1790 = vrot.lane.b32.xlu0 %v1689, 28
      %v1791 = vpop.permute.xlu0 %1790
      %1792 = vrot.lane.b32.xlu0 %v1701, 28
      %v1793 = vpop.permute.xlu0 %1792
      %1794 = vrot.lane.b32.xlu0 %v1713, 28
      %v1795 = vpop.permute.xlu0 %1794
      %1796 = vrot.lane.b32.xlu0 %v1725, 28
      %v1797 = vpop.permute.xlu0 %1796
      %1798 = vrot.lane.b32.xlu0 %v1737, 28
      %v1799 = vpop.permute.xlu0 %1798
      %1800 = vrot.lane.b32.xlu0 %v1749, 28
      %v1801 = vpop.permute.xlu0 %1800
      %1802 = vrot.lane.b32.xlu0 %v1761, 28
      %v1803 = vpop.permute.xlu0 %1802
      %1804 = vrot.lane.b32.xlu0 %v1773, 28
      %v1805 = vpop.permute.xlu0 %1804
      %v1822 = vunpack.c.l.b16 %v412
      %v1823 = vunpack.c.l.b16 %v413
      %v1824 = vunpack.c.l.b16 %v414
      %v1825 = vunpack.c.l.b16 %v415
      %v1826 = vunpack.c.l.b16 %v416
      %v1827 = vunpack.c.l.b16 %v417
      %v1828 = vunpack.c.l.b16 %v418
      %v1829 = vunpack.c.l.b16 %v419
      %v1830 = vunpack.c.l.b16 %v420
      %v1831 = vunpack.c.l.b16 %v421
      %v1832 = vunpack.c.l.b16 %v422
      %v1833 = vunpack.c.l.b16 %v423
      %v1834 = vunpack.c.l.b16 %v424
      %v1835 = vunpack.c.l.b16 %v425
      %v1836 = vunpack.c.l.b16 %v426
      %v1837 = vunpack.c.l.b16 %v427
      %v1838 = vpack.c.b16 %v1455, %v1822
      %v1839 = vpack.c.b16 %v1457, %v1823
      %v1840 = vpack.c.b16 %v1459, %v1824
      %v1841 = vpack.c.b16 %v1461, %v1825
      %v1842 = vpack.c.b16 %v1463, %v1826
      %v1843 = vpack.c.b16 %v1465, %v1827
      %v1844 = vpack.c.b16 %v1467, %v1828
      %v1845 = vpack.c.b16 %v1469, %v1829
      %v1846 = vpack.c.b16 %v1471, %v1830
      %v1847 = vpack.c.b16 %v1473, %v1831
      %v1848 = vpack.c.b16 %v1475, %v1832
      %v1849 = vpack.c.b16 %v1477, %v1833
      %v1850 = vpack.c.b16 %v1479, %v1834
      %v1851 = vpack.c.b16 %v1481, %v1835
      %v1852 = vpack.c.b16 %v1483, %v1836
      %v1853 = vpack.c.b16 %v1485, %v1837
      %v1854 = vrot.slane %v1838, 1
      %v1855 = vrot.slane %v1566, 1
      %v1856 = vsel %vm829, %v1854, %v1855
      %v1857 = vrot.slane %v1839, 1
      %v1858 = vrot.slane %v1567, 1
      %v1859 = vsel %vm829, %v1857, %v1858
      %v1860 = vrot.slane %v1840, 1
      %v1861 = vrot.slane %v1568, 1
      %v1862 = vsel %vm829, %v1860, %v1861
      %v1863 = vrot.slane %v1841, 1
      %v1864 = vrot.slane %v1569, 1
      %v1865 = vsel %vm829, %v1863, %v1864
      %v1866 = vrot.slane %v1842, 1
      %v1867 = vrot.slane %v1570, 1
      %v1868 = vsel %vm829, %v1866, %v1867
      %v1869 = vrot.slane %v1843, 1
      %v1870 = vrot.slane %v1571, 1
      %v1871 = vsel %vm829, %v1869, %v1870
      %v1872 = vrot.slane %v1844, 1
      %v1873 = vrot.slane %v1572, 1
      %v1874 = vsel %vm829, %v1872, %v1873
      %v1875 = vrot.slane %v1845, 1
      %v1876 = vrot.slane %v1573, 1
      %v1877 = vsel %vm829, %v1875, %v1876
      %v1878 = vrot.slane %v1846, 1
      %v1879 = vrot.slane %v1574, 1
      %v1880 = vsel %vm829, %v1878, %v1879
      %v1881 = vrot.slane %v1847, 1
      %v1882 = vrot.slane %v1575, 1
      %v1883 = vsel %vm829, %v1881, %v1882
      %v1884 = vrot.slane %v1848, 1
      %v1885 = vrot.slane %v1576, 1
      %v1886 = vsel %vm829, %v1884, %v1885
      %v1887 = vrot.slane %v1849, 1
      %v1888 = vrot.slane %v1577, 1
      %v1889 = vsel %vm829, %v1887, %v1888
      %v1890 = vrot.slane %v1850, 1
      %v1891 = vrot.slane %v1578, 1
      %v1892 = vsel %vm829, %v1890, %v1891
      %v1893 = vrot.slane %v1851, 1
      %v1894 = vrot.slane %v1579, 1
      %v1895 = vsel %vm829, %v1893, %v1894
      %v1896 = vrot.slane %v1852, 1
      %v1897 = vrot.slane %v1580, 1
      %v1898 = vsel %vm829, %v1896, %v1897
      %v1899 = vrot.slane %v1853, 1
      %v1900 = vrot.slane %v1581, 1
      %v1901 = vsel %vm829, %v1899, %v1900
      %1902 = vrot.lane.b32.xlu0 %v1856, 32
      %v1903 = vpop.permute.xlu0 %1902
      %1904 = vrot.lane.b32.xlu0 %v1859, 32
      %v1905 = vpop.permute.xlu0 %1904
      %1906 = vrot.lane.b32.xlu0 %v1862, 32
      %v1907 = vpop.permute.xlu0 %1906
      %1908 = vrot.lane.b32.xlu0 %v1865, 32
      %v1909 = vpop.permute.xlu0 %1908
      %1910 = vrot.lane.b32.xlu0 %v1868, 32
      %v1911 = vpop.permute.xlu0 %1910
      %1912 = vrot.lane.b32.xlu0 %v1871, 32
      %v1913 = vpop.permute.xlu0 %1912
      %1914 = vrot.lane.b32.xlu0 %v1874, 32
      %v1915 = vpop.permute.xlu0 %1914
      %1916 = vrot.lane.b32.xlu0 %v1877, 32
      %v1917 = vpop.permute.xlu0 %1916
      %1918 = vrot.lane.b32.xlu0 %v1880, 32
      %v1919 = vpop.permute.xlu0 %1918
      %1920 = vrot.lane.b32.xlu0 %v1883, 32
      %v1921 = vpop.permute.xlu0 %1920
      %1922 = vrot.lane.b32.xlu0 %v1886, 32
      %v1923 = vpop.permute.xlu0 %1922
      %1924 = vrot.lane.b32.xlu0 %v1889, 32
      %v1925 = vpop.permute.xlu0 %1924
      %1926 = vrot.lane.b32.xlu0 %v1892, 32
      %v1927 = vpop.permute.xlu0 %1926
      %1928 = vrot.lane.b32.xlu0 %v1895, 32
      %v1929 = vpop.permute.xlu0 %1928
      %1930 = vrot.lane.b32.xlu0 %v1898, 32
      %v1931 = vpop.permute.xlu0 %1930
      %1932 = vrot.lane.b32.xlu0 %v1901, 32
      %v1933 = vpop.permute.xlu0 %1932
      %vm1934 = vcmask 31744
      %v1936 = vsel %vm1934, %v492, %v750
      %v1938 = vsel %vm1934, %v493, %v752
      %v1940 = vsel %vm1934, %v494, %v754
      %v1942 = vsel %vm1934, %v495, %v756
      %v1944 = vsel %vm1934, %v496, %v758
      %v1946 = vsel %vm1934, %v497, %v760
      %v1948 = vsel %vm1934, %v498, %v762
      %v1950 = vsel %vm1934, %v499, %v764
      %v1952 = vsel %vm1934, %v500, %v766
      %v1954 = vsel %vm1934, %v501, %v768
      %v1956 = vsel %vm1934, %v502, %v770
      %v1958 = vsel %vm1934, %v503, %v772
      %v1960 = vsel %vm1934, %v504, %v774
      %v1962 = vsel %vm1934, %v505, %v776
      %v1964 = vsel %vm1934, %v506, %v778
      %v1966 = vsel %vm1934, %v507, %v780
      %vm1967 = vcmask 64512
      %v1969 = vsel %vm1967, %v1936, %v879
      %v1971 = vsel %vm1967, %v1938, %v881
      %v1973 = vsel %vm1967, %v1940, %v883
      %v1975 = vsel %vm1967, %v1942, %v885
      %v1977 = vsel %vm1967, %v1944, %v887
      %v1979 = vsel %vm1967, %v1946, %v889
      %v1981 = vsel %vm1967, %v1948, %v891
      %v1983 = vsel %vm1967, %v1950, %v893
      %v1985 = vsel %vm1967, %v1952, %v895
      %v1987 = vsel %vm1967, %v1954, %v897
      %v1989 = vsel %vm1967, %v1956, %v899
      %v1991 = vsel %vm1967, %v1958, %v901
      %v1993 = vsel %vm1967, %v1960, %v903
      %v1995 = vsel %vm1967, %v1962, %v905
      %v1997 = vsel %vm1967, %v1964, %v907
      %v1999 = vsel %vm1967, %v1966, %v909
      %vm2000 = vcmask 97280
      %v2002 = vsel %vm2000, %v1969, %v991
      %v2004 = vsel %vm2000, %v1971, %v993
      %v2006 = vsel %vm2000, %v1973, %v995
      %v2008 = vsel %vm2000, %v1975, %v997
      %v2010 = vsel %vm2000, %v1977, %v999
      %v2012 = vsel %vm2000, %v1979, %v1001
      %v2014 = vsel %vm2000, %v1981, %v1003
      %v2016 = vsel %vm2000, %v1983, %v1005
      %v2018 = vsel %vm2000, %v1985, %v1007
      %v2020 = vsel %vm2000, %v1987, %v1009
      %v2022 = vsel %vm2000, %v1989, %v1011
      %v2024 = vsel %vm2000, %v1991, %v1013
      %v2026 = vsel %vm2000, %v1993, %v1015
      %v2028 = vsel %vm2000, %v1995, %v1017
      %v2030 = vsel %vm2000, %v1997, %v1019
      %v2032 = vsel %vm2000, %v1999, %v1021
      %vm2033 = vcmask 130048
      %v2035 = vsel %vm2033, %v2002, %v1263
      %v2037 = vsel %vm2033, %v2004, %v1265
      %v2039 = vsel %vm2033, %v2006, %v1267
      %v2041 = vsel %vm2033, %v2008, %v1269
      %v2043 = vsel %vm2033, %v2010, %v1271
      %v2045 = vsel %vm2033, %v2012, %v1273
      %v2047 = vsel %vm2033, %v2014, %v1275
      %v2049 = vsel %vm2033, %v2016, %v1277
      %v2051 = vsel %vm2033, %v2018, %v1279
      %v2053 = vsel %vm2033, %v2020, %v1281
      %v2055 = vsel %vm2033, %v2022, %v1283
      %v2057 = vsel %vm2033, %v2024, %v1285
      %v2059 = vsel %vm2033, %v2026, %v1287
      %v2061 = vsel %vm2033, %v2028, %v1289
      %v2063 = vsel %vm2033, %v2030, %v1291
      %v2065 = vsel %vm2033, %v2032, %v1293
      %vm2066 = vcmask 162816
      %v2068 = vsel %vm2066, %v2035, %v1391
      %v2070 = vsel %vm2066, %v2037, %v1393
      %v2072 = vsel %vm2066, %v2039, %v1395
      %v2074 = vsel %vm2066, %v2041, %v1397
      %v2076 = vsel %vm2066, %v2043, %v1399
      %v2078 = vsel %vm2066, %v2045, %v1401
      %v2080 = vsel %vm2066, %v2047, %v1403
      %v2082 = vsel %vm2066, %v2049, %v1405
      %v2084 = vsel %vm2066, %v2051, %v1407
      %v2086 = vsel %vm2066, %v2053, %v1409
      %v2088 = vsel %vm2066, %v2055, %v1411
      %v2090 = vsel %vm2066, %v2057, %v1413
      %v2092 = vsel %vm2066, %v2059, %v1415
      %v2094 = vsel %vm2066, %v2061, %v1417
      %v2096 = vsel %vm2066, %v2063, %v1419
      %v2098 = vsel %vm2066, %v2065, %v1421
      %vm2099 = vcmask 195584
      %v2101 = vsel %vm2099, %v2068, %v1503
      %v2103 = vsel %vm2099, %v2070, %v1505
      %v2105 = vsel %vm2099, %v2072, %v1507
      %v2107 = vsel %vm2099, %v2074, %v1509
      %v2109 = vsel %vm2099, %v2076, %v1511
      %v2111 = vsel %vm2099, %v2078, %v1513
      %v2113 = vsel %vm2099, %v2080, %v1515
      %v2115 = vsel %vm2099, %v2082, %v1517
      %v2117 = vsel %vm2099, %v2084, %v1519
      %v2119 = vsel %vm2099, %v2086, %v1521
      %v2121 = vsel %vm2099, %v2088, %v1523
      %v2123 = vsel %vm2099, %v2090, %v1525
      %v2125 = vsel %vm2099, %v2092, %v1527
      %v2127 = vsel %vm2099, %v2094, %v1529
      %v2129 = vsel %vm2099, %v2096, %v1531
      %v2131 = vsel %vm2099, %v2098, %v1533
      %vm2132 = vcmask 228352
      %v2134 = vsel %vm2132, %v2101, %v1775
      %v2136 = vsel %vm2132, %v2103, %v1777
      %v2138 = vsel %vm2132, %v2105, %v1779
      %v2140 = vsel %vm2132, %v2107, %v1781
      %v2142 = vsel %vm2132, %v2109, %v1783
      %v2144 = vsel %vm2132, %v2111, %v1785
      %v2146 = vsel %vm2132, %v2113, %v1787
      %v2148 = vsel %vm2132, %v2115, %v1789
      %v2150 = vsel %vm2132, %v2117, %v1791
      %v2152 = vsel %vm2132, %v2119, %v1793
      %v2154 = vsel %vm2132, %v2121, %v1795
      %v2156 = vsel %vm2132, %v2123, %v1797
      %v2158 = vsel %vm2132, %v2125, %v1799
      %v2160 = vsel %vm2132, %v2127, %v1801
      %v2162 = vsel %vm2132, %v2129, %v1803
      %v2164 = vsel %vm2132, %v2131, %v1805
      %vm2165 = vcmask 261120
      %v2167 = vsel %vm2165, %v2134, %v1903
      %v2169 = vsel %vm2165, %v2136, %v1905
      %v2171 = vsel %vm2165, %v2138, %v1907
      %v2173 = vsel %vm2165, %v2140, %v1909
      %v2175 = vsel %vm2165, %v2142, %v1911
      %v2177 = vsel %vm2165, %v2144, %v1913
      %v2179 = vsel %vm2165, %v2146, %v1915
      %v2181 = vsel %vm2165, %v2148, %v1917
      %v2183 = vsel %vm2165, %v2150, %v1919
      %v2185 = vsel %vm2165, %v2152, %v1921
      %v2187 = vsel %vm2165, %v2154, %v1923
      %v2189 = vsel %vm2165, %v2156, %v1925
      %v2191 = vsel %vm2165, %v2158, %v1927
      %v2193 = vsel %vm2165, %v2160, %v1929
      %v2195 = vsel %vm2165, %v2162, %v1931
      %v2197 = vsel %vm2165, %v2164, %v1933
      %v2198 = vld [vmem:[%s1] sm:$0xf]
      %v2199 = vld [vmem:[%s1 + $0x4] sm:$0xf]
      %v2200 = vld [vmem:[%s1 + $0x8] sm:$0xf]
      %v2201 = vld [vmem:[%s1 + $0xc] sm:$0xf]
      %v2202 = vld [vmem:[%s1 + $0x10] sm:$0x3]
      %v2208 = vunpack.c.l.b16 %v2198
      %v2209 = vunpack.c.l.b16 %v2199
      %v2210 = vunpack.c.l.b16 %v2200
      %v2211 = vunpack.c.l.b16 %v2201
      %v2212 = vunpack.c.l.b16 %v2202
      %v2213 = vpack.c.b16 %v2209, %v2208
      %v2214 = vpack.c.b16 %v2211, %v2210
      %v2215 = vpack.c.b16 %v2212, %v2212
      %vm2218 = vcmask 293888
      %v2219 = vsel %vm2218, %v2167, 0
      %v2221 = vsel %vm2218, %v2169, 0
      %v2223 = vsel %vm2218, %v2171, 0
      %v2225 = vsel %vm2218, %v2173, 0
      %v2227 = vsel %vm2218, %v2175, 0
      %v2229 = vsel %vm2218, %v2177, 0
      %v2231 = vsel %vm2218, %v2179, 0
      %v2233 = vsel %vm2218, %v2181, 0
      %v2235 = vsel %vm2218, %v2183, 0
      %v2237 = vsel %vm2218, %v2185, 0
      %v2239 = vsel %vm2218, %v2187, 0
      %v2241 = vsel %vm2218, %v2189, 0
      %v2243 = vsel %vm2218, %v2191, 0
      %v2245 = vsel %vm2218, %v2193, 0
      %v2247 = vsel %vm2218, %v2195, 0
      %v2249 = vsel %vm2218, %v2197, 0
      %vm2251 = vcmask 1041408
      %v2253 = vsel %vm2251, %v2215, 0
      %2255 = vmatprep.subr.bf16.mxu0 0
      %2256 = vmatpush1.bf16.msra.mxu0 0
      %2257 = vmatprep.subr.bf16.mxu0 0
      %2258 = vmatpush1.bf16.msra.mxu0 0
      %2259 = vmatprep.subr.bf16.mxu0 0
      %2260 = vmatpush1.bf16.msra.mxu0 0
      %2261 = vmatprep.subr.bf16.mxu0 0
      %2262 = vmatpush1.bf16.msra.mxu0 0
      %2263 = vmatprep.subr.bf16.mxu0 0
      %2264 = vmatpush1.bf16.msra.mxu0 0
      %2265 = vmatprep.subr.bf16.mxu0 0
      %2266 = vmatpush1.bf16.msra.mxu0 %v2253
      %2267 = vmatprep.subr.bf16.mxu0 0
      %2268 = vmatpush1.bf16.msra.mxu0 %v2214
      %2269 = vmatprep.subr.bf16.mxu0 0
      %2270 = vmatpush1.bf16.msra.mxu0 %v2213
      %2271 = vmatprep.subr.bf16.mxu0 0
      %2272 = vmatpush2.bf16.msra.mxu0 0
      %2273 = vmatprep.subr.bf16.mxu0 0
      %2274 = vmatpush2.bf16.msra.mxu0 0
      %2275 = vmatprep.subr.bf16.mxu0 0
      %2276 = vmatpush2.bf16.msra.mxu0 0
      %2277 = vmatprep.subr.bf16.mxu0 0
      %2278 = vmatpush2.bf16.msra.mxu0 0
      %2279 = vmatprep.subr.bf16.mxu0 0
      %2280 = vmatpush2.bf16.msra.mxu0 0
      %2281 = vmatprep.subr.bf16.mxu0 0
      %2282 = vmatpush2.bf16.msra.mxu0 0
      %2283 = vmatprep.subr.bf16.mxu0 0
      %2284 = vmatpush2.bf16.msra.mxu0 0
      %2285 = vmatprep.subr.bf16.mxu0 0
      %2286 = vmatpush2.bf16.msra.mxu0 0
      %2287 = vmatprep.mubr.bf16.mxu0 0
      %2288 = vmatmul.mubr.bf16.gmra.mxu0 %v2219
      %v2289 = vpop.f32.mrf.mxu0
      %v2290 = vadd.f32 0.0, %v2289
      %v2291 = vpop.f32.mrf.mxu0
      %v2292 = vpop.f32.mrf.mxu0
      %v2293 = vadd.f32 0.0, %v2292
      %v2294 = vpop.f32.mrf.mxu0
      %2295 = vmatprep.mubr.bf16.mxu0 0
      %2296 = vmatmul.mubr.bf16.gmra.mxu0 %v2221
      %v2297 = vpop.f32.mrf.mxu0
      %v2298 = vadd.f32 0.0, %v2297
      %v2299 = vpop.f32.mrf.mxu0
      %v2300 = vpop.f32.mrf.mxu0
      %v2301 = vadd.f32 0.0, %v2300
      %v2302 = vpop.f32.mrf.mxu0
      %2303 = vmatprep.mubr.bf16.mxu0 0
      %2304 = vmatmul.mubr.bf16.gmra.mxu0 %v2223
      %v2305 = vpop.f32.mrf.mxu0
      %v2306 = vadd.f32 0.0, %v2305
      %v2307 = vpop.f32.mrf.mxu0
      %v2308 = vpop.f32.mrf.mxu0
      %v2309 = vadd.f32 0.0, %v2308
      %v2310 = vpop.f32.mrf.mxu0
      %2311 = vmatprep.mubr.bf16.mxu0 0
      %2312 = vmatmul.mubr.bf16.gmra.mxu0 %v2225
      %v2313 = vpop.f32.mrf.mxu0
      %v2314 = vadd.f32 0.0, %v2313
      %v2315 = vpop.f32.mrf.mxu0
      %v2316 = vpop.f32.mrf.mxu0
      %v2317 = vadd.f32 0.0, %v2316
      %v2318 = vpop.f32.mrf.mxu0
      %2319 = vmatprep.mubr.bf16.mxu0 0
      %2320 = vmatmul.mubr.bf16.gmra.mxu0 %v2227
      %v2321 = vpop.f32.mrf.mxu0
      %v2322 = vadd.f32 0.0, %v2321
      %v2323 = vpop.f32.mrf.mxu0
      %v2324 = vpop.f32.mrf.mxu0
      %v2325 = vadd.f32 0.0, %v2324
      %v2326 = vpop.f32.mrf.mxu0
      %2327 = vmatprep.mubr.bf16.mxu0 0
      %2328 = vmatmul.mubr.bf16.gmra.mxu0 %v2229
      %v2329 = vpop.f32.mrf.mxu0
      %v2330 = vadd.f32 0.0, %v2329
      %v2331 = vpop.f32.mrf.mxu0
      %v2332 = vpop.f32.mrf.mxu0
      %v2333 = vadd.f32 0.0, %v2332
      %v2334 = vpop.f32.mrf.mxu0
      %2335 = vmatprep.mubr.bf16.mxu0 0
      %2336 = vmatmul.mubr.bf16.gmra.mxu0 %v2231
      %v2337 = vpop.f32.mrf.mxu0
      %v2338 = vadd.f32 0.0, %v2337
      %v2339 = vpop.f32.mrf.mxu0
      %v2340 = vpop.f32.mrf.mxu0
      %v2341 = vadd.f32 0.0, %v2340
      %v2342 = vpop.f32.mrf.mxu0
      %2343 = vmatprep.mubr.bf16.mxu0 0
      %2344 = vmatmul.mubr.bf16.gmra.mxu0 %v2233
      %v2345 = vpop.f32.mrf.mxu0
      %v2346 = vadd.f32 0.0, %v2345
      %v2347 = vpop.f32.mrf.mxu0
      %v2348 = vpop.f32.mrf.mxu0
      %v2349 = vadd.f32 0.0, %v2348
      %v2350 = vpop.f32.mrf.mxu0
      %2351 = vmatprep.mubr.bf16.mxu0 0
      %2352 = vmatmul.mubr.bf16.gmra.mxu0 %v2235
      %v2353 = vpop.f32.mrf.mxu0
      %v2354 = vadd.f32 0.0, %v2353
      %v2355 = vpop.f32.mrf.mxu0
      %v2356 = vpop.f32.mrf.mxu0
      %v2357 = vadd.f32 0.0, %v2356
      %v2358 = vpop.f32.mrf.mxu0
      %2359 = vmatprep.mubr.bf16.mxu0 0
      %2360 = vmatmul.mubr.bf16.gmra.mxu0 %v2237
      %v2361 = vpop.f32.mrf.mxu0
      %v2362 = vadd.f32 0.0, %v2361
      %v2363 = vpop.f32.mrf.mxu0
      %v2364 = vpop.f32.mrf.mxu0
      %v2365 = vadd.f32 0.0, %v2364
      %v2366 = vpop.f32.mrf.mxu0
      %2367 = vmatprep.mubr.bf16.mxu0 0
      %2368 = vmatmul.mubr.bf16.gmra.mxu0 %v2239
      %v2369 = vpop.f32.mrf.mxu0
      %v2370 = vadd.f32 0.0, %v2369
      %v2371 = vpop.f32.mrf.mxu0
      %v2372 = vpop.f32.mrf.mxu0
      %v2373 = vadd.f32 0.0, %v2372
      %v2374 = vpop.f32.mrf.mxu0
      %2375 = vmatprep.mubr.bf16.mxu0 0
      %2376 = vmatmul.mubr.bf16.gmra.mxu0 %v2241
      %v2377 = vpop.f32.mrf.mxu0
      %v2378 = vadd.f32 0.0, %v2377
      %v2379 = vpop.f32.mrf.mxu0
      %v2380 = vpop.f32.mrf.mxu0
      %v2381 = vadd.f32 0.0, %v2380
      %v2382 = vpop.f32.mrf.mxu0
      %2383 = vmatprep.mubr.bf16.mxu0 0
      %2384 = vmatmul.mubr.bf16.gmra.mxu0 %v2243
      %v2385 = vpop.f32.mrf.mxu0
      %v2386 = vadd.f32 0.0, %v2385
      %v2387 = vpop.f32.mrf.mxu0
      %v2388 = vpop.f32.mrf.mxu0
      %v2389 = vadd.f32 0.0, %v2388
      %v2390 = vpop.f32.mrf.mxu0
      %2391 = vmatprep.mubr.bf16.mxu0 0
      %2392 = vmatmul.mubr.bf16.gmra.mxu0 %v2245
      %v2393 = vpop.f32.mrf.mxu0
      %v2394 = vadd.f32 0.0, %v2393
      %v2395 = vpop.f32.mrf.mxu0
      %v2396 = vpop.f32.mrf.mxu0
      %v2397 = vadd.f32 0.0, %v2396
      %v2398 = vpop.f32.mrf.mxu0
      %2399 = vmatprep.mubr.bf16.mxu0 0
      %2400 = vmatmul.mubr.bf16.gmra.mxu0 %v2247
      %v2401 = vpop.f32.mrf.mxu0
      %v2402 = vadd.f32 0.0, %v2401
      %v2403 = vpop.f32.mrf.mxu0
      %v2404 = vpop.f32.mrf.mxu0
      %v2405 = vadd.f32 0.0, %v2404
      %v2406 = vpop.f32.mrf.mxu0
      %2407 = vmatprep.mubr.bf16.mxu0 0
      %2408 = vmatmul.mubr.bf16.gmra.mxu0 %v2249
      %v2409 = vpop.f32.mrf.mxu0
      %v2410 = vadd.f32 0.0, %v2409
      %v2411 = vpop.f32.mrf.mxu0
      %v2412 = vpop.f32.mrf.mxu0
      %v2413 = vadd.f32 0.0, %v2412
      %v2414 = vpop.f32.mrf.mxu0
      %2415 = vdwg.mxu0
      %v2416 = vld [vmem:[%s2] sm:$0x1]
      %v2418 = vlaneseq
      %v2419 = vshrl.u32 %v2418, 7
      %v2420 = vsub.s32 0, %v2419
      %v2421 = vrot.slane %v2416, %v2420
      %v2423 = vmul.f32 %v2290, %v2421
      %v2424 = vmul.f32 %v2293, %v2421
      %v2425 = vmul.f32 %v2298, %v2421
      %v2426 = vmul.f32 %v2301, %v2421
      %v2427 = vmul.f32 %v2306, %v2421
      %v2428 = vmul.f32 %v2309, %v2421
      %v2429 = vmul.f32 %v2314, %v2421
      %v2430 = vmul.f32 %v2317, %v2421
      %v2431 = vmul.f32 %v2322, %v2421
      %v2432 = vmul.f32 %v2325, %v2421
      %v2433 = vmul.f32 %v2330, %v2421
      %v2434 = vmul.f32 %v2333, %v2421
      %v2435 = vmul.f32 %v2338, %v2421
      %v2436 = vmul.f32 %v2341, %v2421
      %v2437 = vmul.f32 %v2346, %v2421
      %v2438 = vmul.f32 %v2349, %v2421
      %v2439 = vmul.f32 %v2354, %v2421
      %v2440 = vmul.f32 %v2357, %v2421
      %v2441 = vmul.f32 %v2362, %v2421
      %v2442 = vmul.f32 %v2365, %v2421
      %v2443 = vmul.f32 %v2370, %v2421
      %v2444 = vmul.f32 %v2373, %v2421
      %v2445 = vmul.f32 %v2378, %v2421
      %v2446 = vmul.f32 %v2381, %v2421
      %v2447 = vmul.f32 %v2386, %v2421
      %v2448 = vmul.f32 %v2389, %v2421
      %v2449 = vmul.f32 %v2394, %v2421
      %v2450 = vmul.f32 %v2397, %v2421
      %v2451 = vmul.f32 %v2402, %v2421
      %v2452 = vmul.f32 %v2405, %v2421
      %v2453 = vmul.f32 %v2410, %v2421
      %v2454 = vmul.f32 %v2413, %v2421
      %v2455 = vld [vmem:[%s3] sm:$0x1]
      %v2457 = vlaneseq
      %v2458 = vshrl.u32 %v2457, 7
      %v2459 = vsub.s32 0, %v2458
      %v2460 = vrot.slane %v2455, %v2459
      %v2462 = vadd.f32 %v2423, %v2460
      %v2463 = vadd.f32 %v2424, %v2460
      %v2464 = vadd.f32 %v2425, %v2460
      %v2465 = vadd.f32 %v2426, %v2460
      %v2466 = vadd.f32 %v2427, %v2460
      %v2467 = vadd.f32 %v2428, %v2460
      %v2468 = vadd.f32 %v2429, %v2460
      %v2469 = vadd.f32 %v2430, %v2460
      %v2470 = vadd.f32 %v2431, %v2460
      %v2471 = vadd.f32 %v2432, %v2460
      %v2472 = vadd.f32 %v2433, %v2460
      %v2473 = vadd.f32 %v2434, %v2460
      %v2474 = vadd.f32 %v2435, %v2460
      %v2475 = vadd.f32 %v2436, %v2460
      %v2476 = vadd.f32 %v2437, %v2460
      %v2477 = vadd.f32 %v2438, %v2460
      %v2478 = vadd.f32 %v2439, %v2460
      %v2479 = vadd.f32 %v2440, %v2460
      %v2480 = vadd.f32 %v2441, %v2460
      %v2481 = vadd.f32 %v2442, %v2460
      %v2482 = vadd.f32 %v2443, %v2460
      %v2483 = vadd.f32 %v2444, %v2460
      %v2484 = vadd.f32 %v2445, %v2460
      %v2485 = vadd.f32 %v2446, %v2460
      %v2486 = vadd.f32 %v2447, %v2460
      %v2487 = vadd.f32 %v2448, %v2460
      %v2488 = vadd.f32 %v2449, %v2460
      %v2489 = vadd.f32 %v2450, %v2460
      %v2490 = vadd.f32 %v2451, %v2460
      %v2491 = vadd.f32 %v2452, %v2460
      %v2492 = vadd.f32 %v2453, %v2460
      %v2493 = vadd.f32 %v2454, %v2460
      %v2494 = vmax.f32 %v2462, 0.0
      %v2495 = vmax.f32 %v2463, 0.0
      %v2496 = vmax.f32 %v2464, 0.0
      %v2497 = vmax.f32 %v2465, 0.0
      %v2498 = vmax.f32 %v2466, 0.0
      %v2499 = vmax.f32 %v2467, 0.0
      %v2500 = vmax.f32 %v2468, 0.0
      %v2501 = vmax.f32 %v2469, 0.0
      %v2502 = vmax.f32 %v2470, 0.0
      %v2503 = vmax.f32 %v2471, 0.0
      %v2504 = vmax.f32 %v2472, 0.0
      %v2505 = vmax.f32 %v2473, 0.0
      %v2506 = vmax.f32 %v2474, 0.0
      %v2507 = vmax.f32 %v2475, 0.0
      %v2508 = vmax.f32 %v2476, 0.0
      %v2509 = vmax.f32 %v2477, 0.0
      %v2510 = vmax.f32 %v2478, 0.0
      %v2511 = vmax.f32 %v2479, 0.0
      %v2512 = vmax.f32 %v2480, 0.0
      %v2513 = vmax.f32 %v2481, 0.0
      %v2514 = vmax.f32 %v2482, 0.0
      %v2515 = vmax.f32 %v2483, 0.0
      %v2516 = vmax.f32 %v2484, 0.0
      %v2517 = vmax.f32 %v2485, 0.0
      %v2518 = vmax.f32 %v2486, 0.0
      %v2519 = vmax.f32 %v2487, 0.0
      %v2520 = vmax.f32 %v2488, 0.0
      %v2521 = vmax.f32 %v2489, 0.0
      %v2522 = vmax.f32 %v2490, 0.0
      %v2523 = vmax.f32 %v2491, 0.0
      %v2524 = vmax.f32 %v2492, 0.0
      %v2525 = vmax.f32 %v2493, 0.0
      %2526 = vst.msk [vmem:[%s221] sm:$0xff] %vm1967, %v2494
      %2527 = vst.msk [vmem:[%s221 + $0x8] sm:$0xff] %vm1967, %v2495
      %2528 = vst.msk [vmem:[%s221 + $0x10] sm:$0xff] %vm1967, %v2496
      %2529 = vst.msk [vmem:[%s221 + $0x18] sm:$0xff] %vm1967, %v2497
      %2530 = vst.msk [vmem:[%s221 + $0x20] sm:$0xff] %vm1967, %v2498
      %2531 = vst.msk [vmem:[%s221 + $0x28] sm:$0xff] %vm1967, %v2499
      %2532 = vst.msk [vmem:[%s221 + $0x30] sm:$0xff] %vm1967, %v2500
      %2533 = vst.msk [vmem:[%s221 + $0x38] sm:$0xff] %vm1967, %v2501
      %2534 = vst.msk [vmem:[%s221 + $0x40] sm:$0xff] %vm1967, %v2502
      %2535 = vst.msk [vmem:[%s221 + $0x48] sm:$0xff] %vm1967, %v2503
      %2536 = vst.msk [vmem:[%s221 + $0x50] sm:$0xff] %vm1967, %v2504
      %2537 = vst.msk [vmem:[%s221 + $0x58] sm:$0xff] %vm1967, %v2505
      %2538 = vst.msk [vmem:[%s221 + $0x60] sm:$0xff] %vm1967, %v2506
      %2539 = vst.msk [vmem:[%s221 + $0x68] sm:$0xff] %vm1967, %v2507
      %2540 = vst.msk [vmem:[%s221 + $0x70] sm:$0xff] %vm1967, %v2508
      %2541 = vst.msk [vmem:[%s221 + $0x78] sm:$0xff] %vm1967, %v2509
      %2542 = vst.msk [vmem:[%s221 + $0x80] sm:$0xff] %vm1967, %v2510
      %2543 = vst.msk [vmem:[%s221 + $0x88] sm:$0xff] %vm1967, %v2511
      %2544 = vst.msk [vmem:[%s221 + $0x90] sm:$0xff] %vm1967, %v2512
      %2545 = vst.msk [vmem:[%s221 + $0x98] sm:$0xff] %vm1967, %v2513
      %2546 = vst.msk [vmem:[%s221 + $0xa0] sm:$0xff] %vm1967, %v2514
      %2547 = vst.msk [vmem:[%s221 + $0xa8] sm:$0xff] %vm1967, %v2515
      %2548 = vst.msk [vmem:[%s221 + $0xb0] sm:$0xff] %vm1967, %v2516
      %2549 = vst.msk [vmem:[%s221 + $0xb8] sm:$0xff] %vm1967, %v2517
      %2550 = vst.msk [vmem:[%s221 + $0xc0] sm:$0xff] %vm1967, %v2518
      %2551 = vst.msk [vmem:[%s221 + $0xc8] sm:$0xff] %vm1967, %v2519
      %2552 = vst.msk [vmem:[%s221 + $0xd0] sm:$0xff] %vm1967, %v2520
      %2553 = vst.msk [vmem:[%s221 + $0xd8] sm:$0xff] %vm1967, %v2521
      %2554 = vst.msk [vmem:[%s221 + $0xe0] sm:$0xff] %vm1967, %v2522
      %2555 = vst.msk [vmem:[%s221 + $0xe8] sm:$0xff] %vm1967, %v2523
      %2556 = vst.msk [vmem:[%s221 + $0xf0] sm:$0xff] %vm1967, %v2524
      %2557 = vst.msk [vmem:[%s221 + $0xf8] sm:$0xff] %vm1967, %v2525
      %s2558 = smul.u32 16, %s20
      %p2559 = scmp.lt.s32.totalorder %s19, 1
      %s2560 = scalar_select %p2559, %s19, 1
      %p2561 = scmp.lt.s32.totalorder %s2558, 15
      %s2562 = scalar_select %p2561, %s2558, 15
      %s2563 = smul.addr %s2562, 2
      %s2564 = smul.addr %s2560, 32
      %s2565 = sadd.s32 %s2563, %s2564
      %s2566 = smul.addr %s2565, 8
      %s2567 = scalar_lea.vmem %s4, %s2566
      // Predicated region
      $region37: #{conv_bn_act.3} parent=35 // pred_check
        %p2568 = pneg %p136
      $region38: #{conv_bn_act.3} parent=35 // pred_check_branch
        %2570 = sbr.rel (%p2568) target = $region40
      $region39: #{conv_bn_act.3} parent=35 // pred_region
        %s2571 = smul.u32 16, %s20
      $region40: #{conv_bn_act.3} parent=35 // pred_fallthru
        _
    $region36: #{conv_bn_act.3} parent=5 // pred_fallthru
      _
    %p2572 = scmp.le.s32.totalorder 2, %s10
    // Predicated region
    $region41: #{conv_bn_act.3} parent=5 // pred_check
      %p2573 = pneg %p2572
    $region42: #{conv_bn_act.3} parent=5 // pred_check_branch
      %2575 = sbr.rel (%p2573) target = $region44
    $region43: #{conv_bn_act.3} parent=5 // pred_region
      %s2576 = ssub.s32 %s10, 2
      // Predicated region
      $region45: #{conv_bn_act.3} parent=43 // pred_check
        %p2577 = pneg %p142
      $region46: #{conv_bn_act.3} parent=43 // pred_check_branch
        %2579 = sbr.rel (%p2577) target = $region48
      $region47: #{conv_bn_act.3} parent=43 // pred_region
        %s2580 = smul.u32 16, %s22
        %p2581 = scmp.lt.s32.totalorder %s21, 1
        %s2582 = scalar_select %p2581, %s21, 1
        %p2583 = scmp.lt.s32.totalorder %s2580, 15
        %s2584 = scalar_select %p2583, %s2580, 15
        %s2585 = smul.addr %s2584, 2
        %s2586 = smul.addr %s2582, 32
        %s2587 = sadd.s32 %s2585, %s2586
        %s2588 = smul.addr %s2587, 8
        %s2589 = scalar_lea.vmem %s4, %s2588
      $region48: #{conv_bn_act.3} parent=43 // pred_fallthru
        _
    $region44: #{conv_bn_act.3} parent=5 // pred_fallthru
      _
  $region6: #{conv_bn_act.3} parent=0 // loop_footer
    %s14 = sadd.s32 1, %s10
  $region7: #{conv_bn_act.3} parent=0 // loop_footer_branch
    %9 = sbr.rel target = $region3
  $region8: #{conv_bn_act.3} parent=0 // loop_exit
    _

</llo_original>
